<compile_context>
chip_gen: v7x
topology: tpu7x:2x2x1
jax: 0.10.0
libtpu: 0.0.40
codegen_flags: <defaults>
</compile_context>

<pallas_src>
import functools

import jax
import jax.numpy as jnp
from jax.experimental import pallas as pl
from jax.experimental.pallas import tpu as pltpu

DTYPE = jnp.bfloat16


def _round_up(x, m):
    return ((x + m - 1) // m) * m


def _default_vmem_limit():
    # v7x: 64 MiB physical -> ~48 MiB; v5e/v6e: 128 MiB -> ~96 MiB.
    try:
        cap = int(pltpu.get_tpu_info().vmem_capacity_bytes)
    except Exception:
        cap = 64 * 1024 * 1024
    return max(32 * 1024 * 1024, min(cap * 3 // 4, 100 * 1024 * 1024))


VMEM_LIMIT = _default_vmem_limit()


# ----------------------------------------------------------------------------
# Fused MLP kernel: all layers of one MLP (+ optional fused output fc) in one
# pallas_call.  The concatenated MLP input never exists in HBM.
# ----------------------------------------------------------------------------
def _fused_mlp_kernel(*refs, n_dense, n_gather, n_layers, relus, has_out):
    n_outs = 2 if has_out else 1
    ins = refs[:-n_outs]
    outs = refs[-n_outs:]

    c = 0
    xs = ins[c:c + n_dense]; c += n_dense            # dense input pieces
    idxs = ins[c:c + n_gather]; c += n_gather        # (tm, 1) int32 gather ids
    projs = ins[c:c + n_gather]; c += n_gather       # (T, H0) pre-projected tables
    w0s = ins[c:c + n_dense]; c += n_dense           # first-layer weight slices
    b0_ref = ins[c]; c += 1

    # --- layer 0: split-K matmul over the concatenated-input pieces ----------
    h = None
    for xr, wr in zip(xs, w0s):
        part = jnp.dot(xr[...], wr[...], preferred_element_type=jnp.float32)
        h = part if h is None else h + part
    # gathered pieces: table[idx] @ W0_slice == (table @ W0_slice)[idx], done as
    # a tiny one-hot matmul against the pre-projected (T, H0) table.
    for ir, pr in zip(idxs, projs):
        idx = ir[...]                                             # (tm, 1) int32
        t = pr.shape[0]
        cols = jax.lax.broadcasted_iota(jnp.int32, (idx.shape[0], t), 1)
        onehot = (cols == idx).astype(pr.dtype)                   # (tm, T)
        part = jnp.dot(onehot, pr[...], preferred_element_type=jnp.float32)
        h = part if h is None else h + part
    h = h + b0_ref[...]
    if relus[0]:
        h = jnp.maximum(h, 0.0)

    # --- remaining layers (activations stay in vregs/VMEM) -------------------
    for layer in range(1, n_layers):
        w_ref, b_ref = ins[c], ins[c + 1]
        c += 2
        h = jnp.dot(h.astype(w_ref.dtype), w_ref[...],
                    preferred_element_type=jnp.float32) + b_ref[...]
        if relus[layer]:
            h = jnp.maximum(h, 0.0)

    outs[0][...] = h.astype(outs[0].dtype)

    # --- fused output fc (output_edge_mlp) on the final activation ----------
    if has_out:
        ow_ref, ob_ref = ins[c], ins[c + 1]
        h2 = jnp.dot(h.astype(ow_ref.dtype), ow_ref[...],
                     preferred_element_type=jnp.float32) + ob_ref[...]
        outs[1][...] = h2.astype(outs[1].dtype)


def _merge_small_parts(xs, ws, thresh=128):
    """Merge all dense parts narrower than `thresh` into one operand so layer 0
    is a single MXU matmul instead of several tiny-K matmuls + VALU adds."""
    small_x, small_w, groups = [], [], []
    for x, w in zip(xs, ws):
        if x.shape[1] < thresh:
            small_x.append(x)
            small_w.append(w)
        else:
            groups.append((x, w))
    if small_x:
        if len(small_x) == 1:
            groups.insert(0, (small_x[0], small_w[0]))
        else:
            groups.insert(0, (jnp.concatenate(small_x, axis=1),
                              jnp.concatenate(small_w, axis=0)))
    return groups


def fused_mlp(parts, layers, *, out_fc=None, tm_max=1024):
    """y = MLP(concat(parts, axis=1)) in ONE Pallas kernel.

    Each element of `parts` is either a dense (M, K_p) array or a tuple
    ("gather", table (T, K_p), idx (M,)) meaning table[idx].  `layers` is a
    list of (w[K,N] , b[1,N]); ReLU after every layer but the last.  If
    `out_fc=(w, b)` is given, y2 = y @ w + b is computed in the same kernel
    and returned as a second output.
    """
    n_layers = len(layers)
    relus = tuple([True] * (n_layers - 1) + [False])
    layers = [(w.astype(DTYPE), b.astype(jnp.float32)) for (w, b) in layers]

    # normalize parts ---------------------------------------------------------
    norm = []
    for pt in parts:
        if isinstance(pt, tuple) and pt[0] == "gather":
            _, tab, idx = pt
            norm.append(("g", tab.astype(DTYPE), idx.astype(jnp.int32)))
        else:
            norm.append(("d", pt.astype(DTYPE)))
    widths = [pt[1].shape[1] for pt in norm]
    M = norm[0][1].shape[0] if norm[0][0] == "d" else norm[0][2].shape[0]

    # pad final output width to a lane-dense multiple of 128 ------------------
    w_last, b_last = layers[-1]
    n_out = w_last.shape[1]
    n_pad = _round_up(n_out, 128)
    if n_pad != n_out:
        layers[-1] = (jnp.pad(w_last, ((0, 0), (0, n_pad - n_out))),
                      jnp.pad(b_last, ((0, 0), (0, n_pad - n_out))))

    oe_out = oe_pad = 0
    ow = ob = None
    if out_fc is not None:
        ow, ob = out_fc
        ow, ob = ow.astype(DTYPE), ob.astype(jnp.float32)
        oe_out = ow.shape[1]
        oe_pad = _round_up(oe_out, 128)
        # final activation columns [n_out:n_pad] are exactly zero -> zero-row pad.
        ow = jnp.pad(ow, ((0, n_pad - n_out), (0, oe_pad - oe_out)))
        ob = jnp.pad(ob, ((0, 0), (0, oe_pad - oe_out)))

    # split first-layer weight rows by part, pre-project gather tables --------
    w0, b0 = layers[0]
    assert w0.shape[0] == sum(widths)
    dense_x, dense_w, gathers = [], [], []
    off = 0
    for pt, wdt in zip(norm, widths):
        sl = w0[off:off + wdt]
        off += wdt
        if pt[0] == "d":
            dense_x.append(pt[1])
            dense_w.append(sl)
        else:
            proj = jnp.dot(pt[1].astype(jnp.float32), sl.astype(jnp.float32))
            gathers.append((pt[2], proj.astype(DTYPE)))
    groups = _merge_small_parts(dense_x, dense_w)

    # row tiling / padding -----------------------------------------------------
    tm = min(tm_max, _round_up(M, 16))
    mp = _round_up(M, tm)
    pad = mp - M
    if pad:
        groups = [(jnp.pad(x, ((0, pad), (0, 0))), w) for (x, w) in groups]
        gathers = [(jnp.pad(i, (0, pad)), pr) for (i, pr) in gathers]
    idx_cols = [i.reshape(mp, 1) for (i, _) in gathers]

    # args / specs -------------------------------------------------------------
    # TODO(synk): single-buffer the resident weight BlockSpecs (constant
    # index_map) once pipeline_mode=pl.Buffered(1) is safe on all jax versions.
    args, in_specs = [], []
    for (x, _) in groups:
        args.append(x)
        in_specs.append(pl.BlockSpec((tm, x.shape[1]), lambda i: (i, 0)))
    for ic in idx_cols:
        args.append(ic)
        in_specs.append(pl.BlockSpec((tm, 1), lambda i: (i, 0)))
    for (_, pr) in gathers:
        args.append(pr)
        in_specs.append(pl.BlockSpec(pr.shape, lambda i: (0, 0)))
    for (_, w) in groups:
        args.append(w)
        in_specs.append(pl.BlockSpec(w.shape, lambda i: (0, 0)))
    args.append(b0)
    in_specs.append(pl.BlockSpec(b0.shape, lambda i: (0, 0)))
    for (w, b) in layers[1:]:
        args += [w, b]
        in_specs += [pl.BlockSpec(w.shape, lambda i: (0, 0)),
                     pl.BlockSpec(b.shape, lambda i: (0, 0))]
    has_out = out_fc is not None
    if has_out:
        args += [ow, ob]
        in_specs += [pl.BlockSpec(ow.shape, lambda i: (0, 0)),
                     pl.BlockSpec(ob.shape, lambda i: (0, 0))]

    if has_out:
        out_shape = (jax.ShapeDtypeStruct((mp, n_pad), DTYPE),
                     jax.ShapeDtypeStruct((mp, oe_pad), DTYPE))
        out_specs = (pl.BlockSpec((tm, n_pad), lambda i: (i, 0)),
                     pl.BlockSpec((tm, oe_pad), lambda i: (i, 0)))
    else:
        out_shape = jax.ShapeDtypeStruct((mp, n_pad), DTYPE)
        out_specs = pl.BlockSpec((tm, n_pad), lambda i: (i, 0))

    flops = 2 * mp * sum(int(w.shape[0]) * int(w.shape[1]) for w, _ in layers)
    if has_out:
        flops += 2 * mp * int(ow.shape[0]) * int(ow.shape[1])
    bytes_accessed = int(sum(int(a.size) * a.dtype.itemsize for a in args)
                         + mp * (n_pad + oe_pad) * 2)

    result = pl.pallas_call(
        functools.partial(_fused_mlp_kernel, n_dense=len(groups),
                          n_gather=len(gathers), n_layers=n_layers,
                          relus=relus, has_out=has_out),
        out_shape=out_shape,
        grid=(mp // tm,),
        in_specs=in_specs,
        out_specs=out_specs,
        compiler_params=pltpu.CompilerParams(
            dimension_semantics=("parallel",),
            vmem_limit_bytes=VMEM_LIMIT),
        cost_estimate=pl.CostEstimate(flops=flops, transcendentals=0,
                                      bytes_accessed=bytes_accessed),
    )(*args)

    # Slices are no-ops when no padding was added (default mid_channels=256).
    if has_out:
        o1, o2 = result
        return o1[:M, :n_out], o2[:M, :oe_out]
    return result[:M, :n_out]


# ----------------------------------------------------------------------------
# scatter_add (segment sum): row-block tiled one-hot matmul, f32 accumulator.
# ----------------------------------------------------------------------------
def _scatter_add_kernel(idx_ref, v_ref, o_ref, acc_ref, *, tr):
    r = pl.program_id(0)
    e = pl.program_id(1)

    @pl.when(e == 0)
    def _():
        acc_ref[...] = jnp.zeros_like(acc_ref)

    idx = idx_ref[...]                                        # (1, te) int32
    te = idx.shape[1]
    rows = jax.lax.broadcasted_iota(jnp.int32, (tr, te), 0) + r * tr
    onehot = (rows == idx).astype(v_ref.dtype)                # block-local one-hot
    acc_ref[...] += jnp.dot(onehot, v_ref[...],
                            preferred_element_type=jnp.float32)

    @pl.when(e == pl.num_programs(1) - 1)
    def _():
        o_ref[...] = acc_ref[...].astype(o_ref.dtype)


def _scatter_add_small_kernel(idx_ref, v_ref, o_ref, acc_ref, *, dim_size):
    # Tiny dim_size (per-graph global reductions): VPU masked segment sum, no MXU.
    e = pl.program_id(0)

    @pl.when(e == 0)
    def _():
        acc_ref[...] = jnp.zeros_like(acc_ref)

    idx = idx_ref[...]                                        # (te, 1) int32
    v = v_ref[...].astype(jnp.float32)                        # (te, C)
    rows = [jnp.sum(jnp.where(idx == i, v, 0.0), axis=0, keepdims=True)
            for i in range(dim_size)]
    acc_ref[...] += jnp.concatenate(rows, axis=0)

    @pl.when(e == pl.num_programs(0) - 1)
    def _():
        o_ref[...] = acc_ref[...].astype(o_ref.dtype)


def scatter_add(values, index, dim_size, *, te_max=1024, tr_max=1024,
                small_max=8):
    """out[i] = sum_{j: index[j]==i} values[j].  The one-hot is generated
    in-kernel (never written to HBM); output rows are tiled so the f32
    accumulator stays bounded for any dim_size."""
    E, C = values.shape
    values = values.astype(DTYPE)
    index = index.astype(jnp.int32)
    te = min(te_max, _round_up(E, 128))
    ep = _round_up(E, te)
    if ep != E:
        values = jnp.pad(values, ((0, ep - E), (0, 0)))
        index = jnp.pad(index, (0, ep - E), constant_values=-1)  # -1 never matches

    if dim_size <= small_max:
        idx_col = index.reshape(ep, 1)
        return pl.pallas_call(
            functools.partial(_scatter_add_small_kernel, dim_size=dim_size),
            out_shape=jax.ShapeDtypeStruct((dim_size, C), DTYPE),
            grid=(ep // te,),
            in_specs=[pl.BlockSpec((te, 1), lambda e: (e, 0)),
                      pl.BlockSpec((te, C), lambda e: (e, 0))],
            out_specs=pl.BlockSpec((dim_size, C), lambda e: (0, 0)),
            scratch_shapes=[pltpu.VMEM((dim_size, C), jnp.float32)],
            compiler_params=pltpu.CompilerParams(
                dimension_semantics=("arbitrary",),
                vmem_limit_bytes=VMEM_LIMIT),
        )(idx_col, values)

    # TODO(synk): when indices are grouped (e.g. edges sorted by destination),
    # scalar-prefetch per-tile row ranges and skip non-overlapping
    # (row-block, edge-block) pairs with pl.when.
    tr = min(tr_max, _round_up(dim_size, 8))
    dp = _round_up(dim_size, tr)
    idx_row = index.reshape(1, ep)

    flops = int(2 * dp * ep * C)
    bytes_accessed = int(idx_row.size * 4 + values.size * 2 + dp * C * 2)

    out = pl.pallas_call(
        functools.partial(_scatter_add_kernel, tr=tr),
        out_shape=jax.ShapeDtypeStruct((dp, C), DTYPE),
        grid=(dp // tr, ep // te),
        in_specs=[pl.BlockSpec((1, te), lambda r, e: (0, e)),
                  pl.BlockSpec((te, C), lambda r, e: (e, 0))],
        out_specs=pl.BlockSpec((tr, C), lambda r, e: (r, 0)),
        scratch_shapes=[pltpu.VMEM((tr, C), jnp.float32)],
        compiler_params=pltpu.CompilerParams(
            dimension_semantics=("parallel", "arbitrary"),
            vmem_limit_bytes=VMEM_LIMIT),
        cost_estimate=pl.CostEstimate(flops=flops, transcendentals=0,
                                      bytes_accessed=bytes_accessed),
    )(idx_row, values)
    return out[:dim_size]


# ----------------------------------------------------------------------------
# Parameter construction (mirrors the PyTorch __init__ shapes)
# ----------------------------------------------------------------------------
def _init_fc(key, inp, out, scale=0.05):
    k1, k2 = jax.random.split(key)
    w = (scale * jax.random.normal(k1, (inp, out), jnp.float32)).astype(DTYPE)
    b = scale * jax.random.normal(k2, (1, out), jnp.float32)
    return (w, b)


def _init_mlp(key, inp, out, feat, num_layer):
    assert num_layer < 10
    if num_layer == 1:
        dims = [(inp, out)]
    else:
        dims = [(inp, feat)] + [(feat, feat)] * (num_layer - 2) + [(feat, out)]
    keys = jax.random.split(key, len(dims))
    return [_init_fc(k, i, o) for k, (i, o) in zip(keys, dims)]


def _init_gnblock(key, in_ch, out_ch, layers, mid):
    nc, ec, gc = in_ch
    onc, oec, ogc = out_ch
    gc = 0 if gc is None else gc
    k1, k2, k3, k4 = jax.random.split(key, 4)
    return {
        "edge_mlp": _init_mlp(k1, gc + nc * 2 + ec, mid, mid, layers),
        "node_mlp": _init_mlp(k2, gc + nc + mid, onc, mid, layers),
        "out_edge": _init_fc(k3, mid, oec),            # no ReLU (fc default)
        "global_mlp": (_init_mlp(k4, gc + onc + oec, ogc, mid, layers)
                       if ogc is not None else None),
    }


def init_gnresidule(key, in_channels, oup_channels, layers=3, mid_channels=256,
                    use_global=True):
    gc = mid_channels if use_global else None
    nc, ec = in_channels
    specs = [((nc, ec, None), (mid_channels, mid_channels, gc))]
    for _ in range(6):
        specs.append(((nc + mid_channels, ec + mid_channels, gc),
                      (mid_channels, mid_channels, gc)))
    specs.append(((nc + mid_channels, ec + mid_channels, gc),
                  (oup_channels[0], oup_channels[1], None)))
    keys = jax.random.split(key, len(specs))
    return [_init_gnblock(k, ic, oc, layers, mid_channels)
            for k, (ic, oc) in zip(keys, specs)]


# ----------------------------------------------------------------------------
# Forward pass (mirrors GNBlock.forward / GNResidule.forward)
# ----------------------------------------------------------------------------
def gnblock_apply(p, node_feats, edge_feats, rol, col, batch, g, batch_size):
    """node_feats / edge_feats are LISTS of feature blocks (the residual
    concatenation is expressed as separate MLP `parts`, never materialized)."""
    n = node_feats[0].shape[0]

    # TODO(synk): the node-row gathers f[rol]/f[col] are still XLA gathers;
    # fuse them via an in-kernel gather of a VMEM-resident node table.
    edge_parts = ([f[rol] for f in node_feats]
                  + [f[col] for f in node_feats]
                  + list(edge_feats))
    if g is not None:
        edge_parts.append(("gather", g, batch[rol]))   # g[batch[rol]] done in-kernel
    # edge_feature_mlp + output_edge_mlp fused into one kernel (two outputs)
    edge_h, edge_out = fused_mlp(edge_parts, p["edge_mlp"], out_fc=p["out_edge"])

    node_parts = list(node_feats) + [scatter_add(edge_h, rol, n)]
    if g is not None:
        node_parts.append(("gather", g, batch))        # g[batch] done in-kernel
    node_out = fused_mlp(node_parts, p["node_mlp"])

    g_out = None
    if p["global_mlp"] is not None:
        glob_parts = [scatter_add(node_out, batch, batch_size),
                      scatter_add(edge_h, batch[rol], batch_size)]
        if g is not None:
            glob_parts.append(g)
        g_out = fused_mlp(glob_parts, p["global_mlp"])

    return node_out, edge_out, g_out


def gnresidule_apply(params, node, edge, edge_index, batch, batch_size):
    rol, col = edge_index[0], edge_index[1]
    node0 = node.astype(DTYPE)
    edge0 = edge.astype(DTYPE)
    # block 0 sees the raw graph (g is None)
    n_h, e_h, g_h = gnblock_apply(params[0], [node0], [edge0], rol, col, batch,
                                  None, batch_size)
    # blocks 1..7: graph.cat(inp) == pass [orig, prev] as separate parts
    for p in params[1:]:
        n_h, e_h, g_h = gnblock_apply(p, [node0, n_h], [edge0, e_h], rol, col,
                                      batch, g_h, batch_size)
    return n_h, e_h, g_h


# ----------------------------------------------------------------------------
# Example run
# ----------------------------------------------------------------------------
if __name__ == "__main__":
    key = jax.random.PRNGKey(0)
    kp, kn, ke, kr, kc = jax.random.split(key, 5)

    NODE_C, EDGE_C = 4, 4
    OUT_NODE_C, OUT_EDGE_C = 8, 8
    MID = 32
    LAYERS = 3
    N_NODES, N_EDGES, BATCH = 16, 32, 2

    params = init_gnresidule(kp, (NODE_C, EDGE_C), (OUT_NODE_C, OUT_EDGE_C),
                             layers=LAYERS, mid_channels=MID, use_global=True)

    node = jax.random.normal(kn, (N_NODES, NODE_C), jnp.float32)
    edge = jax.random.normal(ke, (N_EDGES, EDGE_C), jnp.float32)
    batch = jnp.repeat(jnp.arange(BATCH, dtype=jnp.int32), N_NODES // BATCH)

    # edges stay within their own graph
    per_graph = N_NODES // BATCH
    rol = jax.random.randint(kr, (N_EDGES,), 0, per_graph, jnp.int32)
    col = jax.random.randint(kc, (N_EDGES,), 0, per_graph, jnp.int32)
    edge_graph = jnp.repeat(jnp.arange(BATCH, dtype=jnp.int32), N_EDGES // BATCH)
    rol = rol + edge_graph * per_graph
    col = col + edge_graph * per_graph
    edge_index = jnp.stack([rol, col], axis=0)

    fwd = jax.jit(gnresidule_apply, static_argnums=(5,))
    node_out, edge_out, g_out = fwd(params, node, edge, edge_index, batch, BATCH)
    jax.block_until_ready(node_out)
    jax.block_until_ready(edge_out)

    assert node_out.shape == (N_NODES, OUT_NODE_C)
    assert edge_out.shape == (N_EDGES, OUT_EDGE_C)
    assert g_out is None  # last block has output_global_channels=None
    print("KERNEL_OK")
</pallas_src>

<mosaic_0001>
module attributes {stable_mosaic.version = 11 : i64} {
  func.func @_scatter_add_kernel(%arg0: i32, %arg1: i32, %arg2: memref<1x128xi32, #tpu.memory_space<vmem>>, %arg3: memref<128x32xbf16, #tpu.memory_space<vmem>>, %arg4: memref<16x32xbf16, #tpu.memory_space<vmem>>, %arg5: memref<16x32xf32, #tpu.memory_space<vmem>>) attributes {dimension_semantics = [#tpu.dimension_semantics<parallel>, #tpu.dimension_semantics<arbitrary>], iteration_bounds = array<i64: 1, 1>, scalar_prefetch = 0 : i64, scratch_operands = 1 : i64, tpu.core_type = #tpu.core_type<tc>, window_params = [{transform_indices = @transform_0, window_bounds = array<i64: 1, 128>}, {transform_indices = @transform_1, window_bounds = array<i64: 128, 32>}, {transform_indices = @transform_2, window_bounds = array<i64: 16, 32>}]} {
    %c0_i32 = arith.constant 0 : i32
    %0 = arith.cmpi eq, %arg1, %c0_i32 : i32
    %1 = arith.extui %0 : i1 to i32
    %c0_i32_0 = arith.constant 0 : i32
    %2 = arith.cmpi ne, %1, %c0_i32_0 : i32
    scf.if %2 {
      %cst_10 = arith.constant 0.000000e+00 : f32
      %21 = vector.broadcast %cst_10 : f32 to vector<16x32xf32>
      %c0_11 = arith.constant 0 : index
      %c0_12 = arith.constant 0 : index
      %22 = vector.load %arg5[%c0_11, %c0_12] : memref<16x32xf32, #tpu.memory_space<vmem>>, vector<16x32xf32>
      tpu.vector_store %arg5[%c0_11, %c0_12], %21 {strides = array<i32>} : memref<16x32xf32, #tpu.memory_space<vmem>>, vector<16x32xf32>,
    } else {
    }
    %c0 = arith.constant 0 : index
    %c0_1 = arith.constant 0 : index
    %3 = vector.load %arg2[%c0, %c0_1] : memref<1x128xi32, #tpu.memory_space<vmem>>, vector<1x128xi32>
    %4 = tpu.iota {dimensions = array<i32: 0>} : vector<16x128xi32>
    %c16_i32 = arith.constant 16 : i32
    %5 = arith.muli %arg0, %c16_i32 : i32
    %6 = vector.broadcast %5 : i32 to vector<16x128xi32>
    %7 = arith.addi %4, %6 : vector<16x128xi32>
    %8 = vector.broadcast %3 : vector<1x128xi32> to vector<16x128xi32>
    %9 = arith.cmpi eq, %7, %8 : vector<16x128xi32>
    %10 = arith.extui %9 : vector<16x128xi1> to vector<16x128xi32>
    %11 = arith.sitofp %10 : vector<16x128xi32> to vector<16x128xf32>
    %12 = arith.truncf %11 : vector<16x128xf32> to vector<16x128xbf16>
    %c0_2 = arith.constant 0 : index
    %c0_3 = arith.constant 0 : index
    %13 = vector.load %arg5[%c0_2, %c0_3] : memref<16x32xf32, #tpu.memory_space<vmem>>, vector<16x32xf32>
    %c0_4 = arith.constant 0 : index
    %c0_5 = arith.constant 0 : index
    %14 = vector.load %arg3[%c0_4, %c0_5] : memref<128x32xbf16, #tpu.memory_space<vmem>>, vector<128x32xbf16>
    %cst = arith.constant dense<0.000000e+00> : vector<16x32xf32>
    %15 = tpu.matmul %12, %14, %cst {dimension_numbers = #tpu.dot_dimension_numbers<[1], [0], [0], [1], [0, 0, 1, 1], [], []>} : vector<16x128xbf16>, vector<128x32xbf16>, vector<16x32xf32> -> vector<16x32xf32>
    %16 = arith.addf %13, %15 : vector<16x32xf32>
    %c0_6 = arith.constant 0 : index
    %c0_7 = arith.constant 0 : index
    %17 = vector.load %arg5[%c0_6, %c0_7] : memref<16x32xf32, #tpu.memory_space<vmem>>, vector<16x32xf32>
    tpu.vector_store %arg5[%c0_6, %c0_7], %16 {strides = array<i32>} : memref<16x32xf32, #tpu.memory_space<vmem>>, vector<16x32xf32>,
    %c0_i32_8 = arith.constant 0 : i32
    %18 = arith.cmpi eq, %arg1, %c0_i32_8 : i32
    %19 = arith.extui %18 : i1 to i32
    %c0_i32_9 = arith.constant 0 : i32
    %20 = arith.cmpi ne, %19, %c0_i32_9 : i32
    scf.if %20 {
      %c0_10 = arith.constant 0 : index
      %c0_11 = arith.constant 0 : index
      %21 = vector.load %arg5[%c0_10, %c0_11] : memref<16x32xf32, #tpu.memory_space<vmem>>, vector<16x32xf32>
      %22 = arith.truncf %21 : vector<16x32xf32> to vector<16x32xbf16>
      %c0_12 = arith.constant 0 : index
      %c0_13 = arith.constant 0 : index
      %23 = vector.load %arg4[%c0_12, %c0_13] : memref<16x32xbf16, #tpu.memory_space<vmem>>, vector<16x32xbf16>
      tpu.vector_store %arg4[%c0_12, %c0_13], %22 {strides = array<i32>} : memref<16x32xbf16, #tpu.memory_space<vmem>>, vector<16x32xbf16>,
    } else {
    }
    return
  }
  func.func @transform_0(%arg0: i32, %arg1: i32) -> (i32, i32) {
    %c0_i32 = arith.constant 0 : i32
    %c0_i32_0 = arith.constant 0 : i32
    return %c0_i32, %arg1 : i32, i32
  }
  func.func @transform_1(%arg0: i32, %arg1: i32) -> (i32, i32) {
    %c0_i32 = arith.constant 0 : i32
    %c0_i32_0 = arith.constant 0 : i32
    return %arg1, %c0_i32 : i32, i32
  }
  func.func @transform_2(%arg0: i32, %arg1: i32) -> (i32, i32) {
    %c0_i32 = arith.constant 0 : i32
    %c0_i32_0 = arith.constant 0 : i32
    return %arg0, %c0_i32 : i32, i32
  }
}

module attributes {stable_mosaic.version = 11 : i64} {
  func.func @_fused_mlp_kernel(%arg0: i32, %arg1: memref<16x36xbf16, #tpu.memory_space<vmem>>, %arg2: memref<36x32xbf16, #tpu.memory_space<vmem>>, %arg3: memref<1x32xf32, #tpu.memory_space<vmem>>, %arg4: memref<32x32xbf16, #tpu.memory_space<vmem>>, %arg5: memref<1x32xf32, #tpu.memory_space<vmem>>, %arg6: memref<32x128xbf16, #tpu.memory_space<vmem>>, %arg7: memref<1x128xf32, #tpu.memory_space<vmem>>, %arg8: memref<16x128xbf16, #tpu.memory_space<vmem>>) attributes {dimension_semantics = [#tpu.dimension_semantics<parallel>], iteration_bounds = array<i64: 1>, scalar_prefetch = 0 : i64, scratch_operands = 0 : i64, tpu.core_type = #tpu.core_type<tc>, window_params = [{transform_indices = @transform_0, window_bounds = array<i64: 16, 36>}, {pipeline_mode = #tpu.pipeline_mode<synchronous>, transform_indices = @transform_1, window_bounds = array<i64: 36, 32>}, {pipeline_mode = #tpu.pipeline_mode<synchronous>, transform_indices = @transform_2, window_bounds = array<i64: 1, 32>}, {pipeline_mode = #tpu.pipeline_mode<synchronous>, transform_indices = @transform_3, window_bounds = array<i64: 32, 32>}, {pipeline_mode = #tpu.pipeline_mode<synchronous>, transform_indices = @transform_4, window_bounds = array<i64: 1, 32>}, {pipeline_mode = #tpu.pipeline_mode<synchronous>, transform_indices = @transform_5, window_bounds = array<i64: 32, 128>}, {pipeline_mode = #tpu.pipeline_mode<synchronous>, transform_indices = @transform_6, window_bounds = array<i64: 1, 128>}, {transform_indices = @transform_7, window_bounds = array<i64: 16, 128>}]} {
    %c0 = arith.constant 0 : index
    %c0_0 = arith.constant 0 : index
    %0 = vector.load %arg1[%c0, %c0_0] : memref<16x36xbf16, #tpu.memory_space<vmem>>, vector<16x36xbf16>
    %c0_1 = arith.constant 0 : index
    %c0_2 = arith.constant 0 : index
    %1 = vector.load %arg2[%c0_1, %c0_2] : memref<36x32xbf16, #tpu.memory_space<vmem>>, vector<36x32xbf16>
    %cst = arith.constant dense<0.000000e+00> : vector<16x32xf32>
    %2 = tpu.matmul %0, %1, %cst {dimension_numbers = #tpu.dot_dimension_numbers<[1], [0], [0], [1], [0, 0, 1, 1], [], []>} : vector<16x36xbf16>, vector<36x32xbf16>, vector<16x32xf32> -> vector<16x32xf32>
    %c0_3 = arith.constant 0 : index
    %c0_4 = arith.constant 0 : index
    %3 = vector.load %arg3[%c0_3, %c0_4] : memref<1x32xf32, #tpu.memory_space<vmem>>, vector<1x32xf32>
    %4 = vector.broadcast %3 : vector<1x32xf32> to vector<16x32xf32>
    %5 = arith.addf %2, %4 : vector<16x32xf32>
    %cst_5 = arith.constant 0.000000e+00 : f32
    %6 = vector.broadcast %cst_5 : f32 to vector<16x32xf32>
    %7 = arith.maximumf %5, %6 : vector<16x32xf32>
    %8 = arith.truncf %7 : vector<16x32xf32> to vector<16x32xbf16>
    %c0_6 = arith.constant 0 : index
    %c0_7 = arith.constant 0 : index
    %9 = vector.load %arg4[%c0_6, %c0_7] : memref<32x32xbf16, #tpu.memory_space<vmem>>, vector<32x32xbf16>
    %cst_8 = arith.constant dense<0.000000e+00> : vector<16x32xf32>
    %10 = tpu.matmul %8, %9, %cst_8 {dimension_numbers = #tpu.dot_dimension_numbers<[1], [0], [0], [1], [0, 0, 1, 1], [], []>} : vector<16x32xbf16>, vector<32x32xbf16>, vector<16x32xf32> -> vector<16x32xf32>
    %c0_9 = arith.constant 0 : index
    %c0_10 = arith.constant 0 : index
    %11 = vector.load %arg5[%c0_9, %c0_10] : memref<1x32xf32, #tpu.memory_space<vmem>>, vector<1x32xf32>
    %12 = vector.broadcast %11 : vector<1x32xf32> to vector<16x32xf32>
    %13 = arith.addf %10, %12 : vector<16x32xf32>
    %cst_11 = arith.constant 0.000000e+00 : f32
    %14 = vector.broadcast %cst_11 : f32 to vector<16x32xf32>
    %15 = arith.maximumf %13, %14 : vector<16x32xf32>
    %16 = arith.truncf %15 : vector<16x32xf32> to vector<16x32xbf16>
    %c0_12 = arith.constant 0 : index
    %c0_13 = arith.constant 0 : index
    %17 = vector.load %arg6[%c0_12, %c0_13] : memref<32x128xbf16, #tpu.memory_space<vmem>>, vector<32x128xbf16>
    %cst_14 = arith.constant dense<0.000000e+00> : vector<16x128xf32>
    %18 = tpu.matmul %16, %17, %cst_14 {dimension_numbers = #tpu.dot_dimension_numbers<[1], [0], [0], [1], [0, 0, 1, 1], [], []>} : vector<16x32xbf16>, vector<32x128xbf16>, vector<16x128xf32> -> vector<16x128xf32>
    %c0_15 = arith.constant 0 : index
    %c0_16 = arith.constant 0 : index
    %19 = vector.load %arg7[%c0_15, %c0_16] : memref<1x128xf32, #tpu.memory_space<vmem>>, vector<1x128xf32>
    %20 = vector.broadcast %19 : vector<1x128xf32> to vector<16x128xf32>
    %21 = arith.addf %18, %20 : vector<16x128xf32>
    %22 = arith.truncf %21 : vector<16x128xf32> to vector<16x128xbf16>
    %c0_17 = arith.constant 0 : index
    %c0_18 = arith.constant 0 : index
    %23 = vector.load %arg8[%c0_17, %c0_18] : memref<16x128xbf16, #tpu.memory_space<vmem>>, vector<16x128xbf16>
    tpu.vector_store %arg8[%c0_17, %c0_18], %22 {strides = array<i32>} : memref<16x128xbf16, #tpu.memory_space<vmem>>, vector<16x128xbf16>,
    return
  }
  func.func @transform_0(%arg0: i32) -> (i32, i32) {
    %c0_i32 = arith.constant 0 : i32
    %c0_i32_0 = arith.constant 0 : i32
    return %arg0, %c0_i32 : i32, i32
  }
  func.func @transform_1(%arg0: i32) -> (i32, i32) {
    %c0_i32 = arith.constant 0 : i32
    %c0_i32_0 = arith.constant 0 : i32
    %c0_i32_1 = arith.constant 0 : i32
    return %c0_i32, %c0_i32_0 : i32, i32
  }
  func.func @transform_2(%arg0: i32) -> (i32, i32) {
    %c0_i32 = arith.constant 0 : i32
    %c0_i32_0 = arith.constant 0 : i32
    %c0_i32_1 = arith.constant 0 : i32
    return %c0_i32, %c0_i32_0 : i32, i32
  }
  func.func @transform_3(%arg0: i32) -> (i32, i32) {
    %c0_i32 = arith.constant 0 : i32
    %c0_i32_0 = arith.constant 0 : i32
    %c0_i32_1 = arith.constant 0 : i32
    return %c0_i32, %c0_i32_0 : i32, i32
  }
  func.func @transform_4(%arg0: i32) -> (i32, i32) {
    %c0_i32 = arith.constant 0 : i32
    %c0_i32_0 = arith.constant 0 : i32
    %c0_i32_1 = arith.constant 0 : i32
    return %c0_i32, %c0_i32_0 : i32, i32
  }
  func.func @transform_5(%arg0: i32) -> (i32, i32) {
    %c0_i32 = arith.constant 0 : i32
    %c0_i32_0 = arith.constant 0 : i32
    %c0_i32_1 = arith.constant 0 : i32
    return %c0_i32, %c0_i32_0 : i32, i32
  }
  func.func @transform_6(%arg0: i32) -> (i32, i32) {
    %c0_i32 = arith.constant 0 : i32
    %c0_i32_0 = arith.constant 0 : i32
    %c0_i32_1 = arith.constant 0 : i32
    return %c0_i32, %c0_i32_0 : i32, i32
  }
  func.func @transform_7(%arg0: i32) -> (i32, i32) {
    %c0_i32 = arith.constant 0 : i32
    %c0_i32_0 = arith.constant 0 : i32
    return %arg0, %c0_i32 : i32, i32
  }
}

module attributes {stable_mosaic.version = 11 : i64} {
  func.func @_fused_mlp_kernel(%arg0: i32, %arg1: memref<32x12xbf16, #tpu.memory_space<vmem>>, %arg2: memref<12x32xbf16, #tpu.memory_space<vmem>>, %arg3: memref<1x32xf32, #tpu.memory_space<vmem>>, %arg4: memref<32x32xbf16, #tpu.memory_space<vmem>>, %arg5: memref<1x32xf32, #tpu.memory_space<vmem>>, %arg6: memref<32x128xbf16, #tpu.memory_space<vmem>>, %arg7: memref<1x128xf32, #tpu.memory_space<vmem>>, %arg8: memref<128x128xbf16, #tpu.memory_space<vmem>>, %arg9: memref<1x128xf32, #tpu.memory_space<vmem>>, %arg10: memref<32x128xbf16, #tpu.memory_space<vmem>>, %arg11: memref<32x128xbf16, #tpu.memory_space<vmem>>) attributes {dimension_semantics = [#tpu.dimension_semantics<parallel>], iteration_bounds = array<i64: 1>, scalar_prefetch = 0 : i64, scratch_operands = 0 : i64, tpu.core_type = #tpu.core_type<tc>, window_params = [{transform_indices = @transform_0, window_bounds = array<i64: 32, 12>}, {pipeline_mode = #tpu.pipeline_mode<synchronous>, transform_indices = @transform_1, window_bounds = array<i64: 12, 32>}, {pipeline_mode = #tpu.pipeline_mode<synchronous>, transform_indices = @transform_2, window_bounds = array<i64: 1, 32>}, {pipeline_mode = #tpu.pipeline_mode<synchronous>, transform_indices = @transform_3, window_bounds = array<i64: 32, 32>}, {pipeline_mode = #tpu.pipeline_mode<synchronous>, transform_indices = @transform_4, window_bounds = array<i64: 1, 32>}, {pipeline_mode = #tpu.pipeline_mode<synchronous>, transform_indices = @transform_5, window_bounds = array<i64: 32, 128>}, {pipeline_mode = #tpu.pipeline_mode<synchronous>, transform_indices = @transform_6, window_bounds = array<i64: 1, 128>}, {pipeline_mode = #tpu.pipeline_mode<synchronous>, transform_indices = @transform_7, window_bounds = array<i64: 128, 128>}, {pipeline_mode = #tpu.pipeline_mode<synchronous>, transform_indices = @transform_8, window_bounds = array<i64: 1, 128>}, {transform_indices = @transform_9, window_bounds = array<i64: 32, 128>}, {transform_indices = @transform_10, window_bounds = array<i64: 32, 128>}]} {
    %c0 = arith.constant 0 : index
    %c0_0 = arith.constant 0 : index
    %0 = vector.load %arg1[%c0, %c0_0] : memref<32x12xbf16, #tpu.memory_space<vmem>>, vector<32x12xbf16>
    %c0_1 = arith.constant 0 : index
    %c0_2 = arith.constant 0 : index
    %1 = vector.load %arg2[%c0_1, %c0_2] : memref<12x32xbf16, #tpu.memory_space<vmem>>, vector<12x32xbf16>
    %cst = arith.constant dense<0.000000e+00> : vector<32x32xf32>
    %2 = tpu.matmul %0, %1, %cst {dimension_numbers = #tpu.dot_dimension_numbers<[1], [0], [0], [1], [0, 0, 1, 1], [], []>} : vector<32x12xbf16>, vector<12x32xbf16>, vector<32x32xf32> -> vector<32x32xf32>
    %c0_3 = arith.constant 0 : index
    %c0_4 = arith.constant 0 : index
    %3 = vector.load %arg3[%c0_3, %c0_4] : memref<1x32xf32, #tpu.memory_space<vmem>>, vector<1x32xf32>
    %4 = vector.broadcast %3 : vector<1x32xf32> to vector<32x32xf32>
    %5 = arith.addf %2, %4 : vector<32x32xf32>
    %cst_5 = arith.constant 0.000000e+00 : f32
    %6 = vector.broadcast %cst_5 : f32 to vector<32x32xf32>
    %7 = arith.maximumf %5, %6 : vector<32x32xf32>
    %8 = arith.truncf %7 : vector<32x32xf32> to vector<32x32xbf16>
    %c0_6 = arith.constant 0 : index
    %c0_7 = arith.constant 0 : index
    %9 = vector.load %arg4[%c0_6, %c0_7] : memref<32x32xbf16, #tpu.memory_space<vmem>>, vector<32x32xbf16>
    %cst_8 = arith.constant dense<0.000000e+00> : vector<32x32xf32>
    %10 = tpu.matmul %8, %9, %cst_8 {dimension_numbers = #tpu.dot_dimension_numbers<[1], [0], [0], [1], [0, 0, 1, 1], [], []>} : vector<32x32xbf16>, vector<32x32xbf16>, vector<32x32xf32> -> vector<32x32xf32>
    %c0_9 = arith.constant 0 : index
    %c0_10 = arith.constant 0 : index
    %11 = vector.load %arg5[%c0_9, %c0_10] : memref<1x32xf32, #tpu.memory_space<vmem>>, vector<1x32xf32>
    %12 = vector.broadcast %11 : vector<1x32xf32> to vector<32x32xf32>
    %13 = arith.addf %10, %12 : vector<32x32xf32>
    %cst_11 = arith.constant 0.000000e+00 : f32
    %14 = vector.broadcast %cst_11 : f32 to vector<32x32xf32>
    %15 = arith.maximumf %13, %14 : vector<32x32xf32>
    %16 = arith.truncf %15 : vector<32x32xf32> to vector<32x32xbf16>
    %c0_12 = arith.constant 0 : index
    %c0_13 = arith.constant 0 : index
    %17 = vector.load %arg6[%c0_12, %c0_13] : memref<32x128xbf16, #tpu.memory_space<vmem>>, vector<32x128xbf16>
    %cst_14 = arith.constant dense<0.000000e+00> : vector<32x128xf32>
    %18 = tpu.matmul %16, %17, %cst_14 {dimension_numbers = #tpu.dot_dimension_numbers<[1], [0], [0], [1], [0, 0, 1, 1], [], []>} : vector<32x32xbf16>, vector<32x128xbf16>, vector<32x128xf32> -> vector<32x128xf32>
    %c0_15 = arith.constant 0 : index
    %c0_16 = arith.constant 0 : index
    %19 = vector.load %arg7[%c0_15, %c0_16] : memref<1x128xf32, #tpu.memory_space<vmem>>, vector<1x128xf32>
    %20 = vector.broadcast %19 : vector<1x128xf32> to vector<32x128xf32>
    %21 = arith.addf %18, %20 : vector<32x128xf32>
    %22 = arith.truncf %21 : vector<32x128xf32> to vector<32x128xbf16>
    %c0_17 = arith.constant 0 : index
    %c0_18 = arith.constant 0 : index
    %23 = vector.load %arg10[%c0_17, %c0_18] : memref<32x128xbf16, #tpu.memory_space<vmem>>, vector<32x128xbf16>
    tpu.vector_store %arg10[%c0_17, %c0_18], %22 {strides = array<i32>} : memref<32x128xbf16, #tpu.memory_space<vmem>>, vector<32x128xbf16>,
    %24 = arith.truncf %21 : vector<32x128xf32> to vector<32x128xbf16>
    %c0_19 = arith.constant 0 : index
    %c0_20 = arith.constant 0 : index
    %25 = vector.load %arg8[%c0_19, %c0_20] : memref<128x128xbf16, #tpu.memory_space<vmem>>, vector<128x128xbf16>
    %cst_21 = arith.constant dense<0.000000e+00> : vector<32x128xf32>
    %26 = tpu.matmul %24, %25, %cst_21 {dimension_numbers = #tpu.dot_dimension_numbers<[1], [0], [0], [1], [0, 0, 1, 1], [], []>} : vector<32x128xbf16>, vector<128x128xbf16>, vector<32x128xf32> -> vector<32x128xf32>
    %c0_22 = arith.constant 0 : index
    %c0_23 = arith.constant 0 : index
    %27 = vector.load %arg9[%c0_22, %c0_23] : memref<1x128xf32, #tpu.memory_space<vmem>>, vector<1x128xf32>
    %28 = vector.broadcast %27 : vector<1x128xf32> to vector<32x128xf32>
    %29 = arith.addf %26, %28 : vector<32x128xf32>
    %30 = arith.truncf %29 : vector<32x128xf32> to vector<32x128xbf16>
    %c0_24 = arith.constant 0 : index
    %c0_25 = arith.constant 0 : index
    %31 = vector.load %arg11[%c0_24, %c0_25] : memref<32x128xbf16, #tpu.memory_space<vmem>>, vector<32x128xbf16>
    tpu.vector_store %arg11[%c0_24, %c0_25], %30 {strides = array<i32>} : memref<32x128xbf16, #tpu.memory_space<vmem>>, vector<32x128xbf16>,
    return
  }
  func.func @transform_0(%arg0: i32) -> (i32, i32) {
    %c0_i32 = arith.constant 0 : i32
    %c0_i32_0 = arith.constant 0 : i32
    return %arg0, %c0_i32 : i32, i32
  }
  func.func @transform_1(%arg0: i32) -> (i32, i32) {
    %c0_i32 = arith.constant 0 : i32
    %c0_i32_0 = arith.constant 0 : i32
    %c0_i32_1 = arith.constant 0 : i32
    return %c0_i32, %c0_i32_0 : i32, i32
  }
  func.func @transform_2(%arg0: i32) -> (i32, i32) {
    %c0_i32 = arith.constant 0 : i32
    %c0_i32_0 = arith.constant 0 : i32
    %c0_i32_1 = arith.constant 0 : i32
    return %c0_i32, %c0_i32_0 : i32, i32
  }
  func.func @transform_3(%arg0: i32) -> (i32, i32) {
    %c0_i32 = arith.constant 0 : i32
    %c0_i32_0 = arith.constant 0 : i32
    %c0_i32_1 = arith.constant 0 : i32
    return %c0_i32, %c0_i32_0 : i32, i32
  }
  func.func @transform_4(%arg0: i32) -> (i32, i32) {
    %c0_i32 = arith.constant 0 : i32
    %c0_i32_0 = arith.constant 0 : i32
    %c0_i32_1 = arith.constant 0 : i32
    return %c0_i32, %c0_i32_0 : i32, i32
  }
  func.func @transform_5(%arg0: i32) -> (i32, i32) {
    %c0_i32 = arith.constant 0 : i32
    %c0_i32_0 = arith.constant 0 : i32
    %c0_i32_1 = arith.constant 0 : i32
    return %c0_i32, %c0_i32_0 : i32, i32
  }
  func.func @transform_6(%arg0: i32) -> (i32, i32) {
    %c0_i32 = arith.constant 0 : i32
    %c0_i32_0 = arith.constant 0 : i32
    %c0_i32_1 = arith.constant 0 : i32
    return %c0_i32, %c0_i32_0 : i32, i32
  }
  func.func @transform_7(%arg0: i32) -> (i32, i32) {
    %c0_i32 = arith.constant 0 : i32
    %c0_i32_0 = arith.constant 0 : i32
    %c0_i32_1 = arith.constant 0 : i32
    return %c0_i32, %c0_i32_0 : i32, i32
  }
  func.func @transform_8(%arg0: i32) -> (i32, i32) {
    %c0_i32 = arith.constant 0 : i32
    %c0_i32_0 = arith.constant 0 : i32
    %c0_i32_1 = arith.constant 0 : i32
    return %c0_i32, %c0_i32_0 : i32, i32
  }
  func.func @transform_9(%arg0: i32) -> (i32, i32) {
    %c0_i32 = arith.constant 0 : i32
    %c0_i32_0 = arith.constant 0 : i32
    return %arg0, %c0_i32 : i32, i32
  }
  func.func @transform_10(%arg0: i32) -> (i32, i32) {
    %c0_i32 = arith.constant 0 : i32
    %c0_i32_0 = arith.constant 0 : i32
    return %arg0, %c0_i32 : i32, i32
  }
}

module attributes {stable_mosaic.version = 11 : i64} {
  func.func @_scatter_add_small_kernel(%arg0: i32, %arg1: memref<128x1xi32, #tpu.memory_space<vmem>>, %arg2: memref<128x32xbf16, #tpu.memory_space<vmem>>, %arg3: memref<2x32xbf16, #tpu.memory_space<vmem>>, %arg4: memref<2x32xf32, #tpu.memory_space<vmem>>) attributes {dimension_semantics = [#tpu.dimension_semantics<arbitrary>], iteration_bounds = array<i64: 1>, scalar_prefetch = 0 : i64, scratch_operands = 1 : i64, tpu.core_type = #tpu.core_type<tc>, window_params = [{transform_indices = @transform_0, window_bounds = array<i64: 128, 1>}, {transform_indices = @transform_1, window_bounds = array<i64: 128, 32>}, {pipeline_mode = #tpu.pipeline_mode<synchronous>, transform_indices = @transform_2, window_bounds = array<i64: 2, 32>}]} {
    %c0_i32 = arith.constant 0 : i32
    %0 = arith.cmpi eq, %arg0, %c0_i32 : i32
    %1 = arith.extui %0 : i1 to i32
    %c0_i32_0 = arith.constant 0 : i32
    %2 = arith.cmpi ne, %1, %c0_i32_0 : i32
    scf.if %2 {
      %cst_14 = arith.constant 0.000000e+00 : f32
      %29 = vector.broadcast %cst_14 : f32 to vector<2x32xf32>
      %c0_15 = arith.constant 0 : index
      %c0_16 = arith.constant 0 : index
      %30 = vector.load %arg4[%c0_15, %c0_16] : memref<2x32xf32, #tpu.memory_space<vmem>>, vector<2x32xf32>
      tpu.vector_store %arg4[%c0_15, %c0_16], %29 {strides = array<i32>} : memref<2x32xf32, #tpu.memory_space<vmem>>, vector<2x32xf32>,
    } else {
    }
    %c0 = arith.constant 0 : index
    %c0_1 = arith.constant 0 : index
    %3 = vector.load %arg1[%c0, %c0_1] : memref<128x1xi32, #tpu.memory_space<vmem>>, vector<128x1xi32>
    %c0_2 = arith.constant 0 : index
    %c0_3 = arith.constant 0 : index
    %4 = vector.load %arg2[%c0_2, %c0_3] : memref<128x32xbf16, #tpu.memory_space<vmem>>, vector<128x32xbf16>
    %5 = arith.extf %4 : vector<128x32xbf16> to vector<128x32xf32>
    %c0_i32_4 = arith.constant 0 : i32
    %6 = vector.broadcast %c0_i32_4 : i32 to vector<128x1xi32>
    %7 = arith.cmpi eq, %3, %6 : vector<128x1xi32>
    %cst = arith.constant 0.000000e+00 : f32
    %8 = vector.shape_cast %7 : vector<128x1xi1> to vector<128x1xi1>
    %9 = vector.broadcast %8 : vector<128x1xi1> to vector<128x32xi1>
    %10 = vector.broadcast %cst : f32 to vector<128x32xf32>
    %11 = arith.select %9, %5, %10 : vector<128x32xi1>, vector<128x32xf32>
    %cst_5 = arith.constant dense<0.000000e+00> : vector<32xf32>
    %12 = vector.multi_reduction <add>, %11, %cst_5 [0] : vector<128x32xf32> to vector<32xf32>
    %13 = vector.shape_cast %12 : vector<32xf32> to vector<1x32xf32>
    %c1_i32 = arith.constant 1 : i32
    %14 = vector.broadcast %c1_i32 : i32 to vector<128x1xi32>
    %15 = arith.cmpi eq, %3, %14 : vector<128x1xi32>
    %cst_6 = arith.constant 0.000000e+00 : f32
    %16 = vector.shape_cast %15 : vector<128x1xi1> to vector<128x1xi1>
    %17 = vector.broadcast %16 : vector<128x1xi1> to vector<128x32xi1>
    %18 = vector.broadcast %cst_6 : f32 to vector<128x32xf32>
    %19 = arith.select %17, %5, %18 : vector<128x32xi1>, vector<128x32xf32>
    %cst_7 = arith.constant dense<0.000000e+00> : vector<32xf32>
    %20 = vector.multi_reduction <add>, %19, %cst_7 [0] : vector<128x32xf32> to vector<32xf32>
    %21 = vector.shape_cast %20 : vector<32xf32> to vector<1x32xf32>
    %c0_8 = arith.constant 0 : index
    %c0_9 = arith.constant 0 : index
    %22 = vector.load %arg4[%c0_8, %c0_9] : memref<2x32xf32, #tpu.memory_space<vmem>>, vector<2x32xf32>
    %23 = tpu.concatenate %13, %21 in 0 : vector<1x32xf32>, vector<1x32xf32> -> vector<2x32xf32>
    %24 = arith.addf %22, %23 : vector<2x32xf32>
    %c0_10 = arith.constant 0 : index
    %c0_11 = arith.constant 0 : index
    %25 = vector.load %arg4[%c0_10, %c0_11] : memref<2x32xf32, #tpu.memory_space<vmem>>, vector<2x32xf32>
    tpu.vector_store %arg4[%c0_10, %c0_11], %24 {strides = array<i32>} : memref<2x32xf32, #tpu.memory_space<vmem>>, vector<2x32xf32>,
    %c0_i32_12 = arith.constant 0 : i32
    %26 = arith.cmpi eq, %arg0, %c0_i32_12 : i32
    %27 = arith.extui %26 : i1 to i32
    %c0_i32_13 = arith.constant 0 : i32
    %28 = arith.cmpi ne, %27, %c0_i32_13 : i32
    scf.if %28 {
      %c0_14 = arith.constant 0 : index
      %c0_15 = arith.constant 0 : index
      %29 = vector.load %arg4[%c0_14, %c0_15] : memref<2x32xf32, #tpu.memory_space<vmem>>, vector<2x32xf32>
      %30 = arith.truncf %29 : vector<2x32xf32> to vector<2x32xbf16>
      %c0_16 = arith.constant 0 : index
      %c0_17 = arith.constant 0 : index
      %31 = vector.load %arg3[%c0_16, %c0_17] : memref<2x32xbf16, #tpu.memory_space<vmem>>, vector<2x32xbf16>
      tpu.vector_store %arg3[%c0_16, %c0_17], %30 {strides = array<i32>} : memref<2x32xbf16, #tpu.memory_space<vmem>>, vector<2x32xbf16>,
    } else {
    }
    return
  }
  func.func @transform_0(%arg0: i32) -> (i32, i32) {
    %c0_i32 = arith.constant 0 : i32
    %c0_i32_0 = arith.constant 0 : i32
    return %arg0, %c0_i32 : i32, i32
  }
  func.func @transform_1(%arg0: i32) -> (i32, i32) {
    %c0_i32 = arith.constant 0 : i32
    %c0_i32_0 = arith.constant 0 : i32
    return %arg0, %c0_i32 : i32, i32
  }
  func.func @transform_2(%arg0: i32) -> (i32, i32) {
    %c0_i32 = arith.constant 0 : i32
    %c0_i32_0 = arith.constant 0 : i32
    %c0_i32_1 = arith.constant 0 : i32
    return %c0_i32, %c0_i32_0 : i32, i32
  }
}

module attributes {stable_mosaic.version = 11 : i64} {
  func.func @_fused_mlp_kernel(%arg0: i32, %arg1: memref<16x64xbf16, #tpu.memory_space<vmem>>, %arg2: memref<64x32xbf16, #tpu.memory_space<vmem>>, %arg3: memref<1x32xf32, #tpu.memory_space<vmem>>, %arg4: memref<32x32xbf16, #tpu.memory_space<vmem>>, %arg5: memref<1x32xf32, #tpu.memory_space<vmem>>, %arg6: memref<32x128xbf16, #tpu.memory_space<vmem>>, %arg7: memref<1x128xf32, #tpu.memory_space<vmem>>, %arg8: memref<16x128xbf16, #tpu.memory_space<vmem>>) attributes {dimension_semantics = [#tpu.dimension_semantics<parallel>], iteration_bounds = array<i64: 1>, scalar_prefetch = 0 : i64, scratch_operands = 0 : i64, tpu.core_type = #tpu.core_type<tc>, window_params = [{transform_indices = @transform_0, window_bounds = array<i64: 16, 64>}, {pipeline_mode = #tpu.pipeline_mode<synchronous>, transform_indices = @transform_1, window_bounds = array<i64: 64, 32>}, {pipeline_mode = #tpu.pipeline_mode<synchronous>, transform_indices = @transform_2, window_bounds = array<i64: 1, 32>}, {pipeline_mode = #tpu.pipeline_mode<synchronous>, transform_indices = @transform_3, window_bounds = array<i64: 32, 32>}, {pipeline_mode = #tpu.pipeline_mode<synchronous>, transform_indices = @transform_4, window_bounds = array<i64: 1, 32>}, {pipeline_mode = #tpu.pipeline_mode<synchronous>, transform_indices = @transform_5, window_bounds = array<i64: 32, 128>}, {pipeline_mode = #tpu.pipeline_mode<synchronous>, transform_indices = @transform_6, window_bounds = array<i64: 1, 128>}, {transform_indices = @transform_7, window_bounds = array<i64: 16, 128>}]} {
    %c0 = arith.constant 0 : index
    %c0_0 = arith.constant 0 : index
    %0 = vector.load %arg1[%c0, %c0_0] : memref<16x64xbf16, #tpu.memory_space<vmem>>, vector<16x64xbf16>
    %c0_1 = arith.constant 0 : index
    %c0_2 = arith.constant 0 : index
    %1 = vector.load %arg2[%c0_1, %c0_2] : memref<64x32xbf16, #tpu.memory_space<vmem>>, vector<64x32xbf16>
    %cst = arith.constant dense<0.000000e+00> : vector<16x32xf32>
    %2 = tpu.matmul %0, %1, %cst {dimension_numbers = #tpu.dot_dimension_numbers<[1], [0], [0], [1], [0, 0, 1, 1], [], []>} : vector<16x64xbf16>, vector<64x32xbf16>, vector<16x32xf32> -> vector<16x32xf32>
    %c0_3 = arith.constant 0 : index
    %c0_4 = arith.constant 0 : index
    %3 = vector.load %arg3[%c0_3, %c0_4] : memref<1x32xf32, #tpu.memory_space<vmem>>, vector<1x32xf32>
    %4 = vector.broadcast %3 : vector<1x32xf32> to vector<16x32xf32>
    %5 = arith.addf %2, %4 : vector<16x32xf32>
    %cst_5 = arith.constant 0.000000e+00 : f32
    %6 = vector.broadcast %cst_5 : f32 to vector<16x32xf32>
    %7 = arith.maximumf %5, %6 : vector<16x32xf32>
    %8 = arith.truncf %7 : vector<16x32xf32> to vector<16x32xbf16>
    %c0_6 = arith.constant 0 : index
    %c0_7 = arith.constant 0 : index
    %9 = vector.load %arg4[%c0_6, %c0_7] : memref<32x32xbf16, #tpu.memory_space<vmem>>, vector<32x32xbf16>
    %cst_8 = arith.constant dense<0.000000e+00> : vector<16x32xf32>
    %10 = tpu.matmul %8, %9, %cst_8 {dimension_numbers = #tpu.dot_dimension_numbers<[1], [0], [0], [1], [0, 0, 1, 1], [], []>} : vector<16x32xbf16>, vector<32x32xbf16>, vector<16x32xf32> -> vector<16x32xf32>
    %c0_9 = arith.constant 0 : index
    %c0_10 = arith.constant 0 : index
    %11 = vector.load %arg5[%c0_9, %c0_10] : memref<1x32xf32, #tpu.memory_space<vmem>>, vector<1x32xf32>
    %12 = vector.broadcast %11 : vector<1x32xf32> to vector<16x32xf32>
    %13 = arith.addf %10, %12 : vector<16x32xf32>
    %cst_11 = arith.constant 0.000000e+00 : f32
    %14 = vector.broadcast %cst_11 : f32 to vector<16x32xf32>
    %15 = arith.maximumf %13, %14 : vector<16x32xf32>
    %16 = arith.truncf %15 : vector<16x32xf32> to vector<16x32xbf16>
    %c0_12 = arith.constant 0 : index
    %c0_13 = arith.constant 0 : index
    %17 = vector.load %arg6[%c0_12, %c0_13] : memref<32x128xbf16, #tpu.memory_space<vmem>>, vector<32x128xbf16>
    %cst_14 = arith.constant dense<0.000000e+00> : vector<16x128xf32>
    %18 = tpu.matmul %16, %17, %cst_14 {dimension_numbers = #tpu.dot_dimension_numbers<[1], [0], [0], [1], [0, 0, 1, 1], [], []>} : vector<16x32xbf16>, vector<32x128xbf16>, vector<16x128xf32> -> vector<16x128xf32>
    %c0_15 = arith.constant 0 : index
    %c0_16 = arith.constant 0 : index
    %19 = vector.load %arg7[%c0_15, %c0_16] : memref<1x128xf32, #tpu.memory_space<vmem>>, vector<1x128xf32>
    %20 = vector.broadcast %19 : vector<1x128xf32> to vector<16x128xf32>
    %21 = arith.addf %18, %20 : vector<16x128xf32>
    %22 = arith.truncf %21 : vector<16x128xf32> to vector<16x128xbf16>
    %c0_17 = arith.constant 0 : index
    %c0_18 = arith.constant 0 : index
    %23 = vector.load %arg8[%c0_17, %c0_18] : memref<16x128xbf16, #tpu.memory_space<vmem>>, vector<16x128xbf16>
    tpu.vector_store %arg8[%c0_17, %c0_18], %22 {strides = array<i32>} : memref<16x128xbf16, #tpu.memory_space<vmem>>, vector<16x128xbf16>,
    return
  }
  func.func @transform_0(%arg0: i32) -> (i32, i32) {
    %c0_i32 = arith.constant 0 : i32
    %c0_i32_0 = arith.constant 0 : i32
    return %arg0, %c0_i32 : i32, i32
  }
  func.func @transform_1(%arg0: i32) -> (i32, i32) {
    %c0_i32 = arith.constant 0 : i32
    %c0_i32_0 = arith.constant 0 : i32
    %c0_i32_1 = arith.constant 0 : i32
    return %c0_i32, %c0_i32_0 : i32, i32
  }
  func.func @transform_2(%arg0: i32) -> (i32, i32) {
    %c0_i32 = arith.constant 0 : i32
    %c0_i32_0 = arith.constant 0 : i32
    %c0_i32_1 = arith.constant 0 : i32
    return %c0_i32, %c0_i32_0 : i32, i32
  }
  func.func @transform_3(%arg0: i32) -> (i32, i32) {
    %c0_i32 = arith.constant 0 : i32
    %c0_i32_0 = arith.constant 0 : i32
    %c0_i32_1 = arith.constant 0 : i32
    return %c0_i32, %c0_i32_0 : i32, i32
  }
  func.func @transform_4(%arg0: i32) -> (i32, i32) {
    %c0_i32 = arith.constant 0 : i32
    %c0_i32_0 = arith.constant 0 : i32
    %c0_i32_1 = arith.constant 0 : i32
    return %c0_i32, %c0_i32_0 : i32, i32
  }
  func.func @transform_5(%arg0: i32) -> (i32, i32) {
    %c0_i32 = arith.constant 0 : i32
    %c0_i32_0 = arith.constant 0 : i32
    %c0_i32_1 = arith.constant 0 : i32
    return %c0_i32, %c0_i32_0 : i32, i32
  }
  func.func @transform_6(%arg0: i32) -> (i32, i32) {
    %c0_i32 = arith.constant 0 : i32
    %c0_i32_0 = arith.constant 0 : i32
    %c0_i32_1 = arith.constant 0 : i32
    return %c0_i32, %c0_i32_0 : i32, i32
  }
  func.func @transform_7(%arg0: i32) -> (i32, i32) {
    %c0_i32 = arith.constant 0 : i32
    %c0_i32_0 = arith.constant 0 : i32
    return %arg0, %c0_i32 : i32, i32
  }
}

module attributes {stable_mosaic.version = 11 : i64} {
  func.func @_fused_mlp_kernel(%arg0: i32, %arg1: memref<32x108xbf16, #tpu.memory_space<vmem>>, %arg2: memref<32x1xi32, #tpu.memory_space<vmem>>, %arg3: memref<2x32xbf16, #tpu.memory_space<vmem>>, %arg4: memref<108x32xbf16, #tpu.memory_space<vmem>>, %arg5: memref<1x32xf32, #tpu.memory_space<vmem>>, %arg6: memref<32x32xbf16, #tpu.memory_space<vmem>>, %arg7: memref<1x32xf32, #tpu.memory_space<vmem>>, %arg8: memref<32x128xbf16, #tpu.memory_space<vmem>>, %arg9: memref<1x128xf32, #tpu.memory_space<vmem>>, %arg10: memref<128x128xbf16, #tpu.memory_space<vmem>>, %arg11: memref<1x128xf32, #tpu.memory_space<vmem>>, %arg12: memref<32x128xbf16, #tpu.memory_space<vmem>>, %arg13: memref<32x128xbf16, #tpu.memory_space<vmem>>) attributes {dimension_semantics = [#tpu.dimension_semantics<parallel>], iteration_bounds = array<i64: 1>, scalar_prefetch = 0 : i64, scratch_operands = 0 : i64, tpu.core_type = #tpu.core_type<tc>, window_params = [{transform_indices = @transform_0, window_bounds = array<i64: 32, 108>}, {transform_indices = @transform_1, window_bounds = array<i64: 32, 1>}, {pipeline_mode = #tpu.pipeline_mode<synchronous>, transform_indices = @transform_2, window_bounds = array<i64: 2, 32>}, {pipeline_mode = #tpu.pipeline_mode<synchronous>, transform_indices = @transform_3, window_bounds = array<i64: 108, 32>}, {pipeline_mode = #tpu.pipeline_mode<synchronous>, transform_indices = @transform_4, window_bounds = array<i64: 1, 32>}, {pipeline_mode = #tpu.pipeline_mode<synchronous>, transform_indices = @transform_5, window_bounds = array<i64: 32, 32>}, {pipeline_mode = #tpu.pipeline_mode<synchronous>, transform_indices = @transform_6, window_bounds = array<i64: 1, 32>}, {pipeline_mode = #tpu.pipeline_mode<synchronous>, transform_indices = @transform_7, window_bounds = array<i64: 32, 128>}, {pipeline_mode = #tpu.pipeline_mode<synchronous>, transform_indices = @transform_8, window_bounds = array<i64: 1, 128>}, {pipeline_mode = #tpu.pipeline_mode<synchronous>, transform_indices = @transform_9, window_bounds = array<i64: 128, 128>}, {pipeline_mode = #tpu.pipeline_mode<synchronous>, transform_indices = @transform_10, window_bounds = array<i64: 1, 128>}, {transform_indices = @transform_11, window_bounds = array<i64: 32, 128>}, {transform_indices = @transform_12, window_bounds = array<i64: 32, 128>}]} {
    %c0 = arith.constant 0 : index
    %c0_0 = arith.constant 0 : index
    %0 = vector.load %arg1[%c0, %c0_0] : memref<32x108xbf16, #tpu.memory_space<vmem>>, vector<32x108xbf16>
    %c0_1 = arith.constant 0 : index
    %c0_2 = arith.constant 0 : index
    %1 = vector.load %arg4[%c0_1, %c0_2] : memref<108x32xbf16, #tpu.memory_space<vmem>>, vector<108x32xbf16>
    %cst = arith.constant dense<0.000000e+00> : vector<32x32xf32>
    %2 = tpu.matmul %0, %1, %cst {dimension_numbers = #tpu.dot_dimension_numbers<[1], [0], [0], [1], [0, 0, 1, 1], [], []>} : vector<32x108xbf16>, vector<108x32xbf16>, vector<32x32xf32> -> vector<32x32xf32>
    %c0_3 = arith.constant 0 : index
    %c0_4 = arith.constant 0 : index
    %3 = vector.load %arg2[%c0_3, %c0_4] : memref<32x1xi32, #tpu.memory_space<vmem>>, vector<32x1xi32>
    %4 = tpu.iota {dimensions = array<i32: 1>} : vector<32x2xi32>
    %5 = vector.broadcast %3 : vector<32x1xi32> to vector<32x2xi32>
    %6 = arith.cmpi eq, %4, %5 : vector<32x2xi32>
    %7 = arith.extui %6 : vector<32x2xi1> to vector<32x2xi32>
    %8 = arith.sitofp %7 : vector<32x2xi32> to vector<32x2xf32>
    %9 = arith.truncf %8 : vector<32x2xf32> to vector<32x2xbf16>
    %c0_5 = arith.constant 0 : index
    %c0_6 = arith.constant 0 : index
    %10 = vector.load %arg3[%c0_5, %c0_6] : memref<2x32xbf16, #tpu.memory_space<vmem>>, vector<2x32xbf16>
    %cst_7 = arith.constant dense<0.000000e+00> : vector<32x32xf32>
    %11 = tpu.matmul %9, %10, %cst_7 {dimension_numbers = #tpu.dot_dimension_numbers<[1], [0], [0], [1], [0, 0, 1, 1], [], []>} : vector<32x2xbf16>, vector<2x32xbf16>, vector<32x32xf32> -> vector<32x32xf32>
    %12 = arith.addf %2, %11 : vector<32x32xf32>
    %c0_8 = arith.constant 0 : index
    %c0_9 = arith.constant 0 : index
    %13 = vector.load %arg5[%c0_8, %c0_9] : memref<1x32xf32, #tpu.memory_space<vmem>>, vector<1x32xf32>
    %14 = vector.broadcast %13 : vector<1x32xf32> to vector<32x32xf32>
    %15 = arith.addf %12, %14 : vector<32x32xf32>
    %cst_10 = arith.constant 0.000000e+00 : f32
    %16 = vector.broadcast %cst_10 : f32 to vector<32x32xf32>
    %17 = arith.maximumf %15, %16 : vector<32x32xf32>
    %18 = arith.truncf %17 : vector<32x32xf32> to vector<32x32xbf16>
    %c0_11 = arith.constant 0 : index
    %c0_12 = arith.constant 0 : index
    %19 = vector.load %arg6[%c0_11, %c0_12] : memref<32x32xbf16, #tpu.memory_space<vmem>>, vector<32x32xbf16>
    %cst_13 = arith.constant dense<0.000000e+00> : vector<32x32xf32>
    %20 = tpu.matmul %18, %19, %cst_13 {dimension_numbers = #tpu.dot_dimension_numbers<[1], [0], [0], [1], [0, 0, 1, 1], [], []>} : vector<32x32xbf16>, vector<32x32xbf16>, vector<32x32xf32> -> vector<32x32xf32>
    %c0_14 = arith.constant 0 : index
    %c0_15 = arith.constant 0 : index
    %21 = vector.load %arg7[%c0_14, %c0_15] : memref<1x32xf32, #tpu.memory_space<vmem>>, vector<1x32xf32>
    %22 = vector.broadcast %21 : vector<1x32xf32> to vector<32x32xf32>
    %23 = arith.addf %20, %22 : vector<32x32xf32>
    %cst_16 = arith.constant 0.000000e+00 : f32
    %24 = vector.broadcast %cst_16 : f32 to vector<32x32xf32>
    %25 = arith.maximumf %23, %24 : vector<32x32xf32>
    %26 = arith.truncf %25 : vector<32x32xf32> to vector<32x32xbf16>
    %c0_17 = arith.constant 0 : index
    %c0_18 = arith.constant 0 : index
    %27 = vector.load %arg8[%c0_17, %c0_18] : memref<32x128xbf16, #tpu.memory_space<vmem>>, vector<32x128xbf16>
    %cst_19 = arith.constant dense<0.000000e+00> : vector<32x128xf32>
    %28 = tpu.matmul %26, %27, %cst_19 {dimension_numbers = #tpu.dot_dimension_numbers<[1], [0], [0], [1], [0, 0, 1, 1], [], []>} : vector<32x32xbf16>, vector<32x128xbf16>, vector<32x128xf32> -> vector<32x128xf32>
    %c0_20 = arith.constant 0 : index
    %c0_21 = arith.constant 0 : index
    %29 = vector.load %arg9[%c0_20, %c0_21] : memref<1x128xf32, #tpu.memory_space<vmem>>, vector<1x128xf32>
    %30 = vector.broadcast %29 : vector<1x128xf32> to vector<32x128xf32>
    %31 = arith.addf %28, %30 : vector<32x128xf32>
    %32 = arith.truncf %31 : vector<32x128xf32> to vector<32x128xbf16>
    %c0_22 = arith.constant 0 : index
    %c0_23 = arith.constant 0 : index
    %33 = vector.load %arg12[%c0_22, %c0_23] : memref<32x128xbf16, #tpu.memory_space<vmem>>, vector<32x128xbf16>
    tpu.vector_store %arg12[%c0_22, %c0_23], %32 {strides = array<i32>} : memref<32x128xbf16, #tpu.memory_space<vmem>>, vector<32x128xbf16>,
    %34 = arith.truncf %31 : vector<32x128xf32> to vector<32x128xbf16>
    %c0_24 = arith.constant 0 : index
    %c0_25 = arith.constant 0 : index
    %35 = vector.load %arg10[%c0_24, %c0_25] : memref<128x128xbf16, #tpu.memory_space<vmem>>, vector<128x128xbf16>
    %cst_26 = arith.constant dense<0.000000e+00> : vector<32x128xf32>
    %36 = tpu.matmul %34, %35, %cst_26 {dimension_numbers = #tpu.dot_dimension_numbers<[1], [0], [0], [1], [0, 0, 1, 1], [], []>} : vector<32x128xbf16>, vector<128x128xbf16>, vector<32x128xf32> -> vector<32x128xf32>
    %c0_27 = arith.constant 0 : index
    %c0_28 = arith.constant 0 : index
    %37 = vector.load %arg11[%c0_27, %c0_28] : memref<1x128xf32, #tpu.memory_space<vmem>>, vector<1x128xf32>
    %38 = vector.broadcast %37 : vector<1x128xf32> to vector<32x128xf32>
    %39 = arith.addf %36, %38 : vector<32x128xf32>
    %40 = arith.truncf %39 : vector<32x128xf32> to vector<32x128xbf16>
    %c0_29 = arith.constant 0 : index
    %c0_30 = arith.constant 0 : index
    %41 = vector.load %arg13[%c0_29, %c0_30] : memref<32x128xbf16, #tpu.memory_space<vmem>>, vector<32x128xbf16>
    tpu.vector_store %arg13[%c0_29, %c0_30], %40 {strides = array<i32>} : memref<32x128xbf16, #tpu.memory_space<vmem>>, vector<32x128xbf16>,
    return
  }
  func.func @transform_0(%arg0: i32) -> (i32, i32) {
    %c0_i32 = arith.constant 0 : i32
    %c0_i32_0 = arith.constant 0 : i32
    return %arg0, %c0_i32 : i32, i32
  }
  func.func @transform_1(%arg0: i32) -> (i32, i32) {
    %c0_i32 = arith.constant 0 : i32
    %c0_i32_0 = arith.constant 0 : i32
    return %arg0, %c0_i32 : i32, i32
  }
  func.func @transform_2(%arg0: i32) -> (i32, i32) {
    %c0_i32 = arith.constant 0 : i32
    %c0_i32_0 = arith.constant 0 : i32
    %c0_i32_1 = arith.constant 0 : i32
    return %c0_i32, %c0_i32_0 : i32, i32
  }
  func.func @transform_3(%arg0: i32) -> (i32, i32) {
    %c0_i32 = arith.constant 0 : i32
    %c0_i32_0 = arith.constant 0 : i32
    %c0_i32_1 = arith.constant 0 : i32
    return %c0_i32, %c0_i32_0 : i32, i32
  }
  func.func @transform_4(%arg0: i32) -> (i32, i32) {
    %c0_i32 = arith.constant 0 : i32
    %c0_i32_0 = arith.constant 0 : i32
    %c0_i32_1 = arith.constant 0 : i32
    return %c0_i32, %c0_i32_0 : i32, i32
  }
  func.func @transform_5(%arg0: i32) -> (i32, i32) {
    %c0_i32 = arith.constant 0 : i32
    %c0_i32_0 = arith.constant 0 : i32
    %c0_i32_1 = arith.constant 0 : i32
    return %c0_i32, %c0_i32_0 : i32, i32
  }
  func.func @transform_6(%arg0: i32) -> (i32, i32) {
    %c0_i32 = arith.constant 0 : i32
    %c0_i32_0 = arith.constant 0 : i32
    %c0_i32_1 = arith.constant 0 : i32
    return %c0_i32, %c0_i32_0 : i32, i32
  }
  func.func @transform_7(%arg0: i32) -> (i32, i32) {
    %c0_i32 = arith.constant 0 : i32
    %c0_i32_0 = arith.constant 0 : i32
    %c0_i32_1 = arith.constant 0 : i32
    return %c0_i32, %c0_i32_0 : i32, i32
  }
  func.func @transform_8(%arg0: i32) -> (i32, i32) {
    %c0_i32 = arith.constant 0 : i32
    %c0_i32_0 = arith.constant 0 : i32
    %c0_i32_1 = arith.constant 0 : i32
    return %c0_i32, %c0_i32_0 : i32, i32
  }
  func.func @transform_9(%arg0: i32) -> (i32, i32) {
    %c0_i32 = arith.constant 0 : i32
    %c0_i32_0 = arith.constant 0 : i32
    %c0_i32_1 = arith.constant 0 : i32
    return %c0_i32, %c0_i32_0 : i32, i32
  }
  func.func @transform_10(%arg0: i32) -> (i32, i32) {
    %c0_i32 = arith.constant 0 : i32
    %c0_i32_0 = arith.constant 0 : i32
    %c0_i32_1 = arith.constant 0 : i32
    return %c0_i32, %c0_i32_0 : i32, i32
  }
  func.func @transform_11(%arg0: i32) -> (i32, i32) {
    %c0_i32 = arith.constant 0 : i32
    %c0_i32_0 = arith.constant 0 : i32
    return %arg0, %c0_i32 : i32, i32
  }
  func.func @transform_12(%arg0: i32) -> (i32, i32) {
    %c0_i32 = arith.constant 0 : i32
    %c0_i32_0 = arith.constant 0 : i32
    return %arg0, %c0_i32 : i32, i32
  }
}

module attributes {stable_mosaic.version = 11 : i64} {
  func.func @_fused_mlp_kernel(%arg0: i32, %arg1: memref<16x68xbf16, #tpu.memory_space<vmem>>, %arg2: memref<16x1xi32, #tpu.memory_space<vmem>>, %arg3: memref<2x32xbf16, #tpu.memory_space<vmem>>, %arg4: memref<68x32xbf16, #tpu.memory_space<vmem>>, %arg5: memref<1x32xf32, #tpu.memory_space<vmem>>, %arg6: memref<32x32xbf16, #tpu.memory_space<vmem>>, %arg7: memref<1x32xf32, #tpu.memory_space<vmem>>, %arg8: memref<32x128xbf16, #tpu.memory_space<vmem>>, %arg9: memref<1x128xf32, #tpu.memory_space<vmem>>, %arg10: memref<16x128xbf16, #tpu.memory_space<vmem>>) attributes {dimension_semantics = [#tpu.dimension_semantics<parallel>], iteration_bounds = array<i64: 1>, scalar_prefetch = 0 : i64, scratch_operands = 0 : i64, tpu.core_type = #tpu.core_type<tc>, window_params = [{transform_indices = @transform_0, window_bounds = array<i64: 16, 68>}, {transform_indices = @transform_1, window_bounds = array<i64: 16, 1>}, {pipeline_mode = #tpu.pipeline_mode<synchronous>, transform_indices = @transform_2, window_bounds = array<i64: 2, 32>}, {pipeline_mode = #tpu.pipeline_mode<synchronous>, transform_indices = @transform_3, window_bounds = array<i64: 68, 32>}, {pipeline_mode = #tpu.pipeline_mode<synchronous>, transform_indices = @transform_4, window_bounds = array<i64: 1, 32>}, {pipeline_mode = #tpu.pipeline_mode<synchronous>, transform_indices = @transform_5, window_bounds = array<i64: 32, 32>}, {pipeline_mode = #tpu.pipeline_mode<synchronous>, transform_indices = @transform_6, window_bounds = array<i64: 1, 32>}, {pipeline_mode = #tpu.pipeline_mode<synchronous>, transform_indices = @transform_7, window_bounds = array<i64: 32, 128>}, {pipeline_mode = #tpu.pipeline_mode<synchronous>, transform_indices = @transform_8, window_bounds = array<i64: 1, 128>}, {transform_indices = @transform_9, window_bounds = array<i64: 16, 128>}]} {
    %c0 = arith.constant 0 : index
    %c0_0 = arith.constant 0 : index
    %0 = vector.load %arg1[%c0, %c0_0] : memref<16x68xbf16, #tpu.memory_space<vmem>>, vector<16x68xbf16>
    %c0_1 = arith.constant 0 : index
    %c0_2 = arith.constant 0 : index
    %1 = vector.load %arg4[%c0_1, %c0_2] : memref<68x32xbf16, #tpu.memory_space<vmem>>, vector<68x32xbf16>
    %cst = arith.constant dense<0.000000e+00> : vector<16x32xf32>
    %2 = tpu.matmul %0, %1, %cst {dimension_numbers = #tpu.dot_dimension_numbers<[1], [0], [0], [1], [0, 0, 1, 1], [], []>} : vector<16x68xbf16>, vector<68x32xbf16>, vector<16x32xf32> -> vector<16x32xf32>
    %c0_3 = arith.constant 0 : index
    %c0_4 = arith.constant 0 : index
    %3 = vector.load %arg2[%c0_3, %c0_4] : memref<16x1xi32, #tpu.memory_space<vmem>>, vector<16x1xi32>
    %4 = tpu.iota {dimensions = array<i32: 1>} : vector<16x2xi32>
    %5 = vector.broadcast %3 : vector<16x1xi32> to vector<16x2xi32>
    %6 = arith.cmpi eq, %4, %5 : vector<16x2xi32>
    %7 = arith.extui %6 : vector<16x2xi1> to vector<16x2xi32>
    %8 = arith.sitofp %7 : vector<16x2xi32> to vector<16x2xf32>
    %9 = arith.truncf %8 : vector<16x2xf32> to vector<16x2xbf16>
    %c0_5 = arith.constant 0 : index
    %c0_6 = arith.constant 0 : index
    %10 = vector.load %arg3[%c0_5, %c0_6] : memref<2x32xbf16, #tpu.memory_space<vmem>>, vector<2x32xbf16>
    %cst_7 = arith.constant dense<0.000000e+00> : vector<16x32xf32>
    %11 = tpu.matmul %9, %10, %cst_7 {dimension_numbers = #tpu.dot_dimension_numbers<[1], [0], [0], [1], [0, 0, 1, 1], [], []>} : vector<16x2xbf16>, vector<2x32xbf16>, vector<16x32xf32> -> vector<16x32xf32>
    %12 = arith.addf %2, %11 : vector<16x32xf32>
    %c0_8 = arith.constant 0 : index
    %c0_9 = arith.constant 0 : index
    %13 = vector.load %arg5[%c0_8, %c0_9] : memref<1x32xf32, #tpu.memory_space<vmem>>, vector<1x32xf32>
    %14 = vector.broadcast %13 : vector<1x32xf32> to vector<16x32xf32>
    %15 = arith.addf %12, %14 : vector<16x32xf32>
    %cst_10 = arith.constant 0.000000e+00 : f32
    %16 = vector.broadcast %cst_10 : f32 to vector<16x32xf32>
    %17 = arith.maximumf %15, %16 : vector<16x32xf32>
    %18 = arith.truncf %17 : vector<16x32xf32> to vector<16x32xbf16>
    %c0_11 = arith.constant 0 : index
    %c0_12 = arith.constant 0 : index
    %19 = vector.load %arg6[%c0_11, %c0_12] : memref<32x32xbf16, #tpu.memory_space<vmem>>, vector<32x32xbf16>
    %cst_13 = arith.constant dense<0.000000e+00> : vector<16x32xf32>
    %20 = tpu.matmul %18, %19, %cst_13 {dimension_numbers = #tpu.dot_dimension_numbers<[1], [0], [0], [1], [0, 0, 1, 1], [], []>} : vector<16x32xbf16>, vector<32x32xbf16>, vector<16x32xf32> -> vector<16x32xf32>
    %c0_14 = arith.constant 0 : index
    %c0_15 = arith.constant 0 : index
    %21 = vector.load %arg7[%c0_14, %c0_15] : memref<1x32xf32, #tpu.memory_space<vmem>>, vector<1x32xf32>
    %22 = vector.broadcast %21 : vector<1x32xf32> to vector<16x32xf32>
    %23 = arith.addf %20, %22 : vector<16x32xf32>
    %cst_16 = arith.constant 0.000000e+00 : f32
    %24 = vector.broadcast %cst_16 : f32 to vector<16x32xf32>
    %25 = arith.maximumf %23, %24 : vector<16x32xf32>
    %26 = arith.truncf %25 : vector<16x32xf32> to vector<16x32xbf16>
    %c0_17 = arith.constant 0 : index
    %c0_18 = arith.constant 0 : index
    %27 = vector.load %arg8[%c0_17, %c0_18] : memref<32x128xbf16, #tpu.memory_space<vmem>>, vector<32x128xbf16>
    %cst_19 = arith.constant dense<0.000000e+00> : vector<16x128xf32>
    %28 = tpu.matmul %26, %27, %cst_19 {dimension_numbers = #tpu.dot_dimension_numbers<[1], [0], [0], [1], [0, 0, 1, 1], [], []>} : vector<16x32xbf16>, vector<32x128xbf16>, vector<16x128xf32> -> vector<16x128xf32>
    %c0_20 = arith.constant 0 : index
    %c0_21 = arith.constant 0 : index
    %29 = vector.load %arg9[%c0_20, %c0_21] : memref<1x128xf32, #tpu.memory_space<vmem>>, vector<1x128xf32>
    %30 = vector.broadcast %29 : vector<1x128xf32> to vector<16x128xf32>
    %31 = arith.addf %28, %30 : vector<16x128xf32>
    %32 = arith.truncf %31 : vector<16x128xf32> to vector<16x128xbf16>
    %c0_22 = arith.constant 0 : index
    %c0_23 = arith.constant 0 : index
    %33 = vector.load %arg10[%c0_22, %c0_23] : memref<16x128xbf16, #tpu.memory_space<vmem>>, vector<16x128xbf16>
    tpu.vector_store %arg10[%c0_22, %c0_23], %32 {strides = array<i32>} : memref<16x128xbf16, #tpu.memory_space<vmem>>, vector<16x128xbf16>,
    return
  }
  func.func @transform_0(%arg0: i32) -> (i32, i32) {
    %c0_i32 = arith.constant 0 : i32
    %c0_i32_0 = arith.constant 0 : i32
    return %arg0, %c0_i32 : i32, i32
  }
  func.func @transform_1(%arg0: i32) -> (i32, i32) {
    %c0_i32 = arith.constant 0 : i32
    %c0_i32_0 = arith.constant 0 : i32
    return %arg0, %c0_i32 : i32, i32
  }
  func.func @transform_2(%arg0: i32) -> (i32, i32) {
    %c0_i32 = arith.constant 0 : i32
    %c0_i32_0 = arith.constant 0 : i32
    %c0_i32_1 = arith.constant 0 : i32
    return %c0_i32, %c0_i32_0 : i32, i32
  }
  func.func @transform_3(%arg0: i32) -> (i32, i32) {
    %c0_i32 = arith.constant 0 : i32
    %c0_i32_0 = arith.constant 0 : i32
    %c0_i32_1 = arith.constant 0 : i32
    return %c0_i32, %c0_i32_0 : i32, i32
  }
  func.func @transform_4(%arg0: i32) -> (i32, i32) {
    %c0_i32 = arith.constant 0 : i32
    %c0_i32_0 = arith.constant 0 : i32
    %c0_i32_1 = arith.constant 0 : i32
    return %c0_i32, %c0_i32_0 : i32, i32
  }
  func.func @transform_5(%arg0: i32) -> (i32, i32) {
    %c0_i32 = arith.constant 0 : i32
    %c0_i32_0 = arith.constant 0 : i32
    %c0_i32_1 = arith.constant 0 : i32
    return %c0_i32, %c0_i32_0 : i32, i32
  }
  func.func @transform_6(%arg0: i32) -> (i32, i32) {
    %c0_i32 = arith.constant 0 : i32
    %c0_i32_0 = arith.constant 0 : i32
    %c0_i32_1 = arith.constant 0 : i32
    return %c0_i32, %c0_i32_0 : i32, i32
  }
  func.func @transform_7(%arg0: i32) -> (i32, i32) {
    %c0_i32 = arith.constant 0 : i32
    %c0_i32_0 = arith.constant 0 : i32
    %c0_i32_1 = arith.constant 0 : i32
    return %c0_i32, %c0_i32_0 : i32, i32
  }
  func.func @transform_8(%arg0: i32) -> (i32, i32) {
    %c0_i32 = arith.constant 0 : i32
    %c0_i32_0 = arith.constant 0 : i32
    %c0_i32_1 = arith.constant 0 : i32
    return %c0_i32, %c0_i32_0 : i32, i32
  }
  func.func @transform_9(%arg0: i32) -> (i32, i32) {
    %c0_i32 = arith.constant 0 : i32
    %c0_i32_0 = arith.constant 0 : i32
    return %arg0, %c0_i32 : i32, i32
  }
}

module attributes {stable_mosaic.version = 11 : i64} {
  func.func @_fused_mlp_kernel(%arg0: i32, %arg1: memref<16x96xbf16, #tpu.memory_space<vmem>>, %arg2: memref<96x32xbf16, #tpu.memory_space<vmem>>, %arg3: memref<1x32xf32, #tpu.memory_space<vmem>>, %arg4: memref<32x32xbf16, #tpu.memory_space<vmem>>, %arg5: memref<1x32xf32, #tpu.memory_space<vmem>>, %arg6: memref<32x128xbf16, #tpu.memory_space<vmem>>, %arg7: memref<1x128xf32, #tpu.memory_space<vmem>>, %arg8: memref<16x128xbf16, #tpu.memory_space<vmem>>) attributes {dimension_semantics = [#tpu.dimension_semantics<parallel>], iteration_bounds = array<i64: 1>, scalar_prefetch = 0 : i64, scratch_operands = 0 : i64, tpu.core_type = #tpu.core_type<tc>, window_params = [{transform_indices = @transform_0, window_bounds = array<i64: 16, 96>}, {pipeline_mode = #tpu.pipeline_mode<synchronous>, transform_indices = @transform_1, window_bounds = array<i64: 96, 32>}, {pipeline_mode = #tpu.pipeline_mode<synchronous>, transform_indices = @transform_2, window_bounds = array<i64: 1, 32>}, {pipeline_mode = #tpu.pipeline_mode<synchronous>, transform_indices = @transform_3, window_bounds = array<i64: 32, 32>}, {pipeline_mode = #tpu.pipeline_mode<synchronous>, transform_indices = @transform_4, window_bounds = array<i64: 1, 32>}, {pipeline_mode = #tpu.pipeline_mode<synchronous>, transform_indices = @transform_5, window_bounds = array<i64: 32, 128>}, {pipeline_mode = #tpu.pipeline_mode<synchronous>, transform_indices = @transform_6, window_bounds = array<i64: 1, 128>}, {transform_indices = @transform_7, window_bounds = array<i64: 16, 128>}]} {
    %c0 = arith.constant 0 : index
    %c0_0 = arith.constant 0 : index
    %0 = vector.load %arg1[%c0, %c0_0] : memref<16x96xbf16, #tpu.memory_space<vmem>>, vector<16x96xbf16>
    %c0_1 = arith.constant 0 : index
    %c0_2 = arith.constant 0 : index
    %1 = vector.load %arg2[%c0_1, %c0_2] : memref<96x32xbf16, #tpu.memory_space<vmem>>, vector<96x32xbf16>
    %cst = arith.constant dense<0.000000e+00> : vector<16x32xf32>
    %2 = tpu.matmul %0, %1, %cst {dimension_numbers = #tpu.dot_dimension_numbers<[1], [0], [0], [1], [0, 0, 1, 1], [], []>} : vector<16x96xbf16>, vector<96x32xbf16>, vector<16x32xf32> -> vector<16x32xf32>
    %c0_3 = arith.constant 0 : index
    %c0_4 = arith.constant 0 : index
    %3 = vector.load %arg3[%c0_3, %c0_4] : memref<1x32xf32, #tpu.memory_space<vmem>>, vector<1x32xf32>
    %4 = vector.broadcast %3 : vector<1x32xf32> to vector<16x32xf32>
    %5 = arith.addf %2, %4 : vector<16x32xf32>
    %cst_5 = arith.constant 0.000000e+00 : f32
    %6 = vector.broadcast %cst_5 : f32 to vector<16x32xf32>
    %7 = arith.maximumf %5, %6 : vector<16x32xf32>
    %8 = arith.truncf %7 : vector<16x32xf32> to vector<16x32xbf16>
    %c0_6 = arith.constant 0 : index
    %c0_7 = arith.constant 0 : index
    %9 = vector.load %arg4[%c0_6, %c0_7] : memref<32x32xbf16, #tpu.memory_space<vmem>>, vector<32x32xbf16>
    %cst_8 = arith.constant dense<0.000000e+00> : vector<16x32xf32>
    %10 = tpu.matmul %8, %9, %cst_8 {dimension_numbers = #tpu.dot_dimension_numbers<[1], [0], [0], [1], [0, 0, 1, 1], [], []>} : vector<16x32xbf16>, vector<32x32xbf16>, vector<16x32xf32> -> vector<16x32xf32>
    %c0_9 = arith.constant 0 : index
    %c0_10 = arith.constant 0 : index
    %11 = vector.load %arg5[%c0_9, %c0_10] : memref<1x32xf32, #tpu.memory_space<vmem>>, vector<1x32xf32>
    %12 = vector.broadcast %11 : vector<1x32xf32> to vector<16x32xf32>
    %13 = arith.addf %10, %12 : vector<16x32xf32>
    %cst_11 = arith.constant 0.000000e+00 : f32
    %14 = vector.broadcast %cst_11 : f32 to vector<16x32xf32>
    %15 = arith.maximumf %13, %14 : vector<16x32xf32>
    %16 = arith.truncf %15 : vector<16x32xf32> to vector<16x32xbf16>
    %c0_12 = arith.constant 0 : index
    %c0_13 = arith.constant 0 : index
    %17 = vector.load %arg6[%c0_12, %c0_13] : memref<32x128xbf16, #tpu.memory_space<vmem>>, vector<32x128xbf16>
    %cst_14 = arith.constant dense<0.000000e+00> : vector<16x128xf32>
    %18 = tpu.matmul %16, %17, %cst_14 {dimension_numbers = #tpu.dot_dimension_numbers<[1], [0], [0], [1], [0, 0, 1, 1], [], []>} : vector<16x32xbf16>, vector<32x128xbf16>, vector<16x128xf32> -> vector<16x128xf32>
    %c0_15 = arith.constant 0 : index
    %c0_16 = arith.constant 0 : index
    %19 = vector.load %arg7[%c0_15, %c0_16] : memref<1x128xf32, #tpu.memory_space<vmem>>, vector<1x128xf32>
    %20 = vector.broadcast %19 : vector<1x128xf32> to vector<16x128xf32>
    %21 = arith.addf %18, %20 : vector<16x128xf32>
    %22 = arith.truncf %21 : vector<16x128xf32> to vector<16x128xbf16>
    %c0_17 = arith.constant 0 : index
    %c0_18 = arith.constant 0 : index
    %23 = vector.load %arg8[%c0_17, %c0_18] : memref<16x128xbf16, #tpu.memory_space<vmem>>, vector<16x128xbf16>
    tpu.vector_store %arg8[%c0_17, %c0_18], %22 {strides = array<i32>} : memref<16x128xbf16, #tpu.memory_space<vmem>>, vector<16x128xbf16>,
    return
  }
  func.func @transform_0(%arg0: i32) -> (i32, i32) {
    %c0_i32 = arith.constant 0 : i32
    %c0_i32_0 = arith.constant 0 : i32
    return %arg0, %c0_i32 : i32, i32
  }
  func.func @transform_1(%arg0: i32) -> (i32, i32) {
    %c0_i32 = arith.constant 0 : i32
    %c0_i32_0 = arith.constant 0 : i32
    %c0_i32_1 = arith.constant 0 : i32
    return %c0_i32, %c0_i32_0 : i32, i32
  }
  func.func @transform_2(%arg0: i32) -> (i32, i32) {
    %c0_i32 = arith.constant 0 : i32
    %c0_i32_0 = arith.constant 0 : i32
    %c0_i32_1 = arith.constant 0 : i32
    return %c0_i32, %c0_i32_0 : i32, i32
  }
  func.func @transform_3(%arg0: i32) -> (i32, i32) {
    %c0_i32 = arith.constant 0 : i32
    %c0_i32_0 = arith.constant 0 : i32
    %c0_i32_1 = arith.constant 0 : i32
    return %c0_i32, %c0_i32_0 : i32, i32
  }
  func.func @transform_4(%arg0: i32) -> (i32, i32) {
    %c0_i32 = arith.constant 0 : i32
    %c0_i32_0 = arith.constant 0 : i32
    %c0_i32_1 = arith.constant 0 : i32
    return %c0_i32, %c0_i32_0 : i32, i32
  }
  func.func @transform_5(%arg0: i32) -> (i32, i32) {
    %c0_i32 = arith.constant 0 : i32
    %c0_i32_0 = arith.constant 0 : i32
    %c0_i32_1 = arith.constant 0 : i32
    return %c0_i32, %c0_i32_0 : i32, i32
  }
  func.func @transform_6(%arg0: i32) -> (i32, i32) {
    %c0_i32 = arith.constant 0 : i32
    %c0_i32_0 = arith.constant 0 : i32
    %c0_i32_1 = arith.constant 0 : i32
    return %c0_i32, %c0_i32_0 : i32, i32
  }
  func.func @transform_7(%arg0: i32) -> (i32, i32) {
    %c0_i32 = arith.constant 0 : i32
    %c0_i32_0 = arith.constant 0 : i32
    return %arg0, %c0_i32 : i32, i32
  }
}

</mosaic_0001>

<llo_original>
// kernel: gnresidule_apply.46
$region0: #{gnresidule_apply.46}
  #allocation0 [shape = 'u32[]', space=smem, size = 0x4, offset = 0x4, fixed_abs, tag = 'smem constant byte address 0x4 - core index']
  #allocation1 [shape = 'u32[144,128]{1,0:T(1,128)}', space=vmem, size = 0x12000, scoped, tag = 'internal scratch']
  #allocation2 [shape = 'f32[16,32]{1,0:T(8,128)}', space=vmem, size = 0x2000, scoped, tag = 'scratch operand']
  %s0 = inlined_call_operand.vmem [shape: s32[1,128], index: 0, kind: input, shape index: {}]
  %s1 = inlined_call_operand.vmem [shape: bf16[128,32], index: 1, kind: input, shape index: {}]
  %s2 = inlined_call_operand.vmem [shape: bf16[16,32], index: 2, kind: output, shape index: {}]
  %s3 = sld [smem:[#allocation0]]
  $region26: #{gnresidule_apply.46} parent=0
    _
  %s5 = ssub.s32 1, %s3
  %s6 = scalar_select 0, %s5, %s3
  // Predicated region
  $region2: #{gnresidule_apply.46} parent=0 // pred_check
    _
  $region3: #{gnresidule_apply.46} parent=0 // pred_check_branch
    %8 = sbr.rel (0) target = $region5
  $region4: #{gnresidule_apply.46} parent=0 // pred_region
    _
  $region5: #{gnresidule_apply.46} parent=0 // pred_fallthru
    _
  // Predicated region
  $region6: #{gnresidule_apply.46} parent=0 // pred_check
    _
  $region7: #{gnresidule_apply.46} parent=0 // pred_check_branch
    %10 = sbr.rel (0) target = $region9
  $region8: #{gnresidule_apply.46} parent=0 // pred_region
    _
  $region9: #{gnresidule_apply.46} parent=0 // pred_fallthru
    _
  %p12 = scmp.eq.s32.totalorder 0, 0
  // Predicated region
  $region10: #{gnresidule_apply.46} parent=0 // pred_check
    %p13 = pneg %p12
  $region11: #{gnresidule_apply.46} parent=0 // pred_check_branch
    %15 = sbr.rel (%p13) target = $region13
  $region12: #{gnresidule_apply.46} parent=0 // pred_region
    %vm16 = vcmask 261120
    %17 = vst.msk [vmem:[#allocation2] sm:$0xff] %vm16, 0.0
    %18 = vst.msk [vmem:[#allocation2 + $0x8] sm:$0xff] %vm16, 0.0
  $region13: #{gnresidule_apply.46} parent=0 // pred_fallthru
    _
  %v19 = vld [vmem:[%s0] sm:$0x1]
  %v20 = vlaneseq
  %v21 = vshrl.u32 %v20, 7
  %v22 = vadd.s32 %v21, 8
  %s23 = smul.u32 0, 16
  %v24 = vstv %s23
  %v25 = vadd.s32 %v21, %v24
  %v26 = vadd.s32 %v22, %v24
  %v27 = vlaneseq
  %v28 = vshrl.u32 %v27, 7
  %v29 = vsub.s32 0, %v28
  %v30 = vrot.slane %v19, %v29
  %vm31 = vcmp.eq.s32.totalorder %v25, %v30
  %vm32 = vcmp.eq.s32.totalorder %v26, %v30
  %v33 = vsel %vm31, 1, 0
  %v34 = vsel %vm32, 1, 0
  %v35 = vcvt.s32.f32 %v33
  %v36 = vcvt.s32.f32 %v34
  %v37 = vpack.c.bf16 %v36, %v35
  %v38 = vld [vmem:[#allocation2] sm:$0xff]
  %v39 = vld [vmem:[#allocation2 + $0x8] sm:$0xff]
  %v40 = vld [vmem:[%s1] sm:$0xf]
  %v41 = vld [vmem:[%s1 + $0x4] sm:$0xf]
  %v42 = vld [vmem:[%s1 + $0x8] sm:$0xf]
  %v43 = vld [vmem:[%s1 + $0xc] sm:$0xf]
  %v44 = vld [vmem:[%s1 + $0x10] sm:$0xf]
  %v45 = vld [vmem:[%s1 + $0x14] sm:$0xf]
  %v46 = vld [vmem:[%s1 + $0x18] sm:$0xf]
  %v47 = vld [vmem:[%s1 + $0x1c] sm:$0xf]
  %v48 = vld [vmem:[%s1 + $0x20] sm:$0xf]
  %v49 = vld [vmem:[%s1 + $0x24] sm:$0xf]
  %v50 = vld [vmem:[%s1 + $0x28] sm:$0xf]
  %v51 = vld [vmem:[%s1 + $0x2c] sm:$0xf]
  %v52 = vld [vmem:[%s1 + $0x30] sm:$0xf]
  %v53 = vld [vmem:[%s1 + $0x34] sm:$0xf]
  %v54 = vld [vmem:[%s1 + $0x38] sm:$0xf]
  %v55 = vld [vmem:[%s1 + $0x3c] sm:$0xf]
  %v72 = vunpack.c.l.b16 %v40
  %v73 = vunpack.c.l.b16 %v41
  %v74 = vunpack.c.l.b16 %v42
  %v75 = vunpack.c.l.b16 %v43
  %v76 = vunpack.c.l.b16 %v44
  %v77 = vunpack.c.l.b16 %v45
  %v78 = vunpack.c.l.b16 %v46
  %v79 = vunpack.c.l.b16 %v47
  %v80 = vunpack.c.l.b16 %v48
  %v81 = vunpack.c.l.b16 %v49
  %v82 = vunpack.c.l.b16 %v50
  %v83 = vunpack.c.l.b16 %v51
  %v84 = vunpack.c.l.b16 %v52
  %v85 = vunpack.c.l.b16 %v53
  %v86 = vunpack.c.l.b16 %v54
  %v87 = vunpack.c.l.b16 %v55
  %v88 = vpack.c.b16 %v73, %v72
  %v89 = vpack.c.b16 %v75, %v74
  %v90 = vpack.c.b16 %v77, %v76
  %v91 = vpack.c.b16 %v79, %v78
  %v92 = vpack.c.b16 %v81, %v80
  %v93 = vpack.c.b16 %v83, %v82
  %v94 = vpack.c.b16 %v85, %v84
  %v95 = vpack.c.b16 %v87, %v86
  %104 = vmatprep.subr.bf16.mxu0 0
  %105 = vmatpush1.bf16.msra.mxu0 %v88
  %106 = vmatprep.subr.bf16.mxu0 0
  %107 = vmatpush1.bf16.msra.mxu0 %v89
  %108 = vmatprep.subr.bf16.mxu0 0
  %109 = vmatpush1.bf16.msra.mxu0 %v90
  %110 = vmatprep.subr.bf16.mxu0 0
  %111 = vmatpush1.bf16.msra.mxu0 %v91
  %112 = vmatprep.subr.bf16.mxu0 0
  %113 = vmatpush1.bf16.msra.mxu0 %v92
  %114 = vmatprep.subr.bf16.mxu0 0
  %115 = vmatpush1.bf16.msra.mxu0 %v93
  %116 = vmatprep.subr.bf16.mxu0 0
  %117 = vmatpush1.bf16.msra.mxu0 %v94
  %118 = vmatprep.subr.bf16.mxu0 0
  %119 = vmatpush1.bf16.msra.mxu0 %v95
  %120 = vmatprep.subr.bf16.mxu0 0
  %121 = vmatpush1.bf16.msra.mxu0 0
  %122 = vmatprep.subr.bf16.mxu0 0
  %123 = vmatpush1.bf16.msra.mxu0 0
  %124 = vmatprep.subr.bf16.mxu0 0
  %125 = vmatpush1.bf16.msra.mxu0 0
  %126 = vmatprep.subr.bf16.mxu0 0
  %127 = vmatpush1.bf16.msra.mxu0 0
  %128 = vmatprep.subr.bf16.mxu0 0
  %129 = vmatpush1.bf16.msra.mxu0 0
  %130 = vmatprep.subr.bf16.mxu0 0
  %131 = vmatpush1.bf16.msra.mxu0 0
  %132 = vmatprep.subr.bf16.mxu0 0
  %133 = vmatpush1.bf16.msra.mxu0 0
  %134 = vmatprep.subr.bf16.mxu0 0
  %135 = vmatpush1.bf16.msra.mxu0 0
  %136 = vmatprep.mubr.bf16.mxu0 0
  %137 = vmatmul.mubr.bf16.gmra.mrb[0].mxu0 %v37
  %v138 = vpop.f32.mrb[0].mxu0
  %v139 = vadd.f32 0.0, %v138
  %v140 = vpop.f32.mrb[0].mxu0
  %v141 = vpop.f32.mrb[0].mxu0
  %v142 = vadd.f32 0.0, %v141
  %v143 = vpop.f32.mrb[0].mxu0
  %144 = vdwg.mxu0
  %v145 = vadd.f32 %v38, %v139
  %v146 = vadd.f32 %v39, %v142
  %vm147 = vcmask 261120
  %148 = vst.msk [vmem:[#allocation2] sm:$0xff] %vm147, %v145
  %149 = vst.msk [vmem:[#allocation2 + $0x8] sm:$0xff] %vm147, %v146
  // Predicated region
  $region14: #{gnresidule_apply.46} parent=0 // pred_check
    %p150 = pneg %p12
  $region15: #{gnresidule_apply.46} parent=0 // pred_check_branch
    %152 = sbr.rel (%p150) target = $region17
  $region16: #{gnresidule_apply.46} parent=0 // pred_region
    %v153 = vld [vmem:[#allocation2] sm:$0xff]
    %v154 = vld [vmem:[#allocation2 + $0x8] sm:$0xff]
    %v155 = vpack.c.bf16 %v154, %v153
    %v157 = vunpack.c.l.b16 %v155
    %v158 = vunpack.c.h.b16 %v155
    %v159 = vpack.c.b16 %v157, %v157
    %v160 = vpack.c.b16 %v158, %v158
    %vm163 = vcmask 257024
    %164 = vst.msk [vmem:[%s2] sm:$0xf] %vm163, %v159
    %165 = vst.msk [vmem:[%s2 + $0x4] sm:$0xf] %vm163, %v160
  $region17: #{gnresidule_apply.46} parent=0 // pred_fallthru
    _
  // Predicated region
  $region18: #{gnresidule_apply.46} parent=0 // pred_check
    _
  $region19: #{gnresidule_apply.46} parent=0 // pred_check_branch
    %167 = sbr.rel (0) target = $region21
  $region20: #{gnresidule_apply.46} parent=0 // pred_region
    _
  $region21: #{gnresidule_apply.46} parent=0 // pred_fallthru
    _
  // Predicated region
  $region22: #{gnresidule_apply.46} parent=0 // pred_check
    _
  $region23: #{gnresidule_apply.46} parent=0 // pred_check_branch
    %169 = sbr.rel (0) target = $region25
  $region24: #{gnresidule_apply.46} parent=0 // pred_region
    _
  $region25: #{gnresidule_apply.46} parent=0 // pred_fallthru
    _

// kernel: gnresidule_apply.47
$region0: #{gnresidule_apply.47}
  #allocation0 [shape = 'u32[]', space=smem, size = 0x4, offset = 0x4, fixed_abs, tag = 'smem constant byte address 0x4 - core index']
  #allocation1 [shape = 'u32[144,128]{1,0:T(1,128)}', space=vmem, size = 0x12000, scoped, tag = 'internal scratch']
  %s0 = inlined_call_operand.vmem [shape: bf16[16,36], index: 0, kind: input, shape index: {}]
  %s1 = inlined_call_operand.vmem [shape: bf16[36,32], index: 1, kind: input, shape index: {}]
  %s2 = inlined_call_operand.vmem [shape: f32[1,32], index: 2, kind: input, shape index: {}]
  %s3 = inlined_call_operand.vmem [shape: bf16[32,32], index: 3, kind: input, shape index: {}]
  %s4 = inlined_call_operand.vmem [shape: f32[1,32], index: 4, kind: input, shape index: {}]
  %s5 = inlined_call_operand.vmem [shape: bf16[32,128], index: 5, kind: input, shape index: {}]
  %s6 = inlined_call_operand.vmem [shape: f32[1,128], index: 6, kind: input, shape index: {}]
  %s7 = inlined_call_operand.vmem [shape: bf16[16,128], index: 7, kind: output, shape index: {}]
  %s8 = sld [smem:[#allocation0]]
  $region38: #{gnresidule_apply.47} parent=0
    _
  %s10 = ssub.s32 1, %s8
  %s11 = scalar_select 0, %s10, %s8
  // Predicated region
  $region2: #{gnresidule_apply.47} parent=0 // pred_check
    _
  $region3: #{gnresidule_apply.47} parent=0 // pred_check_branch
    %13 = sbr.rel (0) target = $region5
  $region4: #{gnresidule_apply.47} parent=0 // pred_region
    _
  $region5: #{gnresidule_apply.47} parent=0 // pred_fallthru
    _
  // Predicated region
  $region6: #{gnresidule_apply.47} parent=0 // pred_check
    _
  $region7: #{gnresidule_apply.47} parent=0 // pred_check_branch
    %15 = sbr.rel (0) target = $region9
  $region8: #{gnresidule_apply.47} parent=0 // pred_region
    _
  $region9: #{gnresidule_apply.47} parent=0 // pred_fallthru
    _
  // Predicated region
  $region10: #{gnresidule_apply.47} parent=0 // pred_check
    _
  $region11: #{gnresidule_apply.47} parent=0 // pred_check_branch
    %17 = sbr.rel (0) target = $region13
  $region12: #{gnresidule_apply.47} parent=0 // pred_region
    _
  $region13: #{gnresidule_apply.47} parent=0 // pred_fallthru
    _
  // Predicated region
  $region14: #{gnresidule_apply.47} parent=0 // pred_check
    _
  $region15: #{gnresidule_apply.47} parent=0 // pred_check_branch
    %19 = sbr.rel (0) target = $region17
  $region16: #{gnresidule_apply.47} parent=0 // pred_region
    _
  $region17: #{gnresidule_apply.47} parent=0 // pred_fallthru
    _
  // Predicated region
  $region18: #{gnresidule_apply.47} parent=0 // pred_check
    _
  $region19: #{gnresidule_apply.47} parent=0 // pred_check_branch
    %21 = sbr.rel (0) target = $region21
  $region20: #{gnresidule_apply.47} parent=0 // pred_region
    _
  $region21: #{gnresidule_apply.47} parent=0 // pred_fallthru
    _
  // Predicated region
  $region22: #{gnresidule_apply.47} parent=0 // pred_check
    _
  $region23: #{gnresidule_apply.47} parent=0 // pred_check_branch
    %23 = sbr.rel (0) target = $region25
  $region24: #{gnresidule_apply.47} parent=0 // pred_region
    _
  $region25: #{gnresidule_apply.47} parent=0 // pred_fallthru
    _
  // Predicated region
  $region26: #{gnresidule_apply.47} parent=0 // pred_check
    _
  $region27: #{gnresidule_apply.47} parent=0 // pred_check_branch
    %25 = sbr.rel (0) target = $region29
  $region28: #{gnresidule_apply.47} parent=0 // pred_region
    _
  $region29: #{gnresidule_apply.47} parent=0 // pred_fallthru
    _
  %v27 = vld [vmem:[%s0] sm:$0xf]
  %v28 = vld [vmem:[%s0 + $0x4] sm:$0xf]
  %v29 = vld [vmem:[%s1] sm:$0xf]
  %v30 = vld [vmem:[%s1 + $0x4] sm:$0xf]
  %v31 = vld [vmem:[%s1 + $0x8] sm:$0xf]
  %v32 = vld [vmem:[%s1 + $0xc] sm:$0xf]
  %v33 = vld [vmem:[%s1 + $0x10] sm:$0x3]
  %v34 = vld [vmem:[%s2] sm:$0x1]
  %v36 = vlaneseq
  %v37 = vshrl.u32 %v36, 7
  %v38 = vsub.s32 0, %v37
  %v39 = vrot.slane %v34, %v38
  %v43 = vunpack.c.l.b16 %v27
  %v44 = vunpack.c.l.b16 %v28
  %v45 = vpack.c.b16 %v44, %v43
  %v51 = vunpack.c.l.b16 %v29
  %v52 = vunpack.c.l.b16 %v30
  %v53 = vunpack.c.l.b16 %v31
  %v54 = vunpack.c.l.b16 %v32
  %v55 = vunpack.c.l.b16 %v33
  %v56 = vpack.c.b16 %v52, %v51
  %v57 = vpack.c.b16 %v54, %v53
  %v58 = vpack.c.b16 %v55, %v55
  %vm61 = vcmask 293888
  %v63 = vsel %vm61, %v45, 0
  %vm65 = vcmask 1041408
  %v67 = vsel %vm65, %v58, 0
  %69 = vmatprep.subr.bf16.mxu0 0
  %70 = vmatpush1.bf16.msra.mxu0 %v56
  %71 = vmatprep.subr.bf16.mxu0 0
  %72 = vmatpush1.bf16.msra.mxu0 %v57
  %73 = vmatprep.subr.bf16.mxu0 0
  %74 = vmatpush1.bf16.msra.mxu0 %v67
  %75 = vmatprep.subr.bf16.mxu0 0
  %76 = vmatpush1.bf16.msra.mxu0 0
  %77 = vmatprep.subr.bf16.mxu0 0
  %78 = vmatpush1.bf16.msra.mxu0 0
  %79 = vmatprep.subr.bf16.mxu0 0
  %80 = vmatpush1.bf16.msra.mxu0 0
  %81 = vmatprep.subr.bf16.mxu0 0
  %82 = vmatpush1.bf16.msra.mxu0 0
  %83 = vmatprep.subr.bf16.mxu0 0
  %84 = vmatpush1.bf16.msra.mxu0 0
  %85 = vmatprep.subr.bf16.mxu0 0
  %86 = vmatpush1.bf16.msra.mxu0 0
  %87 = vmatprep.subr.bf16.mxu0 0
  %88 = vmatpush1.bf16.msra.mxu0 0
  %89 = vmatprep.subr.bf16.mxu0 0
  %90 = vmatpush1.bf16.msra.mxu0 0
  %91 = vmatprep.subr.bf16.mxu0 0
  %92 = vmatpush1.bf16.msra.mxu0 0
  %93 = vmatprep.subr.bf16.mxu0 0
  %94 = vmatpush1.bf16.msra.mxu0 0
  %95 = vmatprep.subr.bf16.mxu0 0
  %96 = vmatpush1.bf16.msra.mxu0 0
  %97 = vmatprep.subr.bf16.mxu0 0
  %98 = vmatpush1.bf16.msra.mxu0 0
  %99 = vmatprep.subr.bf16.mxu0 0
  %100 = vmatpush1.bf16.msra.mxu0 0
  %101 = vmatprep.mubr.bf16.mxu0 0
  %102 = vmatmul.mubr.bf16.gmra.mrb[0].mxu0 %v63
  %v103 = vpop.f32.mrb[0].mxu0
  %v104 = vadd.f32 %v39, %v103
  %v105 = vpop.f32.mrb[0].mxu0
  %v106 = vpop.f32.mrb[0].mxu0
  %v107 = vadd.f32 %v39, %v106
  %v108 = vpop.f32.mrb[0].mxu0
  %109 = vdwg.mxu0
  %v110 = vmax.f32 %v104, 0.0
  %v111 = vmax.f32 %v107, 0.0
  %v112 = vpack.c.bf16 %v111, %v110
  %v113 = vld [vmem:[%s3] sm:$0xf]
  %v114 = vld [vmem:[%s3 + $0x4] sm:$0xf]
  %v115 = vld [vmem:[%s3 + $0x8] sm:$0xf]
  %v116 = vld [vmem:[%s3 + $0xc] sm:$0xf]
  %v117 = vld [vmem:[%s4] sm:$0x1]
  %v119 = vlaneseq
  %v120 = vshrl.u32 %v119, 7
  %v121 = vsub.s32 0, %v120
  %v122 = vrot.slane %v117, %v121
  %v128 = vunpack.c.l.b16 %v113
  %v129 = vunpack.c.l.b16 %v114
  %v130 = vunpack.c.l.b16 %v115
  %v131 = vunpack.c.l.b16 %v116
  %v132 = vpack.c.b16 %v129, %v128
  %v133 = vpack.c.b16 %v131, %v130
  %vm136 = vcmask 261120
  %v138 = vsel %vm136, %v112, 0
  %140 = vmatprep.subr.bf16.mxu0 0
  %141 = vmatpush1.bf16.msra.mxu0 %v132
  %142 = vmatprep.subr.bf16.mxu0 0
  %143 = vmatpush1.bf16.msra.mxu0 %v133
  %144 = vmatprep.subr.bf16.mxu0 0
  %145 = vmatpush1.bf16.msra.mxu0 0
  %146 = vmatprep.subr.bf16.mxu0 0
  %147 = vmatpush1.bf16.msra.mxu0 0
  %148 = vmatprep.subr.bf16.mxu0 0
  %149 = vmatpush1.bf16.msra.mxu0 0
  %150 = vmatprep.subr.bf16.mxu0 0
  %151 = vmatpush1.bf16.msra.mxu0 0
  %152 = vmatprep.subr.bf16.mxu0 0
  %153 = vmatpush1.bf16.msra.mxu0 0
  %154 = vmatprep.subr.bf16.mxu0 0
  %155 = vmatpush1.bf16.msra.mxu0 0
  %156 = vmatprep.subr.bf16.mxu0 0
  %157 = vmatpush1.bf16.msra.mxu0 0
  %158 = vmatprep.subr.bf16.mxu0 0
  %159 = vmatpush1.bf16.msra.mxu0 0
  %160 = vmatprep.subr.bf16.mxu0 0
  %161 = vmatpush1.bf16.msra.mxu0 0
  %162 = vmatprep.subr.bf16.mxu0 0
  %163 = vmatpush1.bf16.msra.mxu0 0
  %164 = vmatprep.subr.bf16.mxu0 0
  %165 = vmatpush1.bf16.msra.mxu0 0
  %166 = vmatprep.subr.bf16.mxu0 0
  %167 = vmatpush1.bf16.msra.mxu0 0
  %168 = vmatprep.subr.bf16.mxu0 0
  %169 = vmatpush1.bf16.msra.mxu0 0
  %170 = vmatprep.subr.bf16.mxu0 0
  %171 = vmatpush1.bf16.msra.mxu0 0
  %172 = vmatprep.mubr.bf16.mxu0 0
  %173 = vmatmul.mubr.bf16.gmra.mrb[0].mxu0 %v138
  %v174 = vpop.f32.mrb[0].mxu0
  %v175 = vadd.f32 %v122, %v174
  %v176 = vpop.f32.mrb[0].mxu0
  %v177 = vpop.f32.mrb[0].mxu0
  %v178 = vadd.f32 %v122, %v177
  %v179 = vpop.f32.mrb[0].mxu0
  %180 = vdwg.mxu0
  %v181 = vmax.f32 %v175, 0.0
  %v182 = vmax.f32 %v178, 0.0
  %v183 = vpack.c.bf16 %v182, %v181
  %v184 = vld [vmem:[%s5] sm:$0xf]
  %v185 = vld [vmem:[%s5 + $0x4] sm:$0xf]
  %v186 = vld [vmem:[%s5 + $0x8] sm:$0xf]
  %v187 = vld [vmem:[%s5 + $0xc] sm:$0xf]
  %v188 = vld [vmem:[%s6] sm:$0x1]
  %v190 = vlaneseq
  %v191 = vshrl.u32 %v190, 7
  %v192 = vsub.s32 0, %v191
  %v193 = vrot.slane %v188, %v192
  %v199 = vunpack.c.l.b16 %v184
  %v200 = vunpack.c.l.b16 %v185
  %v201 = vunpack.c.l.b16 %v186
  %v202 = vunpack.c.l.b16 %v187
  %v203 = vpack.c.b16 %v200, %v199
  %v204 = vpack.c.b16 %v202, %v201
  %v208 = vsel %vm136, %v183, 0
  %210 = vmatprep.subr.bf16.mxu0 0
  %211 = vmatpush1.bf16.msra.mxu0 %v203
  %212 = vmatprep.subr.bf16.mxu0 0
  %213 = vmatpush1.bf16.msra.mxu0 %v204
  %214 = vmatprep.subr.bf16.mxu0 0
  %215 = vmatpush1.bf16.msra.mxu0 0
  %216 = vmatprep.subr.bf16.mxu0 0
  %217 = vmatpush1.bf16.msra.mxu0 0
  %218 = vmatprep.subr.bf16.mxu0 0
  %219 = vmatpush1.bf16.msra.mxu0 0
  %220 = vmatprep.subr.bf16.mxu0 0
  %221 = vmatpush1.bf16.msra.mxu0 0
  %222 = vmatprep.subr.bf16.mxu0 0
  %223 = vmatpush1.bf16.msra.mxu0 0
  %224 = vmatprep.subr.bf16.mxu0 0
  %225 = vmatpush1.bf16.msra.mxu0 0
  %226 = vmatprep.subr.bf16.mxu0 0
  %227 = vmatpush1.bf16.msra.mxu0 0
  %228 = vmatprep.subr.bf16.mxu0 0
  %229 = vmatpush1.bf16.msra.mxu0 0
  %230 = vmatprep.subr.bf16.mxu0 0
  %231 = vmatpush1.bf16.msra.mxu0 0
  %232 = vmatprep.subr.bf16.mxu0 0
  %233 = vmatpush1.bf16.msra.mxu0 0
  %234 = vmatprep.subr.bf16.mxu0 0
  %235 = vmatpush1.bf16.msra.mxu0 0
  %236 = vmatprep.subr.bf16.mxu0 0
  %237 = vmatpush1.bf16.msra.mxu0 0
  %238 = vmatprep.subr.bf16.mxu0 0
  %239 = vmatpush1.bf16.msra.mxu0 0
  %240 = vmatprep.subr.bf16.mxu0 0
  %241 = vmatpush1.bf16.msra.mxu0 0
  %242 = vmatprep.mubr.bf16.mxu0 0
  %243 = vmatmul.mubr.bf16.gmra.mrb[0].mxu0 %v208
  %v244 = vpop.f32.mrb[0].mxu0
  %v245 = vadd.f32 %v193, %v244
  %v246 = vpop.f32.mrb[0].mxu0
  %v247 = vpop.f32.mrb[0].mxu0
  %v248 = vadd.f32 %v193, %v247
  %v249 = vpop.f32.mrb[0].mxu0
  %250 = vdwg.mxu0
  %v251 = vpack.c.bf16 %v248, %v245
  %v253 = vunpack.c.l.b16 %v251
  %v254 = vunpack.c.h.b16 %v251
  %v255 = vpack.c.b16 %v253, %v253
  %v256 = vpack.c.b16 %v254, %v254
  %259 = vst [vmem:[%s7] sm:$0xf] %v255
  %260 = vst [vmem:[%s7 + $0x4] sm:$0xf] %v256
  // Predicated region
  $region30: #{gnresidule_apply.47} parent=0 // pred_check
    _
  $region31: #{gnresidule_apply.47} parent=0 // pred_check_branch
    %262 = sbr.rel (0) target = $region33
  $region32: #{gnresidule_apply.47} parent=0 // pred_region
    _
  $region33: #{gnresidule_apply.47} parent=0 // pred_fallthru
    _
  // Predicated region
  $region34: #{gnresidule_apply.47} parent=0 // pred_check
    _
  $region35: #{gnresidule_apply.47} parent=0 // pred_check_branch
    %264 = sbr.rel (0) target = $region37
  $region36: #{gnresidule_apply.47} parent=0 // pred_region
    _
  $region37: #{gnresidule_apply.47} parent=0 // pred_fallthru
    _

// kernel: gnresidule_apply.45
$region0: #{gnresidule_apply.45}
  #allocation0 [shape = 'u32[]', space=smem, size = 0x4, offset = 0x4, fixed_abs, tag = 'smem constant byte address 0x4 - core index']
  #allocation1 [shape = 'u32[144,128]{1,0:T(1,128)}', space=vmem, size = 0x12000, scoped, tag = 'internal scratch']
  %s0 = inlined_call_operand.vmem [shape: bf16[32,12], index: 0, kind: input, shape index: {}]
  %s1 = inlined_call_operand.vmem [shape: bf16[12,32], index: 1, kind: input, shape index: {}]
  %s2 = inlined_call_operand.vmem [shape: f32[1,32], index: 2, kind: input, shape index: {}]
  %s3 = inlined_call_operand.vmem [shape: bf16[32,32], index: 3, kind: input, shape index: {}]
  %s4 = inlined_call_operand.vmem [shape: f32[1,32], index: 4, kind: input, shape index: {}]
  %s5 = inlined_call_operand.vmem [shape: bf16[32,128], index: 5, kind: input, shape index: {}]
  %s6 = inlined_call_operand.vmem [shape: f32[1,128], index: 6, kind: input, shape index: {}]
  %s7 = inlined_call_operand.vmem [shape: bf16[128,128], index: 7, kind: input, shape index: {}]
  %s8 = inlined_call_operand.vmem [shape: f32[1,128], index: 8, kind: input, shape index: {}]
  %s9 = inlined_call_operand.vmem [shape: bf16[32,128], index: 9, kind: output, shape index: {0}]
  %s10 = inlined_call_operand.vmem [shape: bf16[32,128], index: 10, kind: output, shape index: {1}]
  %11 = xla_tuple %s9, %s10
  %s12 = sld [smem:[#allocation0]]
  $region54: #{gnresidule_apply.45} parent=0
    _
  %s14 = ssub.s32 1, %s12
  %s15 = scalar_select 0, %s14, %s12
  // Predicated region
  $region2: #{gnresidule_apply.45} parent=0 // pred_check
    _
  $region3: #{gnresidule_apply.45} parent=0 // pred_check_branch
    %17 = sbr.rel (0) target = $region5
  $region4: #{gnresidule_apply.45} parent=0 // pred_region
    _
  $region5: #{gnresidule_apply.45} parent=0 // pred_fallthru
    _
  // Predicated region
  $region6: #{gnresidule_apply.45} parent=0 // pred_check
    _
  $region7: #{gnresidule_apply.45} parent=0 // pred_check_branch
    %19 = sbr.rel (0) target = $region9
  $region8: #{gnresidule_apply.45} parent=0 // pred_region
    _
  $region9: #{gnresidule_apply.45} parent=0 // pred_fallthru
    _
  // Predicated region
  $region10: #{gnresidule_apply.45} parent=0 // pred_check
    _
  $region11: #{gnresidule_apply.45} parent=0 // pred_check_branch
    %21 = sbr.rel (0) target = $region13
  $region12: #{gnresidule_apply.45} parent=0 // pred_region
    _
  $region13: #{gnresidule_apply.45} parent=0 // pred_fallthru
    _
  // Predicated region
  $region14: #{gnresidule_apply.45} parent=0 // pred_check
    _
  $region15: #{gnresidule_apply.45} parent=0 // pred_check_branch
    %23 = sbr.rel (0) target = $region17
  $region16: #{gnresidule_apply.45} parent=0 // pred_region
    _
  $region17: #{gnresidule_apply.45} parent=0 // pred_fallthru
    _
  // Predicated region
  $region18: #{gnresidule_apply.45} parent=0 // pred_check
    _
  $region19: #{gnresidule_apply.45} parent=0 // pred_check_branch
    %25 = sbr.rel (0) target = $region21
  $region20: #{gnresidule_apply.45} parent=0 // pred_region
    _
  $region21: #{gnresidule_apply.45} parent=0 // pred_fallthru
    _
  // Predicated region
  $region22: #{gnresidule_apply.45} parent=0 // pred_check
    _
  $region23: #{gnresidule_apply.45} parent=0 // pred_check_branch
    %27 = sbr.rel (0) target = $region25
  $region24: #{gnresidule_apply.45} parent=0 // pred_region
    _
  $region25: #{gnresidule_apply.45} parent=0 // pred_fallthru
    _
  // Predicated region
  $region26: #{gnresidule_apply.45} parent=0 // pred_check
    _
  $region27: #{gnresidule_apply.45} parent=0 // pred_check_branch
    %29 = sbr.rel (0) target = $region29
  $region28: #{gnresidule_apply.45} parent=0 // pred_region
    _
  $region29: #{gnresidule_apply.45} parent=0 // pred_fallthru
    _
  // Predicated region
  $region30: #{gnresidule_apply.45} parent=0 // pred_check
    _
  $region31: #{gnresidule_apply.45} parent=0 // pred_check_branch
    %31 = sbr.rel (0) target = $region33
  $region32: #{gnresidule_apply.45} parent=0 // pred_region
    _
  $region33: #{gnresidule_apply.45} parent=0 // pred_fallthru
    _
  // Predicated region
  $region34: #{gnresidule_apply.45} parent=0 // pred_check
    _
  $region35: #{gnresidule_apply.45} parent=0 // pred_check_branch
    %33 = sbr.rel (0) target = $region37
  $region36: #{gnresidule_apply.45} parent=0 // pred_region
    _
  $region37: #{gnresidule_apply.45} parent=0 // pred_fallthru
    _
  %v35 = vld [vmem:[%s0] sm:$0xf]
  %v36 = vld [vmem:[%s0 + $0x4] sm:$0xf]
  %v37 = vld [vmem:[%s0 + $0x8] sm:$0xf]
  %v38 = vld [vmem:[%s0 + $0xc] sm:$0xf]
  %v39 = vld [vmem:[%s1] sm:$0xf]
  %v40 = vld [vmem:[%s1 + $0x4] sm:$0x3]
  %v41 = vld [vmem:[%s2] sm:$0x1]
  %v43 = vlaneseq
  %v44 = vshrl.u32 %v43, 7
  %v45 = vsub.s32 0, %v44
  %v46 = vrot.slane %v41, %v45
  %v52 = vunpack.c.l.b16 %v35
  %v53 = vunpack.c.l.b16 %v36
  %v54 = vunpack.c.l.b16 %v37
  %v55 = vunpack.c.l.b16 %v38
  %v56 = vpack.c.b16 %v53, %v52
  %v57 = vpack.c.b16 %v55, %v54
  %v60 = vunpack.c.l.b16 %v39
  %v61 = vunpack.c.l.b16 %v40
  %v62 = vpack.c.b16 %v61, %v60
  %vm63 = vcmask 97280
  %v65 = vsel %vm63, %v56, 0
  %v68 = vsel %vm63, %v57, 0
  %vm70 = vcmask 1045504
  %v72 = vsel %vm70, %v62, 0
  %74 = vmatprep.subr.bf16.mxu0 0
  %75 = vmatpush1.bf16.msra.mxu0 %v72
  %76 = vmatprep.subr.bf16.mxu0 0
  %77 = vmatpush1.bf16.msra.mxu0 0
  %78 = vmatprep.subr.bf16.mxu0 0
  %79 = vmatpush1.bf16.msra.mxu0 0
  %80 = vmatprep.subr.bf16.mxu0 0
  %81 = vmatpush1.bf16.msra.mxu0 0
  %82 = vmatprep.subr.bf16.mxu0 0
  %83 = vmatpush1.bf16.msra.mxu0 0
  %84 = vmatprep.subr.bf16.mxu0 0
  %85 = vmatpush1.bf16.msra.mxu0 0
  %86 = vmatprep.subr.bf16.mxu0 0
  %87 = vmatpush1.bf16.msra.mxu0 0
  %88 = vmatprep.subr.bf16.mxu0 0
  %89 = vmatpush1.bf16.msra.mxu0 0
  %90 = vmatprep.subr.bf16.mxu0 0
  %91 = vmatpush1.bf16.msra.mxu0 0
  %92 = vmatprep.subr.bf16.mxu0 0
  %93 = vmatpush1.bf16.msra.mxu0 0
  %94 = vmatprep.subr.bf16.mxu0 0
  %95 = vmatpush1.bf16.msra.mxu0 0
  %96 = vmatprep.subr.bf16.mxu0 0
  %97 = vmatpush1.bf16.msra.mxu0 0
  %98 = vmatprep.subr.bf16.mxu0 0
  %99 = vmatpush1.bf16.msra.mxu0 0
  %100 = vmatprep.subr.bf16.mxu0 0
  %101 = vmatpush1.bf16.msra.mxu0 0
  %102 = vmatprep.subr.bf16.mxu0 0
  %103 = vmatpush1.bf16.msra.mxu0 0
  %104 = vmatprep.subr.bf16.mxu0 0
  %105 = vmatpush1.bf16.msra.mxu0 0
  %106 = vmatprep.mubr.bf16.mxu0 0
  %107 = vmatmul.mubr.bf16.gmra.mrb[0].mxu0 %v65
  %v108 = vpop.f32.mrb[0].mxu0
  %v109 = vadd.f32 %v46, %v108
  %v110 = vpop.f32.mrb[0].mxu0
  %v111 = vpop.f32.mrb[0].mxu0
  %v112 = vadd.f32 %v46, %v111
  %v113 = vpop.f32.mrb[0].mxu0
  %114 = vmatprep.mubr.bf16.mxu0 0
  %115 = vmatmul.mubr.bf16.gmra.mrb[0].mxu0 %v68
  %v116 = vpop.f32.mrb[0].mxu0
  %v117 = vadd.f32 %v46, %v116
  %v118 = vpop.f32.mrb[0].mxu0
  %v119 = vpop.f32.mrb[0].mxu0
  %v120 = vadd.f32 %v46, %v119
  %v121 = vpop.f32.mrb[0].mxu0
  %122 = vdwg.mxu0
  %v123 = vmax.f32 %v109, 0.0
  %v124 = vmax.f32 %v112, 0.0
  %v125 = vmax.f32 %v117, 0.0
  %v126 = vmax.f32 %v120, 0.0
  %v127 = vpack.c.bf16 %v124, %v123
  %v128 = vpack.c.bf16 %v126, %v125
  %v129 = vld [vmem:[%s3] sm:$0xf]
  %v130 = vld [vmem:[%s3 + $0x4] sm:$0xf]
  %v131 = vld [vmem:[%s3 + $0x8] sm:$0xf]
  %v132 = vld [vmem:[%s3 + $0xc] sm:$0xf]
  %v133 = vld [vmem:[%s4] sm:$0x1]
  %v135 = vlaneseq
  %v136 = vshrl.u32 %v135, 7
  %v137 = vsub.s32 0, %v136
  %v138 = vrot.slane %v133, %v137
  %v144 = vunpack.c.l.b16 %v129
  %v145 = vunpack.c.l.b16 %v130
  %v146 = vunpack.c.l.b16 %v131
  %v147 = vunpack.c.l.b16 %v132
  %v148 = vpack.c.b16 %v145, %v144
  %v149 = vpack.c.b16 %v147, %v146
  %vm152 = vcmask 261120
  %v154 = vsel %vm152, %v127, 0
  %v157 = vsel %vm152, %v128, 0
  %159 = vmatprep.subr.bf16.mxu0 0
  %160 = vmatpush1.bf16.msra.mxu0 %v148
  %161 = vmatprep.subr.bf16.mxu0 0
  %162 = vmatpush1.bf16.msra.mxu0 %v149
  %163 = vmatprep.subr.bf16.mxu0 0
  %164 = vmatpush1.bf16.msra.mxu0 0
  %165 = vmatprep.subr.bf16.mxu0 0
  %166 = vmatpush1.bf16.msra.mxu0 0
  %167 = vmatprep.subr.bf16.mxu0 0
  %168 = vmatpush1.bf16.msra.mxu0 0
  %169 = vmatprep.subr.bf16.mxu0 0
  %170 = vmatpush1.bf16.msra.mxu0 0
  %171 = vmatprep.subr.bf16.mxu0 0
  %172 = vmatpush1.bf16.msra.mxu0 0
  %173 = vmatprep.subr.bf16.mxu0 0
  %174 = vmatpush1.bf16.msra.mxu0 0
  %175 = vmatprep.subr.bf16.mxu0 0
  %176 = vmatpush1.bf16.msra.mxu0 0
  %177 = vmatprep.subr.bf16.mxu0 0
  %178 = vmatpush1.bf16.msra.mxu0 0
  %179 = vmatprep.subr.bf16.mxu0 0
  %180 = vmatpush1.bf16.msra.mxu0 0
  %181 = vmatprep.subr.bf16.mxu0 0
  %182 = vmatpush1.bf16.msra.mxu0 0
  %183 = vmatprep.subr.bf16.mxu0 0
  %184 = vmatpush1.bf16.msra.mxu0 0
  %185 = vmatprep.subr.bf16.mxu0 0
  %186 = vmatpush1.bf16.msra.mxu0 0
  %187 = vmatprep.subr.bf16.mxu0 0
  %188 = vmatpush1.bf16.msra.mxu0 0
  %189 = vmatprep.subr.bf16.mxu0 0
  %190 = vmatpush1.bf16.msra.mxu0 0
  %191 = vmatprep.mubr.bf16.mxu0 0
  %192 = vmatmul.mubr.bf16.gmra.mrb[0].mxu0 %v154
  %v193 = vpop.f32.mrb[0].mxu0
  %v194 = vadd.f32 %v138, %v193
  %v195 = vpop.f32.mrb[0].mxu0
  %v196 = vpop.f32.mrb[0].mxu0
  %v197 = vadd.f32 %v138, %v196
  %v198 = vpop.f32.mrb[0].mxu0
  %199 = vmatprep.mubr.bf16.mxu0 0
  %200 = vmatmul.mubr.bf16.gmra.mrb[0].mxu0 %v157
  %v201 = vpop.f32.mrb[0].mxu0
  %v202 = vadd.f32 %v138, %v201
  %v203 = vpop.f32.mrb[0].mxu0
  %v204 = vpop.f32.mrb[0].mxu0
  %v205 = vadd.f32 %v138, %v204
  %v206 = vpop.f32.mrb[0].mxu0
  %207 = vdwg.mxu0
  %v208 = vmax.f32 %v194, 0.0
  %v209 = vmax.f32 %v197, 0.0
  %v210 = vmax.f32 %v202, 0.0
  %v211 = vmax.f32 %v205, 0.0
  %v212 = vpack.c.bf16 %v209, %v208
  %v213 = vpack.c.bf16 %v211, %v210
  %v214 = vld [vmem:[%s5] sm:$0xf]
  %v215 = vld [vmem:[%s5 + $0x4] sm:$0xf]
  %v216 = vld [vmem:[%s5 + $0x8] sm:$0xf]
  %v217 = vld [vmem:[%s5 + $0xc] sm:$0xf]
  %v218 = vld [vmem:[%s6] sm:$0x1]
  %v220 = vlaneseq
  %v221 = vshrl.u32 %v220, 7
  %v222 = vsub.s32 0, %v221
  %v223 = vrot.slane %v218, %v222
  %v229 = vunpack.c.l.b16 %v214
  %v230 = vunpack.c.l.b16 %v215
  %v231 = vunpack.c.l.b16 %v216
  %v232 = vunpack.c.l.b16 %v217
  %v233 = vpack.c.b16 %v230, %v229
  %v234 = vpack.c.b16 %v232, %v231
  %v238 = vsel %vm152, %v212, 0
  %v241 = vsel %vm152, %v213, 0
  %243 = vmatprep.subr.bf16.mxu0 0
  %244 = vmatpush1.bf16.msra.mxu0 %v233
  %245 = vmatprep.subr.bf16.mxu0 0
  %246 = vmatpush1.bf16.msra.mxu0 %v234
  %247 = vmatprep.subr.bf16.mxu0 0
  %248 = vmatpush1.bf16.msra.mxu0 0
  %249 = vmatprep.subr.bf16.mxu0 0
  %250 = vmatpush1.bf16.msra.mxu0 0
  %251 = vmatprep.subr.bf16.mxu0 0
  %252 = vmatpush1.bf16.msra.mxu0 0
  %253 = vmatprep.subr.bf16.mxu0 0
  %254 = vmatpush1.bf16.msra.mxu0 0
  %255 = vmatprep.subr.bf16.mxu0 0
  %256 = vmatpush1.bf16.msra.mxu0 0
  %257 = vmatprep.subr.bf16.mxu0 0
  %258 = vmatpush1.bf16.msra.mxu0 0
  %259 = vmatprep.subr.bf16.mxu0 0
  %260 = vmatpush1.bf16.msra.mxu0 0
  %261 = vmatprep.subr.bf16.mxu0 0
  %262 = vmatpush1.bf16.msra.mxu0 0
  %263 = vmatprep.subr.bf16.mxu0 0
  %264 = vmatpush1.bf16.msra.mxu0 0
  %265 = vmatprep.subr.bf16.mxu0 0
  %266 = vmatpush1.bf16.msra.mxu0 0
  %267 = vmatprep.subr.bf16.mxu0 0
  %268 = vmatpush1.bf16.msra.mxu0 0
  %269 = vmatprep.subr.bf16.mxu0 0
  %270 = vmatpush1.bf16.msra.mxu0 0
  %271 = vmatprep.subr.bf16.mxu0 0
  %272 = vmatpush1.bf16.msra.mxu0 0
  %273 = vmatprep.subr.bf16.mxu0 0
  %274 = vmatpush1.bf16.msra.mxu0 0
  %275 = vmatprep.mubr.bf16.mxu0 0
  %276 = vmatmul.mubr.bf16.gmra.mrb[0].mxu0 %v238
  %v277 = vpop.f32.mrb[0].mxu0
  %v278 = vadd.f32 %v223, %v277
  %v279 = vpop.f32.mrb[0].mxu0
  %v280 = vpop.f32.mrb[0].mxu0
  %v281 = vadd.f32 %v223, %v280
  %v282 = vpop.f32.mrb[0].mxu0
  %283 = vmatprep.mubr.bf16.mxu0 0
  %284 = vmatmul.mubr.bf16.gmra.mrb[0].mxu0 %v241
  %v285 = vpop.f32.mrb[0].mxu0
  %v286 = vadd.f32 %v223, %v285
  %v287 = vpop.f32.mrb[0].mxu0
  %v288 = vpop.f32.mrb[0].mxu0
  %v289 = vadd.f32 %v223, %v288
  %v290 = vpop.f32.mrb[0].mxu0
  %291 = vdwg.mxu0
  %v292 = vpack.c.bf16 %v281, %v278
  %v293 = vpack.c.bf16 %v289, %v286
  %v296 = vunpack.c.l.b16 %v292
  %v297 = vunpack.c.h.b16 %v292
  %v298 = vunpack.c.l.b16 %v293
  %v299 = vunpack.c.h.b16 %v293
  %v300 = vpack.c.b16 %v296, %v296
  %v301 = vpack.c.b16 %v297, %v297
  %v302 = vpack.c.b16 %v298, %v298
  %v303 = vpack.c.b16 %v299, %v299
  %308 = vst [vmem:[%s9] sm:$0xf] %v300
  %309 = vst [vmem:[%s9 + $0x4] sm:$0xf] %v301
  %310 = vst [vmem:[%s9 + $0x8] sm:$0xf] %v302
  %311 = vst [vmem:[%s9 + $0xc] sm:$0xf] %v303
  %v312 = vld [vmem:[%s7] sm:$0xf]
  %v313 = vld [vmem:[%s7 + $0x4] sm:$0xf]
  %v314 = vld [vmem:[%s7 + $0x8] sm:$0xf]
  %v315 = vld [vmem:[%s7 + $0xc] sm:$0xf]
  %v316 = vld [vmem:[%s7 + $0x10] sm:$0xf]
  %v317 = vld [vmem:[%s7 + $0x14] sm:$0xf]
  %v318 = vld [vmem:[%s7 + $0x18] sm:$0xf]
  %v319 = vld [vmem:[%s7 + $0x1c] sm:$0xf]
  %v320 = vld [vmem:[%s7 + $0x20] sm:$0xf]
  %v321 = vld [vmem:[%s7 + $0x24] sm:$0xf]
  %v322 = vld [vmem:[%s7 + $0x28] sm:$0xf]
  %v323 = vld [vmem:[%s7 + $0x2c] sm:$0xf]
  %v324 = vld [vmem:[%s7 + $0x30] sm:$0xf]
  %v325 = vld [vmem:[%s7 + $0x34] sm:$0xf]
  %v326 = vld [vmem:[%s7 + $0x38] sm:$0xf]
  %v327 = vld [vmem:[%s7 + $0x3c] sm:$0xf]
  %v328 = vld [vmem:[%s8] sm:$0x1]
  %v330 = vlaneseq
  %v331 = vshrl.u32 %v330, 7
  %v332 = vsub.s32 0, %v331
  %v333 = vrot.slane %v328, %v332
  %v351 = vunpack.c.l.b16 %v312
  %v352 = vunpack.c.l.b16 %v313
  %v353 = vunpack.c.l.b16 %v314
  %v354 = vunpack.c.l.b16 %v315
  %v355 = vunpack.c.l.b16 %v316
  %v356 = vunpack.c.l.b16 %v317
  %v357 = vunpack.c.l.b16 %v318
  %v358 = vunpack.c.l.b16 %v319
  %v359 = vunpack.c.l.b16 %v320
  %v360 = vunpack.c.l.b16 %v321
  %v361 = vunpack.c.l.b16 %v322
  %v362 = vunpack.c.l.b16 %v323
  %v363 = vunpack.c.l.b16 %v324
  %v364 = vunpack.c.l.b16 %v325
  %v365 = vunpack.c.l.b16 %v326
  %v366 = vunpack.c.l.b16 %v327
  %v367 = vpack.c.b16 %v352, %v351
  %v368 = vpack.c.b16 %v354, %v353
  %v369 = vpack.c.b16 %v356, %v355
  %v370 = vpack.c.b16 %v358, %v357
  %v371 = vpack.c.b16 %v360, %v359
  %v372 = vpack.c.b16 %v362, %v361
  %v373 = vpack.c.b16 %v364, %v363
  %v374 = vpack.c.b16 %v366, %v365
  %383 = vmatprep.subr.bf16.mxu0 0
  %384 = vmatpush1.bf16.msra.mxu0 %v367
  %385 = vmatprep.subr.bf16.mxu0 0
  %386 = vmatpush1.bf16.msra.mxu0 %v368
  %387 = vmatprep.subr.bf16.mxu0 0
  %388 = vmatpush1.bf16.msra.mxu0 %v369
  %389 = vmatprep.subr.bf16.mxu0 0
  %390 = vmatpush1.bf16.msra.mxu0 %v370
  %391 = vmatprep.subr.bf16.mxu0 0
  %392 = vmatpush1.bf16.msra.mxu0 %v371
  %393 = vmatprep.subr.bf16.mxu0 0
  %394 = vmatpush1.bf16.msra.mxu0 %v372
  %395 = vmatprep.subr.bf16.mxu0 0
  %396 = vmatpush1.bf16.msra.mxu0 %v373
  %397 = vmatprep.subr.bf16.mxu0 0
  %398 = vmatpush1.bf16.msra.mxu0 %v374
  %399 = vmatprep.subr.bf16.mxu0 0
  %400 = vmatpush1.bf16.msra.mxu0 0
  %401 = vmatprep.subr.bf16.mxu0 0
  %402 = vmatpush1.bf16.msra.mxu0 0
  %403 = vmatprep.subr.bf16.mxu0 0
  %404 = vmatpush1.bf16.msra.mxu0 0
  %405 = vmatprep.subr.bf16.mxu0 0
  %406 = vmatpush1.bf16.msra.mxu0 0
  %407 = vmatprep.subr.bf16.mxu0 0
  %408 = vmatpush1.bf16.msra.mxu0 0
  %409 = vmatprep.subr.bf16.mxu0 0
  %410 = vmatpush1.bf16.msra.mxu0 0
  %411 = vmatprep.subr.bf16.mxu0 0
  %412 = vmatpush1.bf16.msra.mxu0 0
  %413 = vmatprep.subr.bf16.mxu0 0
  %414 = vmatpush1.bf16.msra.mxu0 0
  %415 = vmatprep.mubr.bf16.mxu0 0
  %416 = vmatmul.mubr.bf16.gmra.mrb[0].mxu0 %v292
  %v417 = vpop.f32.mrb[0].mxu0
  %v418 = vadd.f32 %v333, %v417
  %v419 = vpop.f32.mrb[0].mxu0
  %v420 = vpop.f32.mrb[0].mxu0
  %v421 = vadd.f32 %v333, %v420
  %v422 = vpop.f32.mrb[0].mxu0
  %423 = vmatprep.mubr.bf16.mxu0 0
  %424 = vmatmul.mubr.bf16.gmra.mrb[0].mxu0 %v293
  %v425 = vpop.f32.mrb[0].mxu0
  %v426 = vadd.f32 %v333, %v425
  %v427 = vpop.f32.mrb[0].mxu0
  %v428 = vpop.f32.mrb[0].mxu0
  %v429 = vadd.f32 %v333, %v428
  %v430 = vpop.f32.mrb[0].mxu0
  %431 = vdwg.mxu0
  %v432 = vpack.c.bf16 %v421, %v418
  %v433 = vpack.c.bf16 %v429, %v426
  %v436 = vunpack.c.l.b16 %v432
  %v437 = vunpack.c.h.b16 %v432
  %v438 = vunpack.c.l.b16 %v433
  %v439 = vunpack.c.h.b16 %v433
  %v440 = vpack.c.b16 %v436, %v436
  %v441 = vpack.c.b16 %v437, %v437
  %v442 = vpack.c.b16 %v438, %v438
  %v443 = vpack.c.b16 %v439, %v439
  %448 = vst [vmem:[%s10] sm:$0xf] %v440
  %449 = vst [vmem:[%s10 + $0x4] sm:$0xf] %v441
  %450 = vst [vmem:[%s10 + $0x8] sm:$0xf] %v442
  %451 = vst [vmem:[%s10 + $0xc] sm:$0xf] %v443
  // Predicated region
  $region38: #{gnresidule_apply.45} parent=0 // pred_check
    _
  $region39: #{gnresidule_apply.45} parent=0 // pred_check_branch
    %453 = sbr.rel (0) target = $region41
  $region40: #{gnresidule_apply.45} parent=0 // pred_region
    _
  $region41: #{gnresidule_apply.45} parent=0 // pred_fallthru
    _
  // Predicated region
  $region42: #{gnresidule_apply.45} parent=0 // pred_check
    _
  $region43: #{gnresidule_apply.45} parent=0 // pred_check_branch
    %455 = sbr.rel (0) target = $region45
  $region44: #{gnresidule_apply.45} parent=0 // pred_region
    _
  $region45: #{gnresidule_apply.45} parent=0 // pred_fallthru
    _
  // Predicated region
  $region46: #{gnresidule_apply.45} parent=0 // pred_check
    _
  $region47: #{gnresidule_apply.45} parent=0 // pred_check_branch
    %457 = sbr.rel (0) target = $region49
  $region48: #{gnresidule_apply.45} parent=0 // pred_region
    _
  $region49: #{gnresidule_apply.45} parent=0 // pred_fallthru
    _
  // Predicated region
  $region50: #{gnresidule_apply.45} parent=0 // pred_check
    _
  $region51: #{gnresidule_apply.45} parent=0 // pred_check_branch
    %459 = sbr.rel (0) target = $region53
  $region52: #{gnresidule_apply.45} parent=0 // pred_region
    _
  $region53: #{gnresidule_apply.45} parent=0 // pred_fallthru
    _

// kernel: gnresidule_apply.48
$region0: #{gnresidule_apply.48}
  #allocation0 [shape = 'u32[]', space=smem, size = 0x4, offset = 0x4, fixed_abs, tag = 'smem constant byte address 0x4 - core index']
  #allocation1 [shape = 'u32[144,128]{1,0:T(1,128)}', space=vmem, size = 0x12000, scoped, tag = 'internal scratch']
  #allocation2 [shape = 'f32[2,32]{1,0:T(2,128)}', space=vmem, size = 0x400, scoped, tag = 'scratch operand']
  %s0 = inlined_call_operand.vmem [shape: s32[128,1], index: 0, kind: input, shape index: {}]
  %s1 = inlined_call_operand.vmem [shape: bf16[128,32], index: 1, kind: input, shape index: {}]
  %s2 = inlined_call_operand.vmem [shape: bf16[2,32], index: 2, kind: output, shape index: {}]
  %s3 = sld [smem:[#allocation0]]
  $region26: #{gnresidule_apply.48} parent=0
    _
  %s5 = ssub.s32 1, %s3
  %s6 = scalar_select 0, %s5, %s3
  // Predicated region
  $region2: #{gnresidule_apply.48} parent=0 // pred_check
    _
  $region3: #{gnresidule_apply.48} parent=0 // pred_check_branch
    %8 = sbr.rel (0) target = $region5
  $region4: #{gnresidule_apply.48} parent=0 // pred_region
    _
  $region5: #{gnresidule_apply.48} parent=0 // pred_fallthru
    _
  // Predicated region
  $region6: #{gnresidule_apply.48} parent=0 // pred_check
    _
  $region7: #{gnresidule_apply.48} parent=0 // pred_check_branch
    %10 = sbr.rel (0) target = $region9
  $region8: #{gnresidule_apply.48} parent=0 // pred_region
    _
  $region9: #{gnresidule_apply.48} parent=0 // pred_fallthru
    _
  %p11 = scmp.eq.s32.totalorder 0, 0
  // Predicated region
  $region10: #{gnresidule_apply.48} parent=0 // pred_check
    %p12 = pneg %p11
  $region11: #{gnresidule_apply.48} parent=0 // pred_check_branch
    %14 = sbr.rel (%p12) target = $region13
  $region12: #{gnresidule_apply.48} parent=0 // pred_region
    %vm15 = vcmask 254976
    %16 = vst.msk [vmem:[#allocation2] sm:$0x3] %vm15, 0.0
  $region13: #{gnresidule_apply.48} parent=0 // pred_fallthru
    _
  %v17 = vld [vmem:[%s0] sm:$0xff]
  %v18 = vld [vmem:[%s0 + $0x8] sm:$0xff]
  %v19 = vld [vmem:[%s0 + $0x10] sm:$0xff]
  %v20 = vld [vmem:[%s0 + $0x18] sm:$0xff]
  %v21 = vld [vmem:[%s0 + $0x20] sm:$0xff]
  %v22 = vld [vmem:[%s0 + $0x28] sm:$0xff]
  %v23 = vld [vmem:[%s0 + $0x30] sm:$0xff]
  %v24 = vld [vmem:[%s0 + $0x38] sm:$0xff]
  %v25 = vld [vmem:[%s0 + $0x40] sm:$0xff]
  %v26 = vld [vmem:[%s0 + $0x48] sm:$0xff]
  %v27 = vld [vmem:[%s0 + $0x50] sm:$0xff]
  %v28 = vld [vmem:[%s0 + $0x58] sm:$0xff]
  %v29 = vld [vmem:[%s0 + $0x60] sm:$0xff]
  %v30 = vld [vmem:[%s0 + $0x68] sm:$0xff]
  %v31 = vld [vmem:[%s0 + $0x70] sm:$0xff]
  %v32 = vld [vmem:[%s0 + $0x78] sm:$0xff]
  %v33 = vld [vmem:[%s1] sm:$0xf]
  %v34 = vld [vmem:[%s1 + $0x4] sm:$0xf]
  %v35 = vld [vmem:[%s1 + $0x8] sm:$0xf]
  %v36 = vld [vmem:[%s1 + $0xc] sm:$0xf]
  %v37 = vld [vmem:[%s1 + $0x10] sm:$0xf]
  %v38 = vld [vmem:[%s1 + $0x14] sm:$0xf]
  %v39 = vld [vmem:[%s1 + $0x18] sm:$0xf]
  %v40 = vld [vmem:[%s1 + $0x1c] sm:$0xf]
  %v41 = vld [vmem:[%s1 + $0x20] sm:$0xf]
  %v42 = vld [vmem:[%s1 + $0x24] sm:$0xf]
  %v43 = vld [vmem:[%s1 + $0x28] sm:$0xf]
  %v44 = vld [vmem:[%s1 + $0x2c] sm:$0xf]
  %v45 = vld [vmem:[%s1 + $0x30] sm:$0xf]
  %v46 = vld [vmem:[%s1 + $0x34] sm:$0xf]
  %v47 = vld [vmem:[%s1 + $0x38] sm:$0xf]
  %v48 = vld [vmem:[%s1 + $0x3c] sm:$0xf]
  %v49 = vunpack.c.l.bf16 %v33
  %v50 = vunpack.c.l.bf16 %v34
  %v51 = vunpack.c.l.bf16 %v35
  %v52 = vunpack.c.l.bf16 %v36
  %v53 = vunpack.c.l.bf16 %v37
  %v54 = vunpack.c.l.bf16 %v38
  %v55 = vunpack.c.l.bf16 %v39
  %v56 = vunpack.c.l.bf16 %v40
  %v57 = vunpack.c.l.bf16 %v41
  %v58 = vunpack.c.l.bf16 %v42
  %v59 = vunpack.c.l.bf16 %v43
  %v60 = vunpack.c.l.bf16 %v44
  %v61 = vunpack.c.l.bf16 %v45
  %v62 = vunpack.c.l.bf16 %v46
  %v63 = vunpack.c.l.bf16 %v47
  %v64 = vunpack.c.l.bf16 %v48
  %vm65 = vcmp.eq.s32.totalorder %v17, 0
  %vm66 = vcmp.eq.s32.totalorder %v18, 0
  %vm67 = vcmp.eq.s32.totalorder %v19, 0
  %vm68 = vcmp.eq.s32.totalorder %v20, 0
  %vm69 = vcmp.eq.s32.totalorder %v21, 0
  %vm70 = vcmp.eq.s32.totalorder %v22, 0
  %vm71 = vcmp.eq.s32.totalorder %v23, 0
  %vm72 = vcmp.eq.s32.totalorder %v24, 0
  %vm73 = vcmp.eq.s32.totalorder %v25, 0
  %vm74 = vcmp.eq.s32.totalorder %v26, 0
  %vm75 = vcmp.eq.s32.totalorder %v27, 0
  %vm76 = vcmp.eq.s32.totalorder %v28, 0
  %vm77 = vcmp.eq.s32.totalorder %v29, 0
  %vm78 = vcmp.eq.s32.totalorder %v30, 0
  %vm79 = vcmp.eq.s32.totalorder %v31, 0
  %vm80 = vcmp.eq.s32.totalorder %v32, 0
  %v81 = vsel %vm65, 1, 0
  %v82 = vsel %vm66, 1, 0
  %v83 = vsel %vm67, 1, 0
  %v84 = vsel %vm68, 1, 0
  %v85 = vsel %vm69, 1, 0
  %v86 = vsel %vm70, 1, 0
  %v87 = vsel %vm71, 1, 0
  %v88 = vsel %vm72, 1, 0
  %v89 = vsel %vm73, 1, 0
  %v90 = vsel %vm74, 1, 0
  %v91 = vsel %vm75, 1, 0
  %v92 = vsel %vm76, 1, 0
  %v93 = vsel %vm77, 1, 0
  %v94 = vsel %vm78, 1, 0
  %v95 = vsel %vm79, 1, 0
  %v96 = vsel %vm80, 1, 0
  %97 = vset.pattern.permute.xlu0 0
  %98 = vperm.xlu0 %97, %v81
  %v99 = vpop.permute.xlu0 %98
  %100 = vset.pattern.permute.xlu0 0
  %101 = vperm.xlu0 %100, %v82
  %v102 = vpop.permute.xlu0 %101
  %103 = vset.pattern.permute.xlu0 0
  %104 = vperm.xlu0 %103, %v83
  %v105 = vpop.permute.xlu0 %104
  %106 = vset.pattern.permute.xlu0 0
  %107 = vperm.xlu0 %106, %v84
  %v108 = vpop.permute.xlu0 %107
  %109 = vset.pattern.permute.xlu0 0
  %110 = vperm.xlu0 %109, %v85
  %v111 = vpop.permute.xlu0 %110
  %112 = vset.pattern.permute.xlu0 0
  %113 = vperm.xlu0 %112, %v86
  %v114 = vpop.permute.xlu0 %113
  %115 = vset.pattern.permute.xlu0 0
  %116 = vperm.xlu0 %115, %v87
  %v117 = vpop.permute.xlu0 %116
  %118 = vset.pattern.permute.xlu0 0
  %119 = vperm.xlu0 %118, %v88
  %v120 = vpop.permute.xlu0 %119
  %121 = vset.pattern.permute.xlu0 0
  %122 = vperm.xlu0 %121, %v89
  %v123 = vpop.permute.xlu0 %122
  %124 = vset.pattern.permute.xlu0 0
  %125 = vperm.xlu0 %124, %v90
  %v126 = vpop.permute.xlu0 %125
  %127 = vset.pattern.permute.xlu0 0
  %128 = vperm.xlu0 %127, %v91
  %v129 = vpop.permute.xlu0 %128
  %130 = vset.pattern.permute.xlu0 0
  %131 = vperm.xlu0 %130, %v92
  %v132 = vpop.permute.xlu0 %131
  %133 = vset.pattern.permute.xlu0 0
  %134 = vperm.xlu0 %133, %v93
  %v135 = vpop.permute.xlu0 %134
  %136 = vset.pattern.permute.xlu0 0
  %137 = vperm.xlu0 %136, %v94
  %v138 = vpop.permute.xlu0 %137
  %139 = vset.pattern.permute.xlu0 0
  %140 = vperm.xlu0 %139, %v95
  %v141 = vpop.permute.xlu0 %140
  %142 = vset.pattern.permute.xlu0 0
  %143 = vperm.xlu0 %142, %v96
  %v144 = vpop.permute.xlu0 %143
  %vm145 = vcmp.eq.s32.totalorder %v99, 1
  %vm146 = vcmp.eq.s32.totalorder %v102, 1
  %vm147 = vcmp.eq.s32.totalorder %v105, 1
  %vm148 = vcmp.eq.s32.totalorder %v108, 1
  %vm149 = vcmp.eq.s32.totalorder %v111, 1
  %vm150 = vcmp.eq.s32.totalorder %v114, 1
  %vm151 = vcmp.eq.s32.totalorder %v117, 1
  %vm152 = vcmp.eq.s32.totalorder %v120, 1
  %vm153 = vcmp.eq.s32.totalorder %v123, 1
  %vm154 = vcmp.eq.s32.totalorder %v126, 1
  %vm155 = vcmp.eq.s32.totalorder %v129, 1
  %vm156 = vcmp.eq.s32.totalorder %v132, 1
  %vm157 = vcmp.eq.s32.totalorder %v135, 1
  %vm158 = vcmp.eq.s32.totalorder %v138, 1
  %vm159 = vcmp.eq.s32.totalorder %v141, 1
  %vm160 = vcmp.eq.s32.totalorder %v144, 1
  %v161 = vsel %vm145, %v49, 0.0
  %v162 = vsel %vm146, %v50, 0.0
  %v163 = vsel %vm147, %v51, 0.0
  %v164 = vsel %vm148, %v52, 0.0
  %v165 = vsel %vm149, %v53, 0.0
  %v166 = vsel %vm150, %v54, 0.0
  %v167 = vsel %vm151, %v55, 0.0
  %v168 = vsel %vm152, %v56, 0.0
  %v169 = vsel %vm153, %v57, 0.0
  %v170 = vsel %vm154, %v58, 0.0
  %v171 = vsel %vm155, %v59, 0.0
  %v172 = vsel %vm156, %v60, 0.0
  %v173 = vsel %vm157, %v61, 0.0
  %v174 = vsel %vm158, %v62, 0.0
  %v175 = vsel %vm159, %v63, 0.0
  %v176 = vsel %vm160, %v64, 0.0
  %vm177 = vcmask 261120
  %v178 = vsel %vm177, %v161, 0.0
  %v179 = vsel %vm177, %v162, 0.0
  %v180 = vadd.f32 %v178, %v179
  %v181 = vsel %vm177, %v163, 0.0
  %v182 = vadd.f32 %v180, %v181
  %v183 = vsel %vm177, %v164, 0.0
  %v184 = vadd.f32 %v182, %v183
  %v185 = vsel %vm177, %v165, 0.0
  %v186 = vadd.f32 %v184, %v185
  %v187 = vsel %vm177, %v166, 0.0
  %v188 = vadd.f32 %v186, %v187
  %v189 = vsel %vm177, %v167, 0.0
  %v190 = vadd.f32 %v188, %v189
  %v191 = vsel %vm177, %v168, 0.0
  %v192 = vadd.f32 %v190, %v191
  %v193 = vsel %vm177, %v169, 0.0
  %v194 = vadd.f32 %v192, %v193
  %v195 = vsel %vm177, %v170, 0.0
  %v196 = vadd.f32 %v194, %v195
  %v197 = vsel %vm177, %v171, 0.0
  %v198 = vadd.f32 %v196, %v197
  %v199 = vsel %vm177, %v172, 0.0
  %v200 = vadd.f32 %v198, %v199
  %v201 = vsel %vm177, %v173, 0.0
  %v202 = vadd.f32 %v200, %v201
  %v203 = vsel %vm177, %v174, 0.0
  %v204 = vadd.f32 %v202, %v203
  %v205 = vsel %vm177, %v175, 0.0
  %v206 = vadd.f32 %v204, %v205
  %v207 = vsel %vm177, %v176, 0.0
  %v208 = vadd.f32 %v206, %v207
  %v209 = vrot.slane %v208, 4
  %v210 = vadd.f32 %v208, %v209
  %v211 = vrot.slane %v210, 2
  %v212 = vadd.f32 %v210, %v211
  %v213 = vrot.slane %v212, 1
  %v214 = vadd.f32 %v212, %v213
  %vm215 = vcmp.eq.s32.totalorder %v17, 1
  %vm216 = vcmp.eq.s32.totalorder %v18, 1
  %vm217 = vcmp.eq.s32.totalorder %v19, 1
  %vm218 = vcmp.eq.s32.totalorder %v20, 1
  %vm219 = vcmp.eq.s32.totalorder %v21, 1
  %vm220 = vcmp.eq.s32.totalorder %v22, 1
  %vm221 = vcmp.eq.s32.totalorder %v23, 1
  %vm222 = vcmp.eq.s32.totalorder %v24, 1
  %vm223 = vcmp.eq.s32.totalorder %v25, 1
  %vm224 = vcmp.eq.s32.totalorder %v26, 1
  %vm225 = vcmp.eq.s32.totalorder %v27, 1
  %vm226 = vcmp.eq.s32.totalorder %v28, 1
  %vm227 = vcmp.eq.s32.totalorder %v29, 1
  %vm228 = vcmp.eq.s32.totalorder %v30, 1
  %vm229 = vcmp.eq.s32.totalorder %v31, 1
  %vm230 = vcmp.eq.s32.totalorder %v32, 1
  %v231 = vsel %vm215, 1, 0
  %v232 = vsel %vm216, 1, 0
  %v233 = vsel %vm217, 1, 0
  %v234 = vsel %vm218, 1, 0
  %v235 = vsel %vm219, 1, 0
  %v236 = vsel %vm220, 1, 0
  %v237 = vsel %vm221, 1, 0
  %v238 = vsel %vm222, 1, 0
  %v239 = vsel %vm223, 1, 0
  %v240 = vsel %vm224, 1, 0
  %v241 = vsel %vm225, 1, 0
  %v242 = vsel %vm226, 1, 0
  %v243 = vsel %vm227, 1, 0
  %v244 = vsel %vm228, 1, 0
  %v245 = vsel %vm229, 1, 0
  %v246 = vsel %vm230, 1, 0
  %247 = vset.pattern.permute.xlu0 0
  %248 = vperm.xlu0 %247, %v231
  %v249 = vpop.permute.xlu0 %248
  %250 = vset.pattern.permute.xlu0 0
  %251 = vperm.xlu0 %250, %v232
  %v252 = vpop.permute.xlu0 %251
  %253 = vset.pattern.permute.xlu0 0
  %254 = vperm.xlu0 %253, %v233
  %v255 = vpop.permute.xlu0 %254
  %256 = vset.pattern.permute.xlu0 0
  %257 = vperm.xlu0 %256, %v234
  %v258 = vpop.permute.xlu0 %257
  %259 = vset.pattern.permute.xlu0 0
  %260 = vperm.xlu0 %259, %v235
  %v261 = vpop.permute.xlu0 %260
  %262 = vset.pattern.permute.xlu0 0
  %263 = vperm.xlu0 %262, %v236
  %v264 = vpop.permute.xlu0 %263
  %265 = vset.pattern.permute.xlu0 0
  %266 = vperm.xlu0 %265, %v237
  %v267 = vpop.permute.xlu0 %266
  %268 = vset.pattern.permute.xlu0 0
  %269 = vperm.xlu0 %268, %v238
  %v270 = vpop.permute.xlu0 %269
  %271 = vset.pattern.permute.xlu0 0
  %272 = vperm.xlu0 %271, %v239
  %v273 = vpop.permute.xlu0 %272
  %274 = vset.pattern.permute.xlu0 0
  %275 = vperm.xlu0 %274, %v240
  %v276 = vpop.permute.xlu0 %275
  %277 = vset.pattern.permute.xlu0 0
  %278 = vperm.xlu0 %277, %v241
  %v279 = vpop.permute.xlu0 %278
  %280 = vset.pattern.permute.xlu0 0
  %281 = vperm.xlu0 %280, %v242
  %v282 = vpop.permute.xlu0 %281
  %283 = vset.pattern.permute.xlu0 0
  %284 = vperm.xlu0 %283, %v243
  %v285 = vpop.permute.xlu0 %284
  %286 = vset.pattern.permute.xlu0 0
  %287 = vperm.xlu0 %286, %v244
  %v288 = vpop.permute.xlu0 %287
  %289 = vset.pattern.permute.xlu0 0
  %290 = vperm.xlu0 %289, %v245
  %v291 = vpop.permute.xlu0 %290
  %292 = vset.pattern.permute.xlu0 0
  %293 = vperm.xlu0 %292, %v246
  %v294 = vpop.permute.xlu0 %293
  %vm295 = vcmp.eq.s32.totalorder %v249, 1
  %vm296 = vcmp.eq.s32.totalorder %v252, 1
  %vm297 = vcmp.eq.s32.totalorder %v255, 1
  %vm298 = vcmp.eq.s32.totalorder %v258, 1
  %vm299 = vcmp.eq.s32.totalorder %v261, 1
  %vm300 = vcmp.eq.s32.totalorder %v264, 1
  %vm301 = vcmp.eq.s32.totalorder %v267, 1
  %vm302 = vcmp.eq.s32.totalorder %v270, 1
  %vm303 = vcmp.eq.s32.totalorder %v273, 1
  %vm304 = vcmp.eq.s32.totalorder %v276, 1
  %vm305 = vcmp.eq.s32.totalorder %v279, 1
  %vm306 = vcmp.eq.s32.totalorder %v282, 1
  %vm307 = vcmp.eq.s32.totalorder %v285, 1
  %vm308 = vcmp.eq.s32.totalorder %v288, 1
  %vm309 = vcmp.eq.s32.totalorder %v291, 1
  %vm310 = vcmp.eq.s32.totalorder %v294, 1
  %v311 = vsel %vm295, %v49, 0.0
  %v312 = vsel %vm296, %v50, 0.0
  %v313 = vsel %vm297, %v51, 0.0
  %v314 = vsel %vm298, %v52, 0.0
  %v315 = vsel %vm299, %v53, 0.0
  %v316 = vsel %vm300, %v54, 0.0
  %v317 = vsel %vm301, %v55, 0.0
  %v318 = vsel %vm302, %v56, 0.0
  %v319 = vsel %vm303, %v57, 0.0
  %v320 = vsel %vm304, %v58, 0.0
  %v321 = vsel %vm305, %v59, 0.0
  %v322 = vsel %vm306, %v60, 0.0
  %v323 = vsel %vm307, %v61, 0.0
  %v324 = vsel %vm308, %v62, 0.0
  %v325 = vsel %vm309, %v63, 0.0
  %v326 = vsel %vm310, %v64, 0.0
  %v327 = vsel %vm177, %v311, 0.0
  %v328 = vsel %vm177, %v312, 0.0
  %v329 = vadd.f32 %v327, %v328
  %v330 = vsel %vm177, %v313, 0.0
  %v331 = vadd.f32 %v329, %v330
  %v332 = vsel %vm177, %v314, 0.0
  %v333 = vadd.f32 %v331, %v332
  %v334 = vsel %vm177, %v315, 0.0
  %v335 = vadd.f32 %v333, %v334
  %v336 = vsel %vm177, %v316, 0.0
  %v337 = vadd.f32 %v335, %v336
  %v338 = vsel %vm177, %v317, 0.0
  %v339 = vadd.f32 %v337, %v338
  %v340 = vsel %vm177, %v318, 0.0
  %v341 = vadd.f32 %v339, %v340
  %v342 = vsel %vm177, %v319, 0.0
  %v343 = vadd.f32 %v341, %v342
  %v344 = vsel %vm177, %v320, 0.0
  %v345 = vadd.f32 %v343, %v344
  %v346 = vsel %vm177, %v321, 0.0
  %v347 = vadd.f32 %v345, %v346
  %v348 = vsel %vm177, %v322, 0.0
  %v349 = vadd.f32 %v347, %v348
  %v350 = vsel %vm177, %v323, 0.0
  %v351 = vadd.f32 %v349, %v350
  %v352 = vsel %vm177, %v324, 0.0
  %v353 = vadd.f32 %v351, %v352
  %v354 = vsel %vm177, %v325, 0.0
  %v355 = vadd.f32 %v353, %v354
  %v356 = vsel %vm177, %v326, 0.0
  %v357 = vadd.f32 %v355, %v356
  %v358 = vrot.slane %v357, 4
  %v359 = vadd.f32 %v357, %v358
  %v360 = vrot.slane %v359, 2
  %v361 = vadd.f32 %v359, %v360
  %v362 = vrot.slane %v361, 1
  %v363 = vadd.f32 %v361, %v362
  %v364 = vld [vmem:[#allocation2] sm:$0x3]
  %vm365 = vcmask 1040384
  %v366 = vsel %vm365, %v214, %v363
  %v367 = vadd.f32 %v364, %v366
  %vm368 = vcmask 254976
  %369 = vst.msk [vmem:[#allocation2] sm:$0x3] %vm368, %v367
  // Predicated region
  $region14: #{gnresidule_apply.48} parent=0 // pred_check
    %p370 = pneg %p11
  $region15: #{gnresidule_apply.48} parent=0 // pred_check_branch
    %372 = sbr.rel (%p370) target = $region17
  $region16: #{gnresidule_apply.48} parent=0 // pred_region
    %v373 = vld [vmem:[#allocation2] sm:$0x3]
    %v374 = vpack.c.bf16 %v373, %v373
    %vm375 = vcmask 253952
    %376 = vst.msk [vmem:[%s2] sm:$0x1] %vm375, %v374
  $region17: #{gnresidule_apply.48} parent=0 // pred_fallthru
    _
  // Predicated region
  $region18: #{gnresidule_apply.48} parent=0 // pred_check
    _
  $region19: #{gnresidule_apply.48} parent=0 // pred_check_branch
    %378 = sbr.rel (0) target = $region21
  $region20: #{gnresidule_apply.48} parent=0 // pred_region
    _
  $region21: #{gnresidule_apply.48} parent=0 // pred_fallthru
    _
  // Predicated region
  $region22: #{gnresidule_apply.48} parent=0 // pred_check
    _
  $region23: #{gnresidule_apply.48} parent=0 // pred_check_branch
    %380 = sbr.rel (0) target = $region25
  $region24: #{gnresidule_apply.48} parent=0 // pred_region
    _
  $region25: #{gnresidule_apply.48} parent=0 // pred_fallthru
    _

// kernel: gnresidule_apply.50
$region0: #{gnresidule_apply.50}
  #allocation0 [shape = 'u32[]', space=smem, size = 0x4, offset = 0x4, fixed_abs, tag = 'smem constant byte address 0x4 - core index']
  #allocation1 [shape = 'u32[144,128]{1,0:T(1,128)}', space=vmem, size = 0x12000, scoped, tag = 'internal scratch']
  %s0 = inlined_call_operand.vmem [shape: bf16[16,64], index: 0, kind: input, shape index: {}]
  %s1 = inlined_call_operand.vmem [shape: bf16[64,32], index: 1, kind: input, shape index: {}]
  %s2 = inlined_call_operand.vmem [shape: f32[1,32], index: 2, kind: input, shape index: {}]
  %s3 = inlined_call_operand.vmem [shape: bf16[32,32], index: 3, kind: input, shape index: {}]
  %s4 = inlined_call_operand.vmem [shape: f32[1,32], index: 4, kind: input, shape index: {}]
  %s5 = inlined_call_operand.vmem [shape: bf16[32,128], index: 5, kind: input, shape index: {}]
  %s6 = inlined_call_operand.vmem [shape: f32[1,128], index: 6, kind: input, shape index: {}]
  %s7 = inlined_call_operand.vmem [shape: bf16[16,128], index: 7, kind: output, shape index: {}]
  %s8 = sld [smem:[#allocation0]]
  $region38: #{gnresidule_apply.50} parent=0
    _
  %s10 = ssub.s32 1, %s8
  %s11 = scalar_select 0, %s10, %s8
  // Predicated region
  $region2: #{gnresidule_apply.50} parent=0 // pred_check
    _
  $region3: #{gnresidule_apply.50} parent=0 // pred_check_branch
    %13 = sbr.rel (0) target = $region5
  $region4: #{gnresidule_apply.50} parent=0 // pred_region
    _
  $region5: #{gnresidule_apply.50} parent=0 // pred_fallthru
    _
  // Predicated region
  $region6: #{gnresidule_apply.50} parent=0 // pred_check
    _
  $region7: #{gnresidule_apply.50} parent=0 // pred_check_branch
    %15 = sbr.rel (0) target = $region9
  $region8: #{gnresidule_apply.50} parent=0 // pred_region
    _
  $region9: #{gnresidule_apply.50} parent=0 // pred_fallthru
    _
  // Predicated region
  $region10: #{gnresidule_apply.50} parent=0 // pred_check
    _
  $region11: #{gnresidule_apply.50} parent=0 // pred_check_branch
    %17 = sbr.rel (0) target = $region13
  $region12: #{gnresidule_apply.50} parent=0 // pred_region
    _
  $region13: #{gnresidule_apply.50} parent=0 // pred_fallthru
    _
  // Predicated region
  $region14: #{gnresidule_apply.50} parent=0 // pred_check
    _
  $region15: #{gnresidule_apply.50} parent=0 // pred_check_branch
    %19 = sbr.rel (0) target = $region17
  $region16: #{gnresidule_apply.50} parent=0 // pred_region
    _
  $region17: #{gnresidule_apply.50} parent=0 // pred_fallthru
    _
  // Predicated region
  $region18: #{gnresidule_apply.50} parent=0 // pred_check
    _
  $region19: #{gnresidule_apply.50} parent=0 // pred_check_branch
    %21 = sbr.rel (0) target = $region21
  $region20: #{gnresidule_apply.50} parent=0 // pred_region
    _
  $region21: #{gnresidule_apply.50} parent=0 // pred_fallthru
    _
  // Predicated region
  $region22: #{gnresidule_apply.50} parent=0 // pred_check
    _
  $region23: #{gnresidule_apply.50} parent=0 // pred_check_branch
    %23 = sbr.rel (0) target = $region25
  $region24: #{gnresidule_apply.50} parent=0 // pred_region
    _
  $region25: #{gnresidule_apply.50} parent=0 // pred_fallthru
    _
  // Predicated region
  $region26: #{gnresidule_apply.50} parent=0 // pred_check
    _
  $region27: #{gnresidule_apply.50} parent=0 // pred_check_branch
    %25 = sbr.rel (0) target = $region29
  $region28: #{gnresidule_apply.50} parent=0 // pred_region
    _
  $region29: #{gnresidule_apply.50} parent=0 // pred_fallthru
    _
  %v27 = vld [vmem:[%s0] sm:$0xf]
  %v28 = vld [vmem:[%s0 + $0x4] sm:$0xf]
  %v29 = vld [vmem:[%s1] sm:$0xf]
  %v30 = vld [vmem:[%s1 + $0x4] sm:$0xf]
  %v31 = vld [vmem:[%s1 + $0x8] sm:$0xf]
  %v32 = vld [vmem:[%s1 + $0xc] sm:$0xf]
  %v33 = vld [vmem:[%s1 + $0x10] sm:$0xf]
  %v34 = vld [vmem:[%s1 + $0x14] sm:$0xf]
  %v35 = vld [vmem:[%s1 + $0x18] sm:$0xf]
  %v36 = vld [vmem:[%s1 + $0x1c] sm:$0xf]
  %v37 = vld [vmem:[%s2] sm:$0x1]
  %v39 = vlaneseq
  %v40 = vshrl.u32 %v39, 7
  %v41 = vsub.s32 0, %v40
  %v42 = vrot.slane %v37, %v41
  %v46 = vunpack.c.l.b16 %v27
  %v47 = vunpack.c.l.b16 %v28
  %v48 = vpack.c.b16 %v47, %v46
  %v57 = vunpack.c.l.b16 %v29
  %v58 = vunpack.c.l.b16 %v30
  %v59 = vunpack.c.l.b16 %v31
  %v60 = vunpack.c.l.b16 %v32
  %v61 = vunpack.c.l.b16 %v33
  %v62 = vunpack.c.l.b16 %v34
  %v63 = vunpack.c.l.b16 %v35
  %v64 = vunpack.c.l.b16 %v36
  %v65 = vpack.c.b16 %v58, %v57
  %v66 = vpack.c.b16 %v60, %v59
  %v67 = vpack.c.b16 %v62, %v61
  %v68 = vpack.c.b16 %v64, %v63
  %vm73 = vcmask 523264
  %v75 = vsel %vm73, %v48, 0
  %77 = vmatprep.subr.bf16.mxu0 0
  %78 = vmatpush1.bf16.msra.mxu0 %v65
  %79 = vmatprep.subr.bf16.mxu0 0
  %80 = vmatpush1.bf16.msra.mxu0 %v66
  %81 = vmatprep.subr.bf16.mxu0 0
  %82 = vmatpush1.bf16.msra.mxu0 %v67
  %83 = vmatprep.subr.bf16.mxu0 0
  %84 = vmatpush1.bf16.msra.mxu0 %v68
  %85 = vmatprep.subr.bf16.mxu0 0
  %86 = vmatpush1.bf16.msra.mxu0 0
  %87 = vmatprep.subr.bf16.mxu0 0
  %88 = vmatpush1.bf16.msra.mxu0 0
  %89 = vmatprep.subr.bf16.mxu0 0
  %90 = vmatpush1.bf16.msra.mxu0 0
  %91 = vmatprep.subr.bf16.mxu0 0
  %92 = vmatpush1.bf16.msra.mxu0 0
  %93 = vmatprep.subr.bf16.mxu0 0
  %94 = vmatpush1.bf16.msra.mxu0 0
  %95 = vmatprep.subr.bf16.mxu0 0
  %96 = vmatpush1.bf16.msra.mxu0 0
  %97 = vmatprep.subr.bf16.mxu0 0
  %98 = vmatpush1.bf16.msra.mxu0 0
  %99 = vmatprep.subr.bf16.mxu0 0
  %100 = vmatpush1.bf16.msra.mxu0 0
  %101 = vmatprep.subr.bf16.mxu0 0
  %102 = vmatpush1.bf16.msra.mxu0 0
  %103 = vmatprep.subr.bf16.mxu0 0
  %104 = vmatpush1.bf16.msra.mxu0 0
  %105 = vmatprep.subr.bf16.mxu0 0
  %106 = vmatpush1.bf16.msra.mxu0 0
  %107 = vmatprep.subr.bf16.mxu0 0
  %108 = vmatpush1.bf16.msra.mxu0 0
  %109 = vmatprep.mubr.bf16.mxu0 0
  %110 = vmatmul.mubr.bf16.gmra.mrb[0].mxu0 %v75
  %v111 = vpop.f32.mrb[0].mxu0
  %v112 = vadd.f32 %v42, %v111
  %v113 = vpop.f32.mrb[0].mxu0
  %v114 = vpop.f32.mrb[0].mxu0
  %v115 = vadd.f32 %v42, %v114
  %v116 = vpop.f32.mrb[0].mxu0
  %117 = vdwg.mxu0
  %v118 = vmax.f32 %v112, 0.0
  %v119 = vmax.f32 %v115, 0.0
  %v120 = vpack.c.bf16 %v119, %v118
  %v121 = vld [vmem:[%s3] sm:$0xf]
  %v122 = vld [vmem:[%s3 + $0x4] sm:$0xf]
  %v123 = vld [vmem:[%s3 + $0x8] sm:$0xf]
  %v124 = vld [vmem:[%s3 + $0xc] sm:$0xf]
  %v125 = vld [vmem:[%s4] sm:$0x1]
  %v127 = vlaneseq
  %v128 = vshrl.u32 %v127, 7
  %v129 = vsub.s32 0, %v128
  %v130 = vrot.slane %v125, %v129
  %v136 = vunpack.c.l.b16 %v121
  %v137 = vunpack.c.l.b16 %v122
  %v138 = vunpack.c.l.b16 %v123
  %v139 = vunpack.c.l.b16 %v124
  %v140 = vpack.c.b16 %v137, %v136
  %v141 = vpack.c.b16 %v139, %v138
  %vm144 = vcmask 261120
  %v146 = vsel %vm144, %v120, 0
  %148 = vmatprep.subr.bf16.mxu0 0
  %149 = vmatpush1.bf16.msra.mxu0 %v140
  %150 = vmatprep.subr.bf16.mxu0 0
  %151 = vmatpush1.bf16.msra.mxu0 %v141
  %152 = vmatprep.subr.bf16.mxu0 0
  %153 = vmatpush1.bf16.msra.mxu0 0
  %154 = vmatprep.subr.bf16.mxu0 0
  %155 = vmatpush1.bf16.msra.mxu0 0
  %156 = vmatprep.subr.bf16.mxu0 0
  %157 = vmatpush1.bf16.msra.mxu0 0
  %158 = vmatprep.subr.bf16.mxu0 0
  %159 = vmatpush1.bf16.msra.mxu0 0
  %160 = vmatprep.subr.bf16.mxu0 0
  %161 = vmatpush1.bf16.msra.mxu0 0
  %162 = vmatprep.subr.bf16.mxu0 0
  %163 = vmatpush1.bf16.msra.mxu0 0
  %164 = vmatprep.subr.bf16.mxu0 0
  %165 = vmatpush1.bf16.msra.mxu0 0
  %166 = vmatprep.subr.bf16.mxu0 0
  %167 = vmatpush1.bf16.msra.mxu0 0
  %168 = vmatprep.subr.bf16.mxu0 0
  %169 = vmatpush1.bf16.msra.mxu0 0
  %170 = vmatprep.subr.bf16.mxu0 0
  %171 = vmatpush1.bf16.msra.mxu0 0
  %172 = vmatprep.subr.bf16.mxu0 0
  %173 = vmatpush1.bf16.msra.mxu0 0
  %174 = vmatprep.subr.bf16.mxu0 0
  %175 = vmatpush1.bf16.msra.mxu0 0
  %176 = vmatprep.subr.bf16.mxu0 0
  %177 = vmatpush1.bf16.msra.mxu0 0
  %178 = vmatprep.subr.bf16.mxu0 0
  %179 = vmatpush1.bf16.msra.mxu0 0
  %180 = vmatprep.mubr.bf16.mxu0 0
  %181 = vmatmul.mubr.bf16.gmra.mrb[0].mxu0 %v146
  %v182 = vpop.f32.mrb[0].mxu0
  %v183 = vadd.f32 %v130, %v182
  %v184 = vpop.f32.mrb[0].mxu0
  %v185 = vpop.f32.mrb[0].mxu0
  %v186 = vadd.f32 %v130, %v185
  %v187 = vpop.f32.mrb[0].mxu0
  %188 = vdwg.mxu0
  %v189 = vmax.f32 %v183, 0.0
  %v190 = vmax.f32 %v186, 0.0
  %v191 = vpack.c.bf16 %v190, %v189
  %v192 = vld [vmem:[%s5] sm:$0xf]
  %v193 = vld [vmem:[%s5 + $0x4] sm:$0xf]
  %v194 = vld [vmem:[%s5 + $0x8] sm:$0xf]
  %v195 = vld [vmem:[%s5 + $0xc] sm:$0xf]
  %v196 = vld [vmem:[%s6] sm:$0x1]
  %v198 = vlaneseq
  %v199 = vshrl.u32 %v198, 7
  %v200 = vsub.s32 0, %v199
  %v201 = vrot.slane %v196, %v200
  %v207 = vunpack.c.l.b16 %v192
  %v208 = vunpack.c.l.b16 %v193
  %v209 = vunpack.c.l.b16 %v194
  %v210 = vunpack.c.l.b16 %v195
  %v211 = vpack.c.b16 %v208, %v207
  %v212 = vpack.c.b16 %v210, %v209
  %v216 = vsel %vm144, %v191, 0
  %218 = vmatprep.subr.bf16.mxu0 0
  %219 = vmatpush1.bf16.msra.mxu0 %v211
  %220 = vmatprep.subr.bf16.mxu0 0
  %221 = vmatpush1.bf16.msra.mxu0 %v212
  %222 = vmatprep.subr.bf16.mxu0 0
  %223 = vmatpush1.bf16.msra.mxu0 0
  %224 = vmatprep.subr.bf16.mxu0 0
  %225 = vmatpush1.bf16.msra.mxu0 0
  %226 = vmatprep.subr.bf16.mxu0 0
  %227 = vmatpush1.bf16.msra.mxu0 0
  %228 = vmatprep.subr.bf16.mxu0 0
  %229 = vmatpush1.bf16.msra.mxu0 0
  %230 = vmatprep.subr.bf16.mxu0 0
  %231 = vmatpush1.bf16.msra.mxu0 0
  %232 = vmatprep.subr.bf16.mxu0 0
  %233 = vmatpush1.bf16.msra.mxu0 0
  %234 = vmatprep.subr.bf16.mxu0 0
  %235 = vmatpush1.bf16.msra.mxu0 0
  %236 = vmatprep.subr.bf16.mxu0 0
  %237 = vmatpush1.bf16.msra.mxu0 0
  %238 = vmatprep.subr.bf16.mxu0 0
  %239 = vmatpush1.bf16.msra.mxu0 0
  %240 = vmatprep.subr.bf16.mxu0 0
  %241 = vmatpush1.bf16.msra.mxu0 0
  %242 = vmatprep.subr.bf16.mxu0 0
  %243 = vmatpush1.bf16.msra.mxu0 0
  %244 = vmatprep.subr.bf16.mxu0 0
  %245 = vmatpush1.bf16.msra.mxu0 0
  %246 = vmatprep.subr.bf16.mxu0 0
  %247 = vmatpush1.bf16.msra.mxu0 0
  %248 = vmatprep.subr.bf16.mxu0 0
  %249 = vmatpush1.bf16.msra.mxu0 0
  %250 = vmatprep.mubr.bf16.mxu0 0
  %251 = vmatmul.mubr.bf16.gmra.mrb[0].mxu0 %v216
  %v252 = vpop.f32.mrb[0].mxu0
  %v253 = vadd.f32 %v201, %v252
  %v254 = vpop.f32.mrb[0].mxu0
  %v255 = vpop.f32.mrb[0].mxu0
  %v256 = vadd.f32 %v201, %v255
  %v257 = vpop.f32.mrb[0].mxu0
  %258 = vdwg.mxu0
  %v259 = vpack.c.bf16 %v256, %v253
  %v261 = vunpack.c.l.b16 %v259
  %v262 = vunpack.c.h.b16 %v259
  %v263 = vpack.c.b16 %v261, %v261
  %v264 = vpack.c.b16 %v262, %v262
  %267 = vst [vmem:[%s7] sm:$0xf] %v263
  %268 = vst [vmem:[%s7 + $0x4] sm:$0xf] %v264
  // Predicated region
  $region30: #{gnresidule_apply.50} parent=0 // pred_check
    _
  $region31: #{gnresidule_apply.50} parent=0 // pred_check_branch
    %270 = sbr.rel (0) target = $region33
  $region32: #{gnresidule_apply.50} parent=0 // pred_region
    _
  $region33: #{gnresidule_apply.50} parent=0 // pred_fallthru
    _
  // Predicated region
  $region34: #{gnresidule_apply.50} parent=0 // pred_check
    _
  $region35: #{gnresidule_apply.50} parent=0 // pred_check_branch
    %272 = sbr.rel (0) target = $region37
  $region36: #{gnresidule_apply.50} parent=0 // pred_region
    _
  $region37: #{gnresidule_apply.50} parent=0 // pred_fallthru
    _

// kernel: gnresidule_apply.51
$region0: #{gnresidule_apply.51}
  #allocation0 [shape = 'u32[]', space=smem, size = 0x4, offset = 0x4, fixed_abs, tag = 'smem constant byte address 0x4 - core index']
  #allocation1 [shape = 'u32[144,128]{1,0:T(1,128)}', space=vmem, size = 0x12000, scoped, tag = 'internal scratch']
  %s0 = inlined_call_operand.vmem [shape: bf16[32,108], index: 0, kind: input, shape index: {}]
  %s1 = inlined_call_operand.vmem [shape: s32[32,1], index: 1, kind: input, shape index: {}]
  %s2 = inlined_call_operand.vmem [shape: bf16[2,32], index: 2, kind: input, shape index: {}]
  %s3 = inlined_call_operand.vmem [shape: bf16[108,32], index: 3, kind: input, shape index: {}]
  %s4 = inlined_call_operand.vmem [shape: f32[1,32], index: 4, kind: input, shape index: {}]
  %s5 = inlined_call_operand.vmem [shape: bf16[32,32], index: 5, kind: input, shape index: {}]
  %s6 = inlined_call_operand.vmem [shape: f32[1,32], index: 6, kind: input, shape index: {}]
  %s7 = inlined_call_operand.vmem [shape: bf16[32,128], index: 7, kind: input, shape index: {}]
  %s8 = inlined_call_operand.vmem [shape: f32[1,128], index: 8, kind: input, shape index: {}]
  %s9 = inlined_call_operand.vmem [shape: bf16[128,128], index: 9, kind: input, shape index: {}]
  %s10 = inlined_call_operand.vmem [shape: f32[1,128], index: 10, kind: input, shape index: {}]
  %s11 = inlined_call_operand.vmem [shape: bf16[32,128], index: 11, kind: output, shape index: {0}]
  %s12 = inlined_call_operand.vmem [shape: bf16[32,128], index: 12, kind: output, shape index: {1}]
  %13 = xla_tuple %s11, %s12
  %s14 = sld [smem:[#allocation0]]
  $region62: #{gnresidule_apply.51} parent=0
    _
  %s16 = ssub.s32 1, %s14
  %s17 = scalar_select 0, %s16, %s14
  // Predicated region
  $region2: #{gnresidule_apply.51} parent=0 // pred_check
    _
  $region3: #{gnresidule_apply.51} parent=0 // pred_check_branch
    %19 = sbr.rel (0) target = $region5
  $region4: #{gnresidule_apply.51} parent=0 // pred_region
    _
  $region5: #{gnresidule_apply.51} parent=0 // pred_fallthru
    _
  // Predicated region
  $region6: #{gnresidule_apply.51} parent=0 // pred_check
    _
  $region7: #{gnresidule_apply.51} parent=0 // pred_check_branch
    %21 = sbr.rel (0) target = $region9
  $region8: #{gnresidule_apply.51} parent=0 // pred_region
    _
  $region9: #{gnresidule_apply.51} parent=0 // pred_fallthru
    _
  // Predicated region
  $region10: #{gnresidule_apply.51} parent=0 // pred_check
    _
  $region11: #{gnresidule_apply.51} parent=0 // pred_check_branch
    %23 = sbr.rel (0) target = $region13
  $region12: #{gnresidule_apply.51} parent=0 // pred_region
    _
  $region13: #{gnresidule_apply.51} parent=0 // pred_fallthru
    _
  // Predicated region
  $region14: #{gnresidule_apply.51} parent=0 // pred_check
    _
  $region15: #{gnresidule_apply.51} parent=0 // pred_check_branch
    %25 = sbr.rel (0) target = $region17
  $region16: #{gnresidule_apply.51} parent=0 // pred_region
    _
  $region17: #{gnresidule_apply.51} parent=0 // pred_fallthru
    _
  // Predicated region
  $region18: #{gnresidule_apply.51} parent=0 // pred_check
    _
  $region19: #{gnresidule_apply.51} parent=0 // pred_check_branch
    %27 = sbr.rel (0) target = $region21
  $region20: #{gnresidule_apply.51} parent=0 // pred_region
    _
  $region21: #{gnresidule_apply.51} parent=0 // pred_fallthru
    _
  // Predicated region
  $region22: #{gnresidule_apply.51} parent=0 // pred_check
    _
  $region23: #{gnresidule_apply.51} parent=0 // pred_check_branch
    %29 = sbr.rel (0) target = $region25
  $region24: #{gnresidule_apply.51} parent=0 // pred_region
    _
  $region25: #{gnresidule_apply.51} parent=0 // pred_fallthru
    _
  // Predicated region
  $region26: #{gnresidule_apply.51} parent=0 // pred_check
    _
  $region27: #{gnresidule_apply.51} parent=0 // pred_check_branch
    %31 = sbr.rel (0) target = $region29
  $region28: #{gnresidule_apply.51} parent=0 // pred_region
    _
  $region29: #{gnresidule_apply.51} parent=0 // pred_fallthru
    _
  // Predicated region
  $region30: #{gnresidule_apply.51} parent=0 // pred_check
    _
  $region31: #{gnresidule_apply.51} parent=0 // pred_check_branch
    %33 = sbr.rel (0) target = $region33
  $region32: #{gnresidule_apply.51} parent=0 // pred_region
    _
  $region33: #{gnresidule_apply.51} parent=0 // pred_fallthru
    _
  // Predicated region
  $region34: #{gnresidule_apply.51} parent=0 // pred_check
    _
  $region35: #{gnresidule_apply.51} parent=0 // pred_check_branch
    %35 = sbr.rel (0) target = $region37
  $region36: #{gnresidule_apply.51} parent=0 // pred_region
    _
  $region37: #{gnresidule_apply.51} parent=0 // pred_fallthru
    _
  // Predicated region
  $region38: #{gnresidule_apply.51} parent=0 // pred_check
    _
  $region39: #{gnresidule_apply.51} parent=0 // pred_check_branch
    %37 = sbr.rel (0) target = $region41
  $region40: #{gnresidule_apply.51} parent=0 // pred_region
    _
  $region41: #{gnresidule_apply.51} parent=0 // pred_fallthru
    _
  // Predicated region
  $region42: #{gnresidule_apply.51} parent=0 // pred_check
    _
  $region43: #{gnresidule_apply.51} parent=0 // pred_check_branch
    %39 = sbr.rel (0) target = $region45
  $region44: #{gnresidule_apply.51} parent=0 // pred_region
    _
  $region45: #{gnresidule_apply.51} parent=0 // pred_fallthru
    _
  %v41 = vld [vmem:[%s0] sm:$0xf]
  %v42 = vld [vmem:[%s0 + $0x4] sm:$0xf]
  %v43 = vld [vmem:[%s0 + $0x8] sm:$0xf]
  %v44 = vld [vmem:[%s0 + $0xc] sm:$0xf]
  %v45 = vld [vmem:[%s3] sm:$0xf]
  %v46 = vld [vmem:[%s3 + $0x4] sm:$0xf]
  %v47 = vld [vmem:[%s3 + $0x8] sm:$0xf]
  %v48 = vld [vmem:[%s3 + $0xc] sm:$0xf]
  %v49 = vld [vmem:[%s3 + $0x10] sm:$0xf]
  %v50 = vld [vmem:[%s3 + $0x14] sm:$0xf]
  %v51 = vld [vmem:[%s3 + $0x18] sm:$0xf]
  %v52 = vld [vmem:[%s3 + $0x1c] sm:$0xf]
  %v53 = vld [vmem:[%s3 + $0x20] sm:$0xf]
  %v54 = vld [vmem:[%s3 + $0x24] sm:$0xf]
  %v55 = vld [vmem:[%s3 + $0x28] sm:$0xf]
  %v56 = vld [vmem:[%s3 + $0x2c] sm:$0xf]
  %v57 = vld [vmem:[%s3 + $0x30] sm:$0xf]
  %v58 = vld [vmem:[%s3 + $0x34] sm:$0x3]
  %v59 = vld [vmem:[%s1] sm:$0xff]
  %v60 = vld [vmem:[%s1 + $0x8] sm:$0xff]
  %v61 = vld [vmem:[%s1 + $0x10] sm:$0xff]
  %v62 = vld [vmem:[%s1 + $0x18] sm:$0xff]
  %v63 = vlaneseq
  %v64 = vand.u32 %v63, 127
  %65 = vset.pattern.permute.xlu0 0
  %66 = vperm.xlu0 %65, %v59
  %v67 = vpop.permute.xlu0 %66
  %68 = vset.pattern.permute.xlu0 0
  %69 = vperm.xlu0 %68, %v60
  %v70 = vpop.permute.xlu0 %69
  %71 = vset.pattern.permute.xlu0 0
  %72 = vperm.xlu0 %71, %v61
  %v73 = vpop.permute.xlu0 %72
  %74 = vset.pattern.permute.xlu0 0
  %75 = vperm.xlu0 %74, %v62
  %v76 = vpop.permute.xlu0 %75
  %vm77 = vcmp.eq.s32.totalorder %v64, %v67
  %vm78 = vcmp.eq.s32.totalorder %v64, %v70
  %vm79 = vcmp.eq.s32.totalorder %v64, %v73
  %vm80 = vcmp.eq.s32.totalorder %v64, %v76
  %v81 = vsel %vm77, 1, 0
  %v82 = vsel %vm78, 1, 0
  %v83 = vsel %vm79, 1, 0
  %v84 = vsel %vm80, 1, 0
  %v85 = vcvt.s32.f32 %v81
  %v86 = vcvt.s32.f32 %v82
  %v87 = vcvt.s32.f32 %v83
  %v88 = vcvt.s32.f32 %v84
  %v89 = vpack.c.bf16 %v86, %v85
  %v90 = vpack.c.bf16 %v88, %v87
  %v91 = vld [vmem:[%s2] sm:$0x1]
  %vm92 = vcmask 15360
  %v94 = vsel %vm92, %v89, 0
  %v97 = vsel %vm92, %v90, 0
  %vm99 = vcmask 1040384
  %v101 = vsel %vm99, %v91, 0
  %103 = vmatprep.subr.bf16.mxu0 0
  %104 = vmatpush1.bf16.msra.mxu0 %v101
  %105 = vmatprep.subr.bf16.mxu0 0
  %106 = vmatpush1.bf16.msra.mxu0 0
  %107 = vmatprep.subr.bf16.mxu0 0
  %108 = vmatpush1.bf16.msra.mxu0 0
  %109 = vmatprep.subr.bf16.mxu0 0
  %110 = vmatpush1.bf16.msra.mxu0 0
  %111 = vmatprep.subr.bf16.mxu0 0
  %112 = vmatpush1.bf16.msra.mxu0 0
  %113 = vmatprep.subr.bf16.mxu0 0
  %114 = vmatpush1.bf16.msra.mxu0 0
  %115 = vmatprep.subr.bf16.mxu0 0
  %116 = vmatpush1.bf16.msra.mxu0 0
  %117 = vmatprep.subr.bf16.mxu0 0
  %118 = vmatpush1.bf16.msra.mxu0 0
  %119 = vmatprep.subr.bf16.mxu0 0
  %120 = vmatpush1.bf16.msra.mxu0 0
  %121 = vmatprep.subr.bf16.mxu0 0
  %122 = vmatpush1.bf16.msra.mxu0 0
  %123 = vmatprep.subr.bf16.mxu0 0
  %124 = vmatpush1.bf16.msra.mxu0 0
  %125 = vmatprep.subr.bf16.mxu0 0
  %126 = vmatpush1.bf16.msra.mxu0 0
  %127 = vmatprep.subr.bf16.mxu0 0
  %128 = vmatpush1.bf16.msra.mxu0 0
  %129 = vmatprep.subr.bf16.mxu0 0
  %130 = vmatpush1.bf16.msra.mxu0 0
  %131 = vmatprep.subr.bf16.mxu0 0
  %132 = vmatpush1.bf16.msra.mxu0 0
  %133 = vmatprep.subr.bf16.mxu0 0
  %134 = vmatpush1.bf16.msra.mxu0 0
  %135 = vmatprep.mubr.bf16.mxu0 0
  %136 = vmatmul.mubr.bf16.gmra.mrb[0].mxu0 %v94
  %v137 = vpop.f32.mrb[0].mxu0
  %v138 = vadd.f32 0.0, %v137
  %v139 = vpop.f32.mrb[0].mxu0
  %v140 = vpop.f32.mrb[0].mxu0
  %v141 = vadd.f32 0.0, %v140
  %v142 = vpop.f32.mrb[0].mxu0
  %143 = vmatprep.mubr.bf16.mxu0 0
  %144 = vmatmul.mubr.bf16.gmra.mrb[0].mxu0 %v97
  %v145 = vpop.f32.mrb[0].mxu0
  %v146 = vadd.f32 0.0, %v145
  %v147 = vpop.f32.mrb[0].mxu0
  %v148 = vpop.f32.mrb[0].mxu0
  %v149 = vadd.f32 0.0, %v148
  %v150 = vpop.f32.mrb[0].mxu0
  %151 = vdwg.mxu0
  %v156 = vunpack.c.l.b16 %v41
  %v157 = vunpack.c.l.b16 %v42
  %v158 = vunpack.c.l.b16 %v43
  %v159 = vunpack.c.l.b16 %v44
  %v160 = vpack.c.b16 %v157, %v156
  %v161 = vpack.c.b16 %v159, %v158
  %v176 = vunpack.c.l.b16 %v45
  %v177 = vunpack.c.l.b16 %v46
  %v178 = vunpack.c.l.b16 %v47
  %v179 = vunpack.c.l.b16 %v48
  %v180 = vunpack.c.l.b16 %v49
  %v181 = vunpack.c.l.b16 %v50
  %v182 = vunpack.c.l.b16 %v51
  %v183 = vunpack.c.l.b16 %v52
  %v184 = vunpack.c.l.b16 %v53
  %v185 = vunpack.c.l.b16 %v54
  %v186 = vunpack.c.l.b16 %v55
  %v187 = vunpack.c.l.b16 %v56
  %v188 = vunpack.c.l.b16 %v57
  %v189 = vunpack.c.l.b16 %v58
  %v190 = vpack.c.b16 %v177, %v176
  %v191 = vpack.c.b16 %v179, %v178
  %v192 = vpack.c.b16 %v181, %v180
  %v193 = vpack.c.b16 %v183, %v182
  %v194 = vpack.c.b16 %v185, %v184
  %v195 = vpack.c.b16 %v187, %v186
  %v196 = vpack.c.b16 %v189, %v188
  %vm203 = vcmask 883712
  %v205 = vsel %vm203, %v160, 0
  %v208 = vsel %vm203, %v161, 0
  %vm210 = vcmask 1045504
  %v212 = vsel %vm210, %v196, 0
  %214 = vmatprep.subr.bf16.mxu0 0
  %215 = vmatpush1.bf16.msra.mxu0 %v190
  %216 = vmatprep.subr.bf16.mxu0 0
  %217 = vmatpush1.bf16.msra.mxu0 %v191
  %218 = vmatprep.subr.bf16.mxu0 0
  %219 = vmatpush1.bf16.msra.mxu0 %v192
  %220 = vmatprep.subr.bf16.mxu0 0
  %221 = vmatpush1.bf16.msra.mxu0 %v193
  %222 = vmatprep.subr.bf16.mxu0 0
  %223 = vmatpush1.bf16.msra.mxu0 %v194
  %224 = vmatprep.subr.bf16.mxu0 0
  %225 = vmatpush1.bf16.msra.mxu0 %v195
  %226 = vmatprep.subr.bf16.mxu0 0
  %227 = vmatpush1.bf16.msra.mxu0 %v212
  %228 = vmatprep.subr.bf16.mxu0 0
  %229 = vmatpush1.bf16.msra.mxu0 0
  %230 = vmatprep.subr.bf16.mxu0 0
  %231 = vmatpush1.bf16.msra.mxu0 0
  %232 = vmatprep.subr.bf16.mxu0 0
  %233 = vmatpush1.bf16.msra.mxu0 0
  %234 = vmatprep.subr.bf16.mxu0 0
  %235 = vmatpush1.bf16.msra.mxu0 0
  %236 = vmatprep.subr.bf16.mxu0 0
  %237 = vmatpush1.bf16.msra.mxu0 0
  %238 = vmatprep.subr.bf16.mxu0 0
  %239 = vmatpush1.bf16.msra.mxu0 0
  %240 = vmatprep.subr.bf16.mxu0 0
  %241 = vmatpush1.bf16.msra.mxu0 0
  %242 = vmatprep.subr.bf16.mxu0 0
  %243 = vmatpush1.bf16.msra.mxu0 0
  %244 = vmatprep.subr.bf16.mxu0 0
  %245 = vmatpush1.bf16.msra.mxu0 0
  %246 = vmatprep.mubr.bf16.mxu0 0
  %247 = vmatmul.mubr.bf16.gmra.mrb[0].mxu0 %v205
  %v248 = vpop.f32.mrb[0].mxu0
  %v249 = vadd.f32 %v138, %v248
  %v250 = vpop.f32.mrb[0].mxu0
  %v251 = vpop.f32.mrb[0].mxu0
  %v252 = vadd.f32 %v141, %v251
  %v253 = vpop.f32.mrb[0].mxu0
  %254 = vmatprep.mubr.bf16.mxu0 0
  %255 = vmatmul.mubr.bf16.gmra.mrb[0].mxu0 %v208
  %v256 = vpop.f32.mrb[0].mxu0
  %v257 = vadd.f32 %v146, %v256
  %v258 = vpop.f32.mrb[0].mxu0
  %v259 = vpop.f32.mrb[0].mxu0
  %v260 = vadd.f32 %v149, %v259
  %v261 = vpop.f32.mrb[0].mxu0
  %262 = vdwg.mxu0
  %v263 = vld [vmem:[%s4] sm:$0x1]
  %v265 = vlaneseq
  %v266 = vshrl.u32 %v265, 7
  %v267 = vsub.s32 0, %v266
  %v268 = vrot.slane %v263, %v267
  %v270 = vadd.f32 %v249, %v268
  %v271 = vadd.f32 %v252, %v268
  %v272 = vadd.f32 %v257, %v268
  %v273 = vadd.f32 %v260, %v268
  %v274 = vmax.f32 %v270, 0.0
  %v275 = vmax.f32 %v271, 0.0
  %v276 = vmax.f32 %v272, 0.0
  %v277 = vmax.f32 %v273, 0.0
  %v278 = vpack.c.bf16 %v275, %v274
  %v279 = vpack.c.bf16 %v277, %v276
  %v280 = vld [vmem:[%s5] sm:$0xf]
  %v281 = vld [vmem:[%s5 + $0x4] sm:$0xf]
  %v282 = vld [vmem:[%s5 + $0x8] sm:$0xf]
  %v283 = vld [vmem:[%s5 + $0xc] sm:$0xf]
  %v284 = vld [vmem:[%s6] sm:$0x1]
  %v286 = vlaneseq
  %v287 = vshrl.u32 %v286, 7
  %v288 = vsub.s32 0, %v287
  %v289 = vrot.slane %v284, %v288
  %v295 = vunpack.c.l.b16 %v280
  %v296 = vunpack.c.l.b16 %v281
  %v297 = vunpack.c.l.b16 %v282
  %v298 = vunpack.c.l.b16 %v283
  %v299 = vpack.c.b16 %v296, %v295
  %v300 = vpack.c.b16 %v298, %v297
  %vm303 = vcmask 261120
  %v305 = vsel %vm303, %v278, 0
  %v308 = vsel %vm303, %v279, 0
  %310 = vmatprep.subr.bf16.mxu0 0
  %311 = vmatpush1.bf16.msra.mxu0 %v299
  %312 = vmatprep.subr.bf16.mxu0 0
  %313 = vmatpush1.bf16.msra.mxu0 %v300
  %314 = vmatprep.subr.bf16.mxu0 0
  %315 = vmatpush1.bf16.msra.mxu0 0
  %316 = vmatprep.subr.bf16.mxu0 0
  %317 = vmatpush1.bf16.msra.mxu0 0
  %318 = vmatprep.subr.bf16.mxu0 0
  %319 = vmatpush1.bf16.msra.mxu0 0
  %320 = vmatprep.subr.bf16.mxu0 0
  %321 = vmatpush1.bf16.msra.mxu0 0
  %322 = vmatprep.subr.bf16.mxu0 0
  %323 = vmatpush1.bf16.msra.mxu0 0
  %324 = vmatprep.subr.bf16.mxu0 0
  %325 = vmatpush1.bf16.msra.mxu0 0
  %326 = vmatprep.subr.bf16.mxu0 0
  %327 = vmatpush1.bf16.msra.mxu0 0
  %328 = vmatprep.subr.bf16.mxu0 0
  %329 = vmatpush1.bf16.msra.mxu0 0
  %330 = vmatprep.subr.bf16.mxu0 0
  %331 = vmatpush1.bf16.msra.mxu0 0
  %332 = vmatprep.subr.bf16.mxu0 0
  %333 = vmatpush1.bf16.msra.mxu0 0
  %334 = vmatprep.subr.bf16.mxu0 0
  %335 = vmatpush1.bf16.msra.mxu0 0
  %336 = vmatprep.subr.bf16.mxu0 0
  %337 = vmatpush1.bf16.msra.mxu0 0
  %338 = vmatprep.subr.bf16.mxu0 0
  %339 = vmatpush1.bf16.msra.mxu0 0
  %340 = vmatprep.subr.bf16.mxu0 0
  %341 = vmatpush1.bf16.msra.mxu0 0
  %342 = vmatprep.mubr.bf16.mxu0 0
  %343 = vmatmul.mubr.bf16.gmra.mrb[0].mxu0 %v305
  %v344 = vpop.f32.mrb[0].mxu0
  %v345 = vadd.f32 %v289, %v344
  %v346 = vpop.f32.mrb[0].mxu0
  %v347 = vpop.f32.mrb[0].mxu0
  %v348 = vadd.f32 %v289, %v347
  %v349 = vpop.f32.mrb[0].mxu0
  %350 = vmatprep.mubr.bf16.mxu0 0
  %351 = vmatmul.mubr.bf16.gmra.mrb[0].mxu0 %v308
  %v352 = vpop.f32.mrb[0].mxu0
  %v353 = vadd.f32 %v289, %v352
  %v354 = vpop.f32.mrb[0].mxu0
  %v355 = vpop.f32.mrb[0].mxu0
  %v356 = vadd.f32 %v289, %v355
  %v357 = vpop.f32.mrb[0].mxu0
  %358 = vdwg.mxu0
  %v359 = vmax.f32 %v345, 0.0
  %v360 = vmax.f32 %v348, 0.0
  %v361 = vmax.f32 %v353, 0.0
  %v362 = vmax.f32 %v356, 0.0
  %v363 = vpack.c.bf16 %v360, %v359
  %v364 = vpack.c.bf16 %v362, %v361
  %v365 = vld [vmem:[%s7] sm:$0xf]
  %v366 = vld [vmem:[%s7 + $0x4] sm:$0xf]
  %v367 = vld [vmem:[%s7 + $0x8] sm:$0xf]
  %v368 = vld [vmem:[%s7 + $0xc] sm:$0xf]
  %v369 = vld [vmem:[%s8] sm:$0x1]
  %v371 = vlaneseq
  %v372 = vshrl.u32 %v371, 7
  %v373 = vsub.s32 0, %v372
  %v374 = vrot.slane %v369, %v373
  %v380 = vunpack.c.l.b16 %v365
  %v381 = vunpack.c.l.b16 %v366
  %v382 = vunpack.c.l.b16 %v367
  %v383 = vunpack.c.l.b16 %v368
  %v384 = vpack.c.b16 %v381, %v380
  %v385 = vpack.c.b16 %v383, %v382
  %v389 = vsel %vm303, %v363, 0
  %v392 = vsel %vm303, %v364, 0
  %394 = vmatprep.subr.bf16.mxu0 0
  %395 = vmatpush1.bf16.msra.mxu0 %v384
  %396 = vmatprep.subr.bf16.mxu0 0
  %397 = vmatpush1.bf16.msra.mxu0 %v385
  %398 = vmatprep.subr.bf16.mxu0 0
  %399 = vmatpush1.bf16.msra.mxu0 0
  %400 = vmatprep.subr.bf16.mxu0 0
  %401 = vmatpush1.bf16.msra.mxu0 0
  %402 = vmatprep.subr.bf16.mxu0 0
  %403 = vmatpush1.bf16.msra.mxu0 0
  %404 = vmatprep.subr.bf16.mxu0 0
  %405 = vmatpush1.bf16.msra.mxu0 0
  %406 = vmatprep.subr.bf16.mxu0 0
  %407 = vmatpush1.bf16.msra.mxu0 0
  %408 = vmatprep.subr.bf16.mxu0 0
  %409 = vmatpush1.bf16.msra.mxu0 0
  %410 = vmatprep.subr.bf16.mxu0 0
  %411 = vmatpush1.bf16.msra.mxu0 0
  %412 = vmatprep.subr.bf16.mxu0 0
  %413 = vmatpush1.bf16.msra.mxu0 0
  %414 = vmatprep.subr.bf16.mxu0 0
  %415 = vmatpush1.bf16.msra.mxu0 0
  %416 = vmatprep.subr.bf16.mxu0 0
  %417 = vmatpush1.bf16.msra.mxu0 0
  %418 = vmatprep.subr.bf16.mxu0 0
  %419 = vmatpush1.bf16.msra.mxu0 0
  %420 = vmatprep.subr.bf16.mxu0 0
  %421 = vmatpush1.bf16.msra.mxu0 0
  %422 = vmatprep.subr.bf16.mxu0 0
  %423 = vmatpush1.bf16.msra.mxu0 0
  %424 = vmatprep.subr.bf16.mxu0 0
  %425 = vmatpush1.bf16.msra.mxu0 0
  %426 = vmatprep.mubr.bf16.mxu0 0
  %427 = vmatmul.mubr.bf16.gmra.mrb[0].mxu0 %v389
  %v428 = vpop.f32.mrb[0].mxu0
  %v429 = vadd.f32 %v374, %v428
  %v430 = vpop.f32.mrb[0].mxu0
  %v431 = vpop.f32.mrb[0].mxu0
  %v432 = vadd.f32 %v374, %v431
  %v433 = vpop.f32.mrb[0].mxu0
  %434 = vmatprep.mubr.bf16.mxu0 0
  %435 = vmatmul.mubr.bf16.gmra.mrb[0].mxu0 %v392
  %v436 = vpop.f32.mrb[0].mxu0
  %v437 = vadd.f32 %v374, %v436
  %v438 = vpop.f32.mrb[0].mxu0
  %v439 = vpop.f32.mrb[0].mxu0
  %v440 = vadd.f32 %v374, %v439
  %v441 = vpop.f32.mrb[0].mxu0
  %442 = vdwg.mxu0
  %v443 = vpack.c.bf16 %v432, %v429
  %v444 = vpack.c.bf16 %v440, %v437
  %v447 = vunpack.c.l.b16 %v443
  %v448 = vunpack.c.h.b16 %v443
  %v449 = vunpack.c.l.b16 %v444
  %v450 = vunpack.c.h.b16 %v444
  %v451 = vpack.c.b16 %v447, %v447
  %v452 = vpack.c.b16 %v448, %v448
  %v453 = vpack.c.b16 %v449, %v449
  %v454 = vpack.c.b16 %v450, %v450
  %459 = vst [vmem:[%s11] sm:$0xf] %v451
  %460 = vst [vmem:[%s11 + $0x4] sm:$0xf] %v452
  %461 = vst [vmem:[%s11 + $0x8] sm:$0xf] %v453
  %462 = vst [vmem:[%s11 + $0xc] sm:$0xf] %v454
  %v463 = vld [vmem:[%s9] sm:$0xf]
  %v464 = vld [vmem:[%s9 + $0x4] sm:$0xf]
  %v465 = vld [vmem:[%s9 + $0x8] sm:$0xf]
  %v466 = vld [vmem:[%s9 + $0xc] sm:$0xf]
  %v467 = vld [vmem:[%s9 + $0x10] sm:$0xf]
  %v468 = vld [vmem:[%s9 + $0x14] sm:$0xf]
  %v469 = vld [vmem:[%s9 + $0x18] sm:$0xf]
  %v470 = vld [vmem:[%s9 + $0x1c] sm:$0xf]
  %v471 = vld [vmem:[%s9 + $0x20] sm:$0xf]
  %v472 = vld [vmem:[%s9 + $0x24] sm:$0xf]
  %v473 = vld [vmem:[%s9 + $0x28] sm:$0xf]
  %v474 = vld [vmem:[%s9 + $0x2c] sm:$0xf]
  %v475 = vld [vmem:[%s9 + $0x30] sm:$0xf]
  %v476 = vld [vmem:[%s9 + $0x34] sm:$0xf]
  %v477 = vld [vmem:[%s9 + $0x38] sm:$0xf]
  %v478 = vld [vmem:[%s9 + $0x3c] sm:$0xf]
  %v479 = vld [vmem:[%s10] sm:$0x1]
  %v481 = vlaneseq
  %v482 = vshrl.u32 %v481, 7
  %v483 = vsub.s32 0, %v482
  %v484 = vrot.slane %v479, %v483
  %v502 = vunpack.c.l.b16 %v463
  %v503 = vunpack.c.l.b16 %v464
  %v504 = vunpack.c.l.b16 %v465
  %v505 = vunpack.c.l.b16 %v466
  %v506 = vunpack.c.l.b16 %v467
  %v507 = vunpack.c.l.b16 %v468
  %v508 = vunpack.c.l.b16 %v469
  %v509 = vunpack.c.l.b16 %v470
  %v510 = vunpack.c.l.b16 %v471
  %v511 = vunpack.c.l.b16 %v472
  %v512 = vunpack.c.l.b16 %v473
  %v513 = vunpack.c.l.b16 %v474
  %v514 = vunpack.c.l.b16 %v475
  %v515 = vunpack.c.l.b16 %v476
  %v516 = vunpack.c.l.b16 %v477
  %v517 = vunpack.c.l.b16 %v478
  %v518 = vpack.c.b16 %v503, %v502
  %v519 = vpack.c.b16 %v505, %v504
  %v520 = vpack.c.b16 %v507, %v506
  %v521 = vpack.c.b16 %v509, %v508
  %v522 = vpack.c.b16 %v511, %v510
  %v523 = vpack.c.b16 %v513, %v512
  %v524 = vpack.c.b16 %v515, %v514
  %v525 = vpack.c.b16 %v517, %v516
  %534 = vmatprep.subr.bf16.mxu0 0
  %535 = vmatpush1.bf16.msra.mxu0 %v518
  %536 = vmatprep.subr.bf16.mxu0 0
  %537 = vmatpush1.bf16.msra.mxu0 %v519
  %538 = vmatprep.subr.bf16.mxu0 0
  %539 = vmatpush1.bf16.msra.mxu0 %v520
  %540 = vmatprep.subr.bf16.mxu0 0
  %541 = vmatpush1.bf16.msra.mxu0 %v521
  %542 = vmatprep.subr.bf16.mxu0 0
  %543 = vmatpush1.bf16.msra.mxu0 %v522
  %544 = vmatprep.subr.bf16.mxu0 0
  %545 = vmatpush1.bf16.msra.mxu0 %v523
  %546 = vmatprep.subr.bf16.mxu0 0
  %547 = vmatpush1.bf16.msra.mxu0 %v524
  %548 = vmatprep.subr.bf16.mxu0 0
  %549 = vmatpush1.bf16.msra.mxu0 %v525
  %550 = vmatprep.subr.bf16.mxu0 0
  %551 = vmatpush1.bf16.msra.mxu0 0
  %552 = vmatprep.subr.bf16.mxu0 0
  %553 = vmatpush1.bf16.msra.mxu0 0
  %554 = vmatprep.subr.bf16.mxu0 0
  %555 = vmatpush1.bf16.msra.mxu0 0
  %556 = vmatprep.subr.bf16.mxu0 0
  %557 = vmatpush1.bf16.msra.mxu0 0
  %558 = vmatprep.subr.bf16.mxu0 0
  %559 = vmatpush1.bf16.msra.mxu0 0
  %560 = vmatprep.subr.bf16.mxu0 0
  %561 = vmatpush1.bf16.msra.mxu0 0
  %562 = vmatprep.subr.bf16.mxu0 0
  %563 = vmatpush1.bf16.msra.mxu0 0
  %564 = vmatprep.subr.bf16.mxu0 0
  %565 = vmatpush1.bf16.msra.mxu0 0
  %566 = vmatprep.mubr.bf16.mxu0 0
  %567 = vmatmul.mubr.bf16.gmra.mrb[0].mxu0 %v443
  %v568 = vpop.f32.mrb[0].mxu0
  %v569 = vadd.f32 %v484, %v568
  %v570 = vpop.f32.mrb[0].mxu0
  %v571 = vpop.f32.mrb[0].mxu0
  %v572 = vadd.f32 %v484, %v571
  %v573 = vpop.f32.mrb[0].mxu0
  %574 = vmatprep.mubr.bf16.mxu0 0
  %575 = vmatmul.mubr.bf16.gmra.mrb[0].mxu0 %v444
  %v576 = vpop.f32.mrb[0].mxu0
  %v577 = vadd.f32 %v484, %v576
  %v578 = vpop.f32.mrb[0].mxu0
  %v579 = vpop.f32.mrb[0].mxu0
  %v580 = vadd.f32 %v484, %v579
  %v581 = vpop.f32.mrb[0].mxu0
  %582 = vdwg.mxu0
  %v583 = vpack.c.bf16 %v572, %v569
  %v584 = vpack.c.bf16 %v580, %v577
  %v587 = vunpack.c.l.b16 %v583
  %v588 = vunpack.c.h.b16 %v583
  %v589 = vunpack.c.l.b16 %v584
  %v590 = vunpack.c.h.b16 %v584
  %v591 = vpack.c.b16 %v587, %v587
  %v592 = vpack.c.b16 %v588, %v588
  %v593 = vpack.c.b16 %v589, %v589
  %v594 = vpack.c.b16 %v590, %v590
  %599 = vst [vmem:[%s12] sm:$0xf] %v591
  %600 = vst [vmem:[%s12 + $0x4] sm:$0xf] %v592
  %601 = vst [vmem:[%s12 + $0x8] sm:$0xf] %v593
  %602 = vst [vmem:[%s12 + $0xc] sm:$0xf] %v594
  // Predicated region
  $region46: #{gnresidule_apply.51} parent=0 // pred_check
    _
  $region47: #{gnresidule_apply.51} parent=0 // pred_check_branch
    %604 = sbr.rel (0) target = $region49
  $region48: #{gnresidule_apply.51} parent=0 // pred_region
    _
  $region49: #{gnresidule_apply.51} parent=0 // pred_fallthru
    _
  // Predicated region
  $region50: #{gnresidule_apply.51} parent=0 // pred_check
    _
  $region51: #{gnresidule_apply.51} parent=0 // pred_check_branch
    %606 = sbr.rel (0) target = $region53
  $region52: #{gnresidule_apply.51} parent=0 // pred_region
    _
  $region53: #{gnresidule_apply.51} parent=0 // pred_fallthru
    _
  // Predicated region
  $region54: #{gnresidule_apply.51} parent=0 // pred_check
    _
  $region55: #{gnresidule_apply.51} parent=0 // pred_check_branch
    %608 = sbr.rel (0) target = $region57
  $region56: #{gnresidule_apply.51} parent=0 // pred_region
    _
  $region57: #{gnresidule_apply.51} parent=0 // pred_fallthru
    _
  // Predicated region
  $region58: #{gnresidule_apply.51} parent=0 // pred_check
    _
  $region59: #{gnresidule_apply.51} parent=0 // pred_check_branch
    %610 = sbr.rel (0) target = $region61
  $region60: #{gnresidule_apply.51} parent=0 // pred_region
    _
  $region61: #{gnresidule_apply.51} parent=0 // pred_fallthru
    _

// kernel: gnresidule_apply.53
$region0: #{gnresidule_apply.53}
  #allocation0 [shape = 'u32[]', space=smem, size = 0x4, offset = 0x4, fixed_abs, tag = 'smem constant byte address 0x4 - core index']
  #allocation1 [shape = 'u32[144,128]{1,0:T(1,128)}', space=vmem, size = 0x12000, scoped, tag = 'internal scratch']
  %s0 = inlined_call_operand.vmem [shape: bf16[16,68], index: 0, kind: input, shape index: {}]
  %s1 = inlined_call_operand.vmem [shape: s32[16,1], index: 1, kind: input, shape index: {}]
  %s2 = inlined_call_operand.vmem [shape: bf16[2,32], index: 2, kind: input, shape index: {}]
  %s3 = inlined_call_operand.vmem [shape: bf16[68,32], index: 3, kind: input, shape index: {}]
  %s4 = inlined_call_operand.vmem [shape: f32[1,32], index: 4, kind: input, shape index: {}]
  %s5 = inlined_call_operand.vmem [shape: bf16[32,32], index: 5, kind: input, shape index: {}]
  %s6 = inlined_call_operand.vmem [shape: f32[1,32], index: 6, kind: input, shape index: {}]
  %s7 = inlined_call_operand.vmem [shape: bf16[32,128], index: 7, kind: input, shape index: {}]
  %s8 = inlined_call_operand.vmem [shape: f32[1,128], index: 8, kind: input, shape index: {}]
  %s9 = inlined_call_operand.vmem [shape: bf16[16,128], index: 9, kind: output, shape index: {}]
  %s10 = sld [smem:[#allocation0]]
  $region46: #{gnresidule_apply.53} parent=0
    _
  %s12 = ssub.s32 1, %s10
  %s13 = scalar_select 0, %s12, %s10
  // Predicated region
  $region2: #{gnresidule_apply.53} parent=0 // pred_check
    _
  $region3: #{gnresidule_apply.53} parent=0 // pred_check_branch
    %15 = sbr.rel (0) target = $region5
  $region4: #{gnresidule_apply.53} parent=0 // pred_region
    _
  $region5: #{gnresidule_apply.53} parent=0 // pred_fallthru
    _
  // Predicated region
  $region6: #{gnresidule_apply.53} parent=0 // pred_check
    _
  $region7: #{gnresidule_apply.53} parent=0 // pred_check_branch
    %17 = sbr.rel (0) target = $region9
  $region8: #{gnresidule_apply.53} parent=0 // pred_region
    _
  $region9: #{gnresidule_apply.53} parent=0 // pred_fallthru
    _
  // Predicated region
  $region10: #{gnresidule_apply.53} parent=0 // pred_check
    _
  $region11: #{gnresidule_apply.53} parent=0 // pred_check_branch
    %19 = sbr.rel (0) target = $region13
  $region12: #{gnresidule_apply.53} parent=0 // pred_region
    _
  $region13: #{gnresidule_apply.53} parent=0 // pred_fallthru
    _
  // Predicated region
  $region14: #{gnresidule_apply.53} parent=0 // pred_check
    _
  $region15: #{gnresidule_apply.53} parent=0 // pred_check_branch
    %21 = sbr.rel (0) target = $region17
  $region16: #{gnresidule_apply.53} parent=0 // pred_region
    _
  $region17: #{gnresidule_apply.53} parent=0 // pred_fallthru
    _
  // Predicated region
  $region18: #{gnresidule_apply.53} parent=0 // pred_check
    _
  $region19: #{gnresidule_apply.53} parent=0 // pred_check_branch
    %23 = sbr.rel (0) target = $region21
  $region20: #{gnresidule_apply.53} parent=0 // pred_region
    _
  $region21: #{gnresidule_apply.53} parent=0 // pred_fallthru
    _
  // Predicated region
  $region22: #{gnresidule_apply.53} parent=0 // pred_check
    _
  $region23: #{gnresidule_apply.53} parent=0 // pred_check_branch
    %25 = sbr.rel (0) target = $region25
  $region24: #{gnresidule_apply.53} parent=0 // pred_region
    _
  $region25: #{gnresidule_apply.53} parent=0 // pred_fallthru
    _
  // Predicated region
  $region26: #{gnresidule_apply.53} parent=0 // pred_check
    _
  $region27: #{gnresidule_apply.53} parent=0 // pred_check_branch
    %27 = sbr.rel (0) target = $region29
  $region28: #{gnresidule_apply.53} parent=0 // pred_region
    _
  $region29: #{gnresidule_apply.53} parent=0 // pred_fallthru
    _
  // Predicated region
  $region30: #{gnresidule_apply.53} parent=0 // pred_check
    _
  $region31: #{gnresidule_apply.53} parent=0 // pred_check_branch
    %29 = sbr.rel (0) target = $region33
  $region32: #{gnresidule_apply.53} parent=0 // pred_region
    _
  $region33: #{gnresidule_apply.53} parent=0 // pred_fallthru
    _
  // Predicated region
  $region34: #{gnresidule_apply.53} parent=0 // pred_check
    _
  $region35: #{gnresidule_apply.53} parent=0 // pred_check_branch
    %31 = sbr.rel (0) target = $region37
  $region36: #{gnresidule_apply.53} parent=0 // pred_region
    _
  $region37: #{gnresidule_apply.53} parent=0 // pred_fallthru
    _
  %v33 = vld [vmem:[%s0] sm:$0xf]
  %v34 = vld [vmem:[%s0 + $0x4] sm:$0xf]
  %v35 = vld [vmem:[%s3] sm:$0xf]
  %v36 = vld [vmem:[%s3 + $0x4] sm:$0xf]
  %v37 = vld [vmem:[%s3 + $0x8] sm:$0xf]
  %v38 = vld [vmem:[%s3 + $0xc] sm:$0xf]
  %v39 = vld [vmem:[%s3 + $0x10] sm:$0xf]
  %v40 = vld [vmem:[%s3 + $0x14] sm:$0xf]
  %v41 = vld [vmem:[%s3 + $0x18] sm:$0xf]
  %v42 = vld [vmem:[%s3 + $0x1c] sm:$0xf]
  %v43 = vld [vmem:[%s3 + $0x20] sm:$0x3]
  %v44 = vld [vmem:[%s1] sm:$0xff]
  %v45 = vld [vmem:[%s1 + $0x8] sm:$0xff]
  %v46 = vlaneseq
  %v47 = vand.u32 %v46, 127
  %48 = vset.pattern.permute.xlu0 0
  %49 = vperm.xlu0 %48, %v44
  %v50 = vpop.permute.xlu0 %49
  %51 = vset.pattern.permute.xlu0 0
  %52 = vperm.xlu0 %51, %v45
  %v53 = vpop.permute.xlu0 %52
  %vm54 = vcmp.eq.s32.totalorder %v47, %v50
  %vm55 = vcmp.eq.s32.totalorder %v47, %v53
  %v56 = vsel %vm54, 1, 0
  %v57 = vsel %vm55, 1, 0
  %v58 = vcvt.s32.f32 %v56
  %v59 = vcvt.s32.f32 %v57
  %v60 = vpack.c.bf16 %v59, %v58
  %v61 = vld [vmem:[%s2] sm:$0x1]
  %vm62 = vcmask 15360
  %v64 = vsel %vm62, %v60, 0
  %vm66 = vcmask 1040384
  %v68 = vsel %vm66, %v61, 0
  %70 = vmatprep.subr.bf16.mxu0 0
  %71 = vmatpush1.bf16.msra.mxu0 %v68
  %72 = vmatprep.subr.bf16.mxu0 0
  %73 = vmatpush1.bf16.msra.mxu0 0
  %74 = vmatprep.subr.bf16.mxu0 0
  %75 = vmatpush1.bf16.msra.mxu0 0
  %76 = vmatprep.subr.bf16.mxu0 0
  %77 = vmatpush1.bf16.msra.mxu0 0
  %78 = vmatprep.subr.bf16.mxu0 0
  %79 = vmatpush1.bf16.msra.mxu0 0
  %80 = vmatprep.subr.bf16.mxu0 0
  %81 = vmatpush1.bf16.msra.mxu0 0
  %82 = vmatprep.subr.bf16.mxu0 0
  %83 = vmatpush1.bf16.msra.mxu0 0
  %84 = vmatprep.subr.bf16.mxu0 0
  %85 = vmatpush1.bf16.msra.mxu0 0
  %86 = vmatprep.subr.bf16.mxu0 0
  %87 = vmatpush1.bf16.msra.mxu0 0
  %88 = vmatprep.subr.bf16.mxu0 0
  %89 = vmatpush1.bf16.msra.mxu0 0
  %90 = vmatprep.subr.bf16.mxu0 0
  %91 = vmatpush1.bf16.msra.mxu0 0
  %92 = vmatprep.subr.bf16.mxu0 0
  %93 = vmatpush1.bf16.msra.mxu0 0
  %94 = vmatprep.subr.bf16.mxu0 0
  %95 = vmatpush1.bf16.msra.mxu0 0
  %96 = vmatprep.subr.bf16.mxu0 0
  %97 = vmatpush1.bf16.msra.mxu0 0
  %98 = vmatprep.subr.bf16.mxu0 0
  %99 = vmatpush1.bf16.msra.mxu0 0
  %100 = vmatprep.subr.bf16.mxu0 0
  %101 = vmatpush1.bf16.msra.mxu0 0
  %102 = vmatprep.mubr.bf16.mxu0 0
  %103 = vmatmul.mubr.bf16.gmra.mrb[0].mxu0 %v64
  %v104 = vpop.f32.mrb[0].mxu0
  %v105 = vadd.f32 0.0, %v104
  %v106 = vpop.f32.mrb[0].mxu0
  %v107 = vpop.f32.mrb[0].mxu0
  %v108 = vadd.f32 0.0, %v107
  %v109 = vpop.f32.mrb[0].mxu0
  %110 = vdwg.mxu0
  %v113 = vunpack.c.l.b16 %v33
  %v114 = vunpack.c.l.b16 %v34
  %v115 = vpack.c.b16 %v114, %v113
  %v125 = vunpack.c.l.b16 %v35
  %v126 = vunpack.c.l.b16 %v36
  %v127 = vunpack.c.l.b16 %v37
  %v128 = vunpack.c.l.b16 %v38
  %v129 = vunpack.c.l.b16 %v39
  %v130 = vunpack.c.l.b16 %v40
  %v131 = vunpack.c.l.b16 %v41
  %v132 = vunpack.c.l.b16 %v42
  %v133 = vunpack.c.l.b16 %v43
  %v134 = vpack.c.b16 %v126, %v125
  %v135 = vpack.c.b16 %v128, %v127
  %v136 = vpack.c.b16 %v130, %v129
  %v137 = vpack.c.b16 %v132, %v131
  %v138 = vpack.c.b16 %v133, %v133
  %vm143 = vcmask 556032
  %v145 = vsel %vm143, %v115, 0
  %vm147 = vcmask 1041408
  %v149 = vsel %vm147, %v138, 0
  %151 = vmatprep.subr.bf16.mxu0 0
  %152 = vmatpush1.bf16.msra.mxu0 %v134
  %153 = vmatprep.subr.bf16.mxu0 0
  %154 = vmatpush1.bf16.msra.mxu0 %v135
  %155 = vmatprep.subr.bf16.mxu0 0
  %156 = vmatpush1.bf16.msra.mxu0 %v136
  %157 = vmatprep.subr.bf16.mxu0 0
  %158 = vmatpush1.bf16.msra.mxu0 %v137
  %159 = vmatprep.subr.bf16.mxu0 0
  %160 = vmatpush1.bf16.msra.mxu0 %v149
  %161 = vmatprep.subr.bf16.mxu0 0
  %162 = vmatpush1.bf16.msra.mxu0 0
  %163 = vmatprep.subr.bf16.mxu0 0
  %164 = vmatpush1.bf16.msra.mxu0 0
  %165 = vmatprep.subr.bf16.mxu0 0
  %166 = vmatpush1.bf16.msra.mxu0 0
  %167 = vmatprep.subr.bf16.mxu0 0
  %168 = vmatpush1.bf16.msra.mxu0 0
  %169 = vmatprep.subr.bf16.mxu0 0
  %170 = vmatpush1.bf16.msra.mxu0 0
  %171 = vmatprep.subr.bf16.mxu0 0
  %172 = vmatpush1.bf16.msra.mxu0 0
  %173 = vmatprep.subr.bf16.mxu0 0
  %174 = vmatpush1.bf16.msra.mxu0 0
  %175 = vmatprep.subr.bf16.mxu0 0
  %176 = vmatpush1.bf16.msra.mxu0 0
  %177 = vmatprep.subr.bf16.mxu0 0
  %178 = vmatpush1.bf16.msra.mxu0 0
  %179 = vmatprep.subr.bf16.mxu0 0
  %180 = vmatpush1.bf16.msra.mxu0 0
  %181 = vmatprep.subr.bf16.mxu0 0
  %182 = vmatpush1.bf16.msra.mxu0 0
  %183 = vmatprep.mubr.bf16.mxu0 0
  %184 = vmatmul.mubr.bf16.gmra.mrb[0].mxu0 %v145
  %v185 = vpop.f32.mrb[0].mxu0
  %v186 = vadd.f32 %v105, %v185
  %v187 = vpop.f32.mrb[0].mxu0
  %v188 = vpop.f32.mrb[0].mxu0
  %v189 = vadd.f32 %v108, %v188
  %v190 = vpop.f32.mrb[0].mxu0
  %191 = vdwg.mxu0
  %v192 = vld [vmem:[%s4] sm:$0x1]
  %v194 = vlaneseq
  %v195 = vshrl.u32 %v194, 7
  %v196 = vsub.s32 0, %v195
  %v197 = vrot.slane %v192, %v196
  %v199 = vadd.f32 %v186, %v197
  %v200 = vadd.f32 %v189, %v197
  %v201 = vmax.f32 %v199, 0.0
  %v202 = vmax.f32 %v200, 0.0
  %v203 = vpack.c.bf16 %v202, %v201
  %v204 = vld [vmem:[%s5] sm:$0xf]
  %v205 = vld [vmem:[%s5 + $0x4] sm:$0xf]
  %v206 = vld [vmem:[%s5 + $0x8] sm:$0xf]
  %v207 = vld [vmem:[%s5 + $0xc] sm:$0xf]
  %v208 = vld [vmem:[%s6] sm:$0x1]
  %v210 = vlaneseq
  %v211 = vshrl.u32 %v210, 7
  %v212 = vsub.s32 0, %v211
  %v213 = vrot.slane %v208, %v212
  %v219 = vunpack.c.l.b16 %v204
  %v220 = vunpack.c.l.b16 %v205
  %v221 = vunpack.c.l.b16 %v206
  %v222 = vunpack.c.l.b16 %v207
  %v223 = vpack.c.b16 %v220, %v219
  %v224 = vpack.c.b16 %v222, %v221
  %vm227 = vcmask 261120
  %v229 = vsel %vm227, %v203, 0
  %231 = vmatprep.subr.bf16.mxu0 0
  %232 = vmatpush1.bf16.msra.mxu0 %v223
  %233 = vmatprep.subr.bf16.mxu0 0
  %234 = vmatpush1.bf16.msra.mxu0 %v224
  %235 = vmatprep.subr.bf16.mxu0 0
  %236 = vmatpush1.bf16.msra.mxu0 0
  %237 = vmatprep.subr.bf16.mxu0 0
  %238 = vmatpush1.bf16.msra.mxu0 0
  %239 = vmatprep.subr.bf16.mxu0 0
  %240 = vmatpush1.bf16.msra.mxu0 0
  %241 = vmatprep.subr.bf16.mxu0 0
  %242 = vmatpush1.bf16.msra.mxu0 0
  %243 = vmatprep.subr.bf16.mxu0 0
  %244 = vmatpush1.bf16.msra.mxu0 0
  %245 = vmatprep.subr.bf16.mxu0 0
  %246 = vmatpush1.bf16.msra.mxu0 0
  %247 = vmatprep.subr.bf16.mxu0 0
  %248 = vmatpush1.bf16.msra.mxu0 0
  %249 = vmatprep.subr.bf16.mxu0 0
  %250 = vmatpush1.bf16.msra.mxu0 0
  %251 = vmatprep.subr.bf16.mxu0 0
  %252 = vmatpush1.bf16.msra.mxu0 0
  %253 = vmatprep.subr.bf16.mxu0 0
  %254 = vmatpush1.bf16.msra.mxu0 0
  %255 = vmatprep.subr.bf16.mxu0 0
  %256 = vmatpush1.bf16.msra.mxu0 0
  %257 = vmatprep.subr.bf16.mxu0 0
  %258 = vmatpush1.bf16.msra.mxu0 0
  %259 = vmatprep.subr.bf16.mxu0 0
  %260 = vmatpush1.bf16.msra.mxu0 0
  %261 = vmatprep.subr.bf16.mxu0 0
  %262 = vmatpush1.bf16.msra.mxu0 0
  %263 = vmatprep.mubr.bf16.mxu0 0
  %264 = vmatmul.mubr.bf16.gmra.mrb[0].mxu0 %v229
  %v265 = vpop.f32.mrb[0].mxu0
  %v266 = vadd.f32 %v213, %v265
  %v267 = vpop.f32.mrb[0].mxu0
  %v268 = vpop.f32.mrb[0].mxu0
  %v269 = vadd.f32 %v213, %v268
  %v270 = vpop.f32.mrb[0].mxu0
  %271 = vdwg.mxu0
  %v272 = vmax.f32 %v266, 0.0
  %v273 = vmax.f32 %v269, 0.0
  %v274 = vpack.c.bf16 %v273, %v272
  %v275 = vld [vmem:[%s7] sm:$0xf]
  %v276 = vld [vmem:[%s7 + $0x4] sm:$0xf]
  %v277 = vld [vmem:[%s7 + $0x8] sm:$0xf]
  %v278 = vld [vmem:[%s7 + $0xc] sm:$0xf]
  %v279 = vld [vmem:[%s8] sm:$0x1]
  %v281 = vlaneseq
  %v282 = vshrl.u32 %v281, 7
  %v283 = vsub.s32 0, %v282
  %v284 = vrot.slane %v279, %v283
  %v290 = vunpack.c.l.b16 %v275
  %v291 = vunpack.c.l.b16 %v276
  %v292 = vunpack.c.l.b16 %v277
  %v293 = vunpack.c.l.b16 %v278
  %v294 = vpack.c.b16 %v291, %v290
  %v295 = vpack.c.b16 %v293, %v292
  %v299 = vsel %vm227, %v274, 0
  %301 = vmatprep.subr.bf16.mxu0 0
  %302 = vmatpush1.bf16.msra.mxu0 %v294
  %303 = vmatprep.subr.bf16.mxu0 0
  %304 = vmatpush1.bf16.msra.mxu0 %v295
  %305 = vmatprep.subr.bf16.mxu0 0
  %306 = vmatpush1.bf16.msra.mxu0 0
  %307 = vmatprep.subr.bf16.mxu0 0
  %308 = vmatpush1.bf16.msra.mxu0 0
  %309 = vmatprep.subr.bf16.mxu0 0
  %310 = vmatpush1.bf16.msra.mxu0 0
  %311 = vmatprep.subr.bf16.mxu0 0
  %312 = vmatpush1.bf16.msra.mxu0 0
  %313 = vmatprep.subr.bf16.mxu0 0
  %314 = vmatpush1.bf16.msra.mxu0 0
  %315 = vmatprep.subr.bf16.mxu0 0
  %316 = vmatpush1.bf16.msra.mxu0 0
  %317 = vmatprep.subr.bf16.mxu0 0
  %318 = vmatpush1.bf16.msra.mxu0 0
  %319 = vmatprep.subr.bf16.mxu0 0
  %320 = vmatpush1.bf16.msra.mxu0 0
  %321 = vmatprep.subr.bf16.mxu0 0
  %322 = vmatpush1.bf16.msra.mxu0 0
  %323 = vmatprep.subr.bf16.mxu0 0
  %324 = vmatpush1.bf16.msra.mxu0 0
  %325 = vmatprep.subr.bf16.mxu0 0
  %326 = vmatpush1.bf16.msra.mxu0 0
  %327 = vmatprep.subr.bf16.mxu0 0
  %328 = vmatpush1.bf16.msra.mxu0 0
  %329 = vmatprep.subr.bf16.mxu0 0
  %330 = vmatpush1.bf16.msra.mxu0 0
  %331 = vmatprep.subr.bf16.mxu0 0
  %332 = vmatpush1.bf16.msra.mxu0 0
  %333 = vmatprep.mubr.bf16.mxu0 0
  %334 = vmatmul.mubr.bf16.gmra.mrb[0].mxu0 %v299
  %v335 = vpop.f32.mrb[0].mxu0
  %v336 = vadd.f32 %v284, %v335
  %v337 = vpop.f32.mrb[0].mxu0
  %v338 = vpop.f32.mrb[0].mxu0
  %v339 = vadd.f32 %v284, %v338
  %v340 = vpop.f32.mrb[0].mxu0
  %341 = vdwg.mxu0
  %v342 = vpack.c.bf16 %v339, %v336
  %v344 = vunpack.c.l.b16 %v342
  %v345 = vunpack.c.h.b16 %v342
  %v346 = vpack.c.b16 %v344, %v344
  %v347 = vpack.c.b16 %v345, %v345
  %350 = vst [vmem:[%s9] sm:$0xf] %v346
  %351 = vst [vmem:[%s9 + $0x4] sm:$0xf] %v347
  // Predicated region
  $region38: #{gnresidule_apply.53} parent=0 // pred_check
    _
  $region39: #{gnresidule_apply.53} parent=0 // pred_check_branch
    %353 = sbr.rel (0) target = $region41
  $region40: #{gnresidule_apply.53} parent=0 // pred_region
    _
  $region41: #{gnresidule_apply.53} parent=0 // pred_fallthru
    _
  // Predicated region
  $region42: #{gnresidule_apply.53} parent=0 // pred_check
    _
  $region43: #{gnresidule_apply.53} parent=0 // pred_check_branch
    %355 = sbr.rel (0) target = $region45
  $region44: #{gnresidule_apply.53} parent=0 // pred_region
    _
  $region45: #{gnresidule_apply.53} parent=0 // pred_fallthru
    _

// kernel: gnresidule_apply.56
$region0: #{gnresidule_apply.56}
  #allocation0 [shape = 'u32[]', space=smem, size = 0x4, offset = 0x4, fixed_abs, tag = 'smem constant byte address 0x4 - core index']
  #allocation1 [shape = 'u32[144,128]{1,0:T(1,128)}', space=vmem, size = 0x12000, scoped, tag = 'internal scratch']
  %s0 = inlined_call_operand.vmem [shape: bf16[16,96], index: 0, kind: input, shape index: {}]
  %s1 = inlined_call_operand.vmem [shape: bf16[96,32], index: 1, kind: input, shape index: {}]
  %s2 = inlined_call_operand.vmem [shape: f32[1,32], index: 2, kind: input, shape index: {}]
  %s3 = inlined_call_operand.vmem [shape: bf16[32,32], index: 3, kind: input, shape index: {}]
  %s4 = inlined_call_operand.vmem [shape: f32[1,32], index: 4, kind: input, shape index: {}]
  %s5 = inlined_call_operand.vmem [shape: bf16[32,128], index: 5, kind: input, shape index: {}]
  %s6 = inlined_call_operand.vmem [shape: f32[1,128], index: 6, kind: input, shape index: {}]
  %s7 = inlined_call_operand.vmem [shape: bf16[16,128], index: 7, kind: output, shape index: {}]
  %s8 = sld [smem:[#allocation0]]
  $region38: #{gnresidule_apply.56} parent=0
    _
  %s10 = ssub.s32 1, %s8
  %s11 = scalar_select 0, %s10, %s8
  // Predicated region
  $region2: #{gnresidule_apply.56} parent=0 // pred_check
    _
  $region3: #{gnresidule_apply.56} parent=0 // pred_check_branch
    %13 = sbr.rel (0) target = $region5
  $region4: #{gnresidule_apply.56} parent=0 // pred_region
    _
  $region5: #{gnresidule_apply.56} parent=0 // pred_fallthru
    _
  // Predicated region
  $region6: #{gnresidule_apply.56} parent=0 // pred_check
    _
  $region7: #{gnresidule_apply.56} parent=0 // pred_check_branch
    %15 = sbr.rel (0) target = $region9
  $region8: #{gnresidule_apply.56} parent=0 // pred_region
    _
  $region9: #{gnresidule_apply.56} parent=0 // pred_fallthru
    _
  // Predicated region
  $region10: #{gnresidule_apply.56} parent=0 // pred_check
    _
  $region11: #{gnresidule_apply.56} parent=0 // pred_check_branch
    %17 = sbr.rel (0) target = $region13
  $region12: #{gnresidule_apply.56} parent=0 // pred_region
    _
  $region13: #{gnresidule_apply.56} parent=0 // pred_fallthru
    _
  // Predicated region
  $region14: #{gnresidule_apply.56} parent=0 // pred_check
    _
  $region15: #{gnresidule_apply.56} parent=0 // pred_check_branch
    %19 = sbr.rel (0) target = $region17
  $region16: #{gnresidule_apply.56} parent=0 // pred_region
    _
  $region17: #{gnresidule_apply.56} parent=0 // pred_fallthru
    _
  // Predicated region
  $region18: #{gnresidule_apply.56} parent=0 // pred_check
    _
  $region19: #{gnresidule_apply.56} parent=0 // pred_check_branch
    %21 = sbr.rel (0) target = $region21
  $region20: #{gnresidule_apply.56} parent=0 // pred_region
    _
  $region21: #{gnresidule_apply.56} parent=0 // pred_fallthru
    _
  // Predicated region
  $region22: #{gnresidule_apply.56} parent=0 // pred_check
    _
  $region23: #{gnresidule_apply.56} parent=0 // pred_check_branch
    %23 = sbr.rel (0) target = $region25
  $region24: #{gnresidule_apply.56} parent=0 // pred_region
    _
  $region25: #{gnresidule_apply.56} parent=0 // pred_fallthru
    _
  // Predicated region
  $region26: #{gnresidule_apply.56} parent=0 // pred_check
    _
  $region27: #{gnresidule_apply.56} parent=0 // pred_check_branch
    %25 = sbr.rel (0) target = $region29
  $region28: #{gnresidule_apply.56} parent=0 // pred_region
    _
  $region29: #{gnresidule_apply.56} parent=0 // pred_fallthru
    _
  %v27 = vld [vmem:[%s0] sm:$0xf]
  %v28 = vld [vmem:[%s0 + $0x4] sm:$0xf]
  %v29 = vld [vmem:[%s1] sm:$0xf]
  %v30 = vld [vmem:[%s1 + $0x4] sm:$0xf]
  %v31 = vld [vmem:[%s1 + $0x8] sm:$0xf]
  %v32 = vld [vmem:[%s1 + $0xc] sm:$0xf]
  %v33 = vld [vmem:[%s1 + $0x10] sm:$0xf]
  %v34 = vld [vmem:[%s1 + $0x14] sm:$0xf]
  %v35 = vld [vmem:[%s1 + $0x18] sm:$0xf]
  %v36 = vld [vmem:[%s1 + $0x1c] sm:$0xf]
  %v37 = vld [vmem:[%s1 + $0x20] sm:$0xf]
  %v38 = vld [vmem:[%s1 + $0x24] sm:$0xf]
  %v39 = vld [vmem:[%s1 + $0x28] sm:$0xf]
  %v40 = vld [vmem:[%s1 + $0x2c] sm:$0xf]
  %v41 = vld [vmem:[%s2] sm:$0x1]
  %v43 = vlaneseq
  %v44 = vshrl.u32 %v43, 7
  %v45 = vsub.s32 0, %v44
  %v46 = vrot.slane %v41, %v45
  %v50 = vunpack.c.l.b16 %v27
  %v51 = vunpack.c.l.b16 %v28
  %v52 = vpack.c.b16 %v51, %v50
  %v65 = vunpack.c.l.b16 %v29
  %v66 = vunpack.c.l.b16 %v30
  %v67 = vunpack.c.l.b16 %v31
  %v68 = vunpack.c.l.b16 %v32
  %v69 = vunpack.c.l.b16 %v33
  %v70 = vunpack.c.l.b16 %v34
  %v71 = vunpack.c.l.b16 %v35
  %v72 = vunpack.c.l.b16 %v36
  %v73 = vunpack.c.l.b16 %v37
  %v74 = vunpack.c.l.b16 %v38
  %v75 = vunpack.c.l.b16 %v39
  %v76 = vunpack.c.l.b16 %v40
  %v77 = vpack.c.b16 %v66, %v65
  %v78 = vpack.c.b16 %v68, %v67
  %v79 = vpack.c.b16 %v70, %v69
  %v80 = vpack.c.b16 %v72, %v71
  %v81 = vpack.c.b16 %v74, %v73
  %v82 = vpack.c.b16 %v76, %v75
  %vm89 = vcmask 785408
  %v91 = vsel %vm89, %v52, 0
  %93 = vmatprep.subr.bf16.mxu0 0
  %94 = vmatpush1.bf16.msra.mxu0 %v77
  %95 = vmatprep.subr.bf16.mxu0 0
  %96 = vmatpush1.bf16.msra.mxu0 %v78
  %97 = vmatprep.subr.bf16.mxu0 0
  %98 = vmatpush1.bf16.msra.mxu0 %v79
  %99 = vmatprep.subr.bf16.mxu0 0
  %100 = vmatpush1.bf16.msra.mxu0 %v80
  %101 = vmatprep.subr.bf16.mxu0 0
  %102 = vmatpush1.bf16.msra.mxu0 %v81
  %103 = vmatprep.subr.bf16.mxu0 0
  %104 = vmatpush1.bf16.msra.mxu0 %v82
  %105 = vmatprep.subr.bf16.mxu0 0
  %106 = vmatpush1.bf16.msra.mxu0 0
  %107 = vmatprep.subr.bf16.mxu0 0
  %108 = vmatpush1.bf16.msra.mxu0 0
  %109 = vmatprep.subr.bf16.mxu0 0
  %110 = vmatpush1.bf16.msra.mxu0 0
  %111 = vmatprep.subr.bf16.mxu0 0
  %112 = vmatpush1.bf16.msra.mxu0 0
  %113 = vmatprep.subr.bf16.mxu0 0
  %114 = vmatpush1.bf16.msra.mxu0 0
  %115 = vmatprep.subr.bf16.mxu0 0
  %116 = vmatpush1.bf16.msra.mxu0 0
  %117 = vmatprep.subr.bf16.mxu0 0
  %118 = vmatpush1.bf16.msra.mxu0 0
  %119 = vmatprep.subr.bf16.mxu0 0
  %120 = vmatpush1.bf16.msra.mxu0 0
  %121 = vmatprep.subr.bf16.mxu0 0
  %122 = vmatpush1.bf16.msra.mxu0 0
  %123 = vmatprep.subr.bf16.mxu0 0
  %124 = vmatpush1.bf16.msra.mxu0 0
  %125 = vmatprep.mubr.bf16.mxu0 0
  %126 = vmatmul.mubr.bf16.gmra.mrb[0].mxu0 %v91
  %v127 = vpop.f32.mrb[0].mxu0
  %v128 = vadd.f32 %v46, %v127
  %v129 = vpop.f32.mrb[0].mxu0
  %v130 = vpop.f32.mrb[0].mxu0
  %v131 = vadd.f32 %v46, %v130
  %v132 = vpop.f32.mrb[0].mxu0
  %133 = vdwg.mxu0
  %v134 = vmax.f32 %v128, 0.0
  %v135 = vmax.f32 %v131, 0.0
  %v136 = vpack.c.bf16 %v135, %v134
  %v137 = vld [vmem:[%s3] sm:$0xf]
  %v138 = vld [vmem:[%s3 + $0x4] sm:$0xf]
  %v139 = vld [vmem:[%s3 + $0x8] sm:$0xf]
  %v140 = vld [vmem:[%s3 + $0xc] sm:$0xf]
  %v141 = vld [vmem:[%s4] sm:$0x1]
  %v143 = vlaneseq
  %v144 = vshrl.u32 %v143, 7
  %v145 = vsub.s32 0, %v144
  %v146 = vrot.slane %v141, %v145
  %v152 = vunpack.c.l.b16 %v137
  %v153 = vunpack.c.l.b16 %v138
  %v154 = vunpack.c.l.b16 %v139
  %v155 = vunpack.c.l.b16 %v140
  %v156 = vpack.c.b16 %v153, %v152
  %v157 = vpack.c.b16 %v155, %v154
  %vm160 = vcmask 261120
  %v162 = vsel %vm160, %v136, 0
  %164 = vmatprep.subr.bf16.mxu0 0
  %165 = vmatpush1.bf16.msra.mxu0 %v156
  %166 = vmatprep.subr.bf16.mxu0 0
  %167 = vmatpush1.bf16.msra.mxu0 %v157
  %168 = vmatprep.subr.bf16.mxu0 0
  %169 = vmatpush1.bf16.msra.mxu0 0
  %170 = vmatprep.subr.bf16.mxu0 0
  %171 = vmatpush1.bf16.msra.mxu0 0
  %172 = vmatprep.subr.bf16.mxu0 0
  %173 = vmatpush1.bf16.msra.mxu0 0
  %174 = vmatprep.subr.bf16.mxu0 0
  %175 = vmatpush1.bf16.msra.mxu0 0
  %176 = vmatprep.subr.bf16.mxu0 0
  %177 = vmatpush1.bf16.msra.mxu0 0
  %178 = vmatprep.subr.bf16.mxu0 0
  %179 = vmatpush1.bf16.msra.mxu0 0
  %180 = vmatprep.subr.bf16.mxu0 0
  %181 = vmatpush1.bf16.msra.mxu0 0
  %182 = vmatprep.subr.bf16.mxu0 0
  %183 = vmatpush1.bf16.msra.mxu0 0
  %184 = vmatprep.subr.bf16.mxu0 0
  %185 = vmatpush1.bf16.msra.mxu0 0
  %186 = vmatprep.subr.bf16.mxu0 0
  %187 = vmatpush1.bf16.msra.mxu0 0
  %188 = vmatprep.subr.bf16.mxu0 0
  %189 = vmatpush1.bf16.msra.mxu0 0
  %190 = vmatprep.subr.bf16.mxu0 0
  %191 = vmatpush1.bf16.msra.mxu0 0
  %192 = vmatprep.subr.bf16.mxu0 0
  %193 = vmatpush1.bf16.msra.mxu0 0
  %194 = vmatprep.subr.bf16.mxu0 0
  %195 = vmatpush1.bf16.msra.mxu0 0
  %196 = vmatprep.mubr.bf16.mxu0 0
  %197 = vmatmul.mubr.bf16.gmra.mrb[0].mxu0 %v162
  %v198 = vpop.f32.mrb[0].mxu0
  %v199 = vadd.f32 %v146, %v198
  %v200 = vpop.f32.mrb[0].mxu0
  %v201 = vpop.f32.mrb[0].mxu0
  %v202 = vadd.f32 %v146, %v201
  %v203 = vpop.f32.mrb[0].mxu0
  %204 = vdwg.mxu0
  %v205 = vmax.f32 %v199, 0.0
  %v206 = vmax.f32 %v202, 0.0
  %v207 = vpack.c.bf16 %v206, %v205
  %v208 = vld [vmem:[%s5] sm:$0xf]
  %v209 = vld [vmem:[%s5 + $0x4] sm:$0xf]
  %v210 = vld [vmem:[%s5 + $0x8] sm:$0xf]
  %v211 = vld [vmem:[%s5 + $0xc] sm:$0xf]
  %v212 = vld [vmem:[%s6] sm:$0x1]
  %v214 = vlaneseq
  %v215 = vshrl.u32 %v214, 7
  %v216 = vsub.s32 0, %v215
  %v217 = vrot.slane %v212, %v216
  %v223 = vunpack.c.l.b16 %v208
  %v224 = vunpack.c.l.b16 %v209
  %v225 = vunpack.c.l.b16 %v210
  %v226 = vunpack.c.l.b16 %v211
  %v227 = vpack.c.b16 %v224, %v223
  %v228 = vpack.c.b16 %v226, %v225
  %v232 = vsel %vm160, %v207, 0
  %234 = vmatprep.subr.bf16.mxu0 0
  %235 = vmatpush1.bf16.msra.mxu0 %v227
  %236 = vmatprep.subr.bf16.mxu0 0
  %237 = vmatpush1.bf16.msra.mxu0 %v228
  %238 = vmatprep.subr.bf16.mxu0 0
  %239 = vmatpush1.bf16.msra.mxu0 0
  %240 = vmatprep.subr.bf16.mxu0 0
  %241 = vmatpush1.bf16.msra.mxu0 0
  %242 = vmatprep.subr.bf16.mxu0 0
  %243 = vmatpush1.bf16.msra.mxu0 0
  %244 = vmatprep.subr.bf16.mxu0 0
  %245 = vmatpush1.bf16.msra.mxu0 0
  %246 = vmatprep.subr.bf16.mxu0 0
  %247 = vmatpush1.bf16.msra.mxu0 0
  %248 = vmatprep.subr.bf16.mxu0 0
  %249 = vmatpush1.bf16.msra.mxu0 0
  %250 = vmatprep.subr.bf16.mxu0 0
  %251 = vmatpush1.bf16.msra.mxu0 0
  %252 = vmatprep.subr.bf16.mxu0 0
  %253 = vmatpush1.bf16.msra.mxu0 0
  %254 = vmatprep.subr.bf16.mxu0 0
  %255 = vmatpush1.bf16.msra.mxu0 0
  %256 = vmatprep.subr.bf16.mxu0 0
  %257 = vmatpush1.bf16.msra.mxu0 0
  %258 = vmatprep.subr.bf16.mxu0 0
  %259 = vmatpush1.bf16.msra.mxu0 0
  %260 = vmatprep.subr.bf16.mxu0 0
  %261 = vmatpush1.bf16.msra.mxu0 0
  %262 = vmatprep.subr.bf16.mxu0 0
  %263 = vmatpush1.bf16.msra.mxu0 0
  %264 = vmatprep.subr.bf16.mxu0 0
  %265 = vmatpush1.bf16.msra.mxu0 0
  %266 = vmatprep.mubr.bf16.mxu0 0
  %267 = vmatmul.mubr.bf16.gmra.mrb[0].mxu0 %v232
  %v268 = vpop.f32.mrb[0].mxu0
  %v269 = vadd.f32 %v217, %v268
  %v270 = vpop.f32.mrb[0].mxu0
  %v271 = vpop.f32.mrb[0].mxu0
  %v272 = vadd.f32 %v217, %v271
  %v273 = vpop.f32.mrb[0].mxu0
  %274 = vdwg.mxu0
  %v275 = vpack.c.bf16 %v272, %v269
  %v277 = vunpack.c.l.b16 %v275
  %v278 = vunpack.c.h.b16 %v275
  %v279 = vpack.c.b16 %v277, %v277
  %v280 = vpack.c.b16 %v278, %v278
  %283 = vst [vmem:[%s7] sm:$0xf] %v279
  %284 = vst [vmem:[%s7 + $0x4] sm:$0xf] %v280
  // Predicated region
  $region30: #{gnresidule_apply.56} parent=0 // pred_check
    _
  $region31: #{gnresidule_apply.56} parent=0 // pred_check_branch
    %286 = sbr.rel (0) target = $region33
  $region32: #{gnresidule_apply.56} parent=0 // pred_region
    _
  $region33: #{gnresidule_apply.56} parent=0 // pred_fallthru
    _
  // Predicated region
  $region34: #{gnresidule_apply.56} parent=0 // pred_check
    _
  $region35: #{gnresidule_apply.56} parent=0 // pred_check_branch
    %288 = sbr.rel (0) target = $region37
  $region36: #{gnresidule_apply.56} parent=0 // pred_region
    _
  $region37: #{gnresidule_apply.56} parent=0 // pred_fallthru
    _

</llo_original>
